<compile_context>
chip_gen: v6e
topology: v6e:2x2x1
jax: 0.10.0
libtpu: 0.0.40
codegen_flags: <defaults>
</compile_context>

<pallas_src>
import functools

import jax
import jax.numpy as jnp
from jax.experimental import pallas as pl
from jax.experimental.pallas import tpu as pltpu


def _round_up(a, b):
    return (a + b - 1) // b * b


# ----------------------------- Pallas kernels ------------------------------

def _accum_taps(x_ref, w_ref, taps, m0, tm):
    """sum_t  x[phase_t, m0+off_t : m0+off_t+tm, :] @ w[t]   (f32 accumulation)."""
    acc = None
    for t, (phase, off) in enumerate(taps):
        patch = x_ref[0, phase, pl.ds(m0 + off, tm), :]
        part = jnp.dot(patch, w_ref[t], preferred_element_type=jnp.float32)
        acc = part if acc is None else acc + part
    return acc


def _conv_bn_relu_kernel(x_ref, w_ref, b_ref, o_ref, *, taps, tm, m0_static):
    m0 = m0_static if m0_static is not None else pl.program_id(1) * tm
    acc = _accum_taps(x_ref, w_ref, taps, m0, tm)
    o_ref[0] = jnp.maximum(acc + b_ref[...], 0.0).astype(o_ref.dtype)


def _conv_bn_relu_sc_kernel(x_ref, w_ref, b_ref, ws_ref, bs_ref, o_ref, r_ref,
                            *, taps, sc_tap, tm, m0_static):
    """conv1 + bn1 + relu, plus the fused 1x1 projection shortcut + bn."""
    m0 = m0_static if m0_static is not None else pl.program_id(1) * tm
    acc = _accum_taps(x_ref, w_ref, taps, m0, tm)
    o_ref[0] = jnp.maximum(acc + b_ref[...], 0.0).astype(o_ref.dtype)
    phase, off = sc_tap
    patch = x_ref[0, phase, pl.ds(m0 + off, tm), :]
    res = jnp.dot(patch, ws_ref[...], preferred_element_type=jnp.float32) + bs_ref[...]
    r_ref[0] = res.astype(r_ref.dtype)


def _conv_bn_add_relu_kernel(x_ref, w_ref, b_ref, r_ref, o_ref,
                             *, taps, tm, m0_static):
    """conv2 + bn2 + residual add + relu."""
    m0 = m0_static if m0_static is not None else pl.program_id(1) * tm
    acc = _accum_taps(x_ref, w_ref, taps, m0, tm)
    y = acc + b_ref[...] + r_ref[0]
    o_ref[0] = jnp.maximum(y, 0.0).astype(o_ref.dtype)


# ----------------------------- pallas_call wrapper ---------------------------

def _run_conv(xflat, w9, bias, *, taps, tm, n_mt, shortcut=None, residual=None):
    """xflat: (N, P, Lp, Cin) bf16, w9: (T, Cin, Cp) bf16, bias: (1, Cp) f32."""
    N, P, Lp, Cin = xflat.shape
    T, _, Cp = w9.shape
    Mg = n_mt * tm
    m0_static = 0 if n_mt == 1 else None   # fully static slices on the 1-tile path

    x_spec = pl.BlockSpec((1, P, Lp, Cin), lambda n, m: (n, 0, 0, 0))
    w_spec = pl.BlockSpec((T, Cin, Cp), lambda n, m: (0, 0, 0))
    b_spec = pl.BlockSpec((1, Cp), lambda n, m: (0, 0))
    o_spec = pl.BlockSpec((1, tm, Cp), lambda n, m: (n, m, 0))

    in_specs = [x_spec, w_spec, b_spec]
    args = [xflat, w9, bias]
    flops = 2 * N * Mg * Cin * Cp * T
    bytes_acc = int(xflat.size) * 2 + int(w9.size) * 2 + int(bias.size) * 4 \
        + N * Mg * Cp * 4

    if shortcut is not None:
        ws, bs, sc_tap = shortcut
        in_specs += [pl.BlockSpec((Cin, Cp), lambda n, m: (0, 0)),
                     pl.BlockSpec((1, Cp), lambda n, m: (0, 0))]
        args += [ws, bs]
        kernel = functools.partial(_conv_bn_relu_sc_kernel, taps=taps,
                                   sc_tap=sc_tap, tm=tm, m0_static=m0_static)
        out_shape = (jax.ShapeDtypeStruct((N, Mg, Cp), jnp.float32),
                     jax.ShapeDtypeStruct((N, Mg, Cp), jnp.float32))
        out_specs = (o_spec, o_spec)
        flops += 2 * N * Mg * Cin * Cp
        bytes_acc += int(ws.size) * 2 + int(bs.size) * 4 + N * Mg * Cp * 4
    elif residual is not None:
        in_specs.append(pl.BlockSpec((1, tm, Cp), lambda n, m: (n, m, 0)))
        args.append(residual)
        kernel = functools.partial(_conv_bn_add_relu_kernel, taps=taps,
                                   tm=tm, m0_static=m0_static)
        out_shape = jax.ShapeDtypeStruct((N, Mg, Cp), jnp.float32)
        out_specs = o_spec
        bytes_acc += int(residual.size) * 4
    else:
        kernel = functools.partial(_conv_bn_relu_kernel, taps=taps,
                                   tm=tm, m0_static=m0_static)
        out_shape = jax.ShapeDtypeStruct((N, Mg, Cp), jnp.float32)
        out_specs = o_spec

    return pl.pallas_call(
        kernel,
        out_shape=out_shape,
        grid_spec=pltpu.PrefetchScalarGridSpec(
            num_scalar_prefetch=0,
            grid=(N, n_mt),
            in_specs=in_specs,
            out_specs=out_specs,
        ),
        compiler_params=pltpu.CompilerParams(
            dimension_semantics=("parallel", "parallel")),
        cost_estimate=pl.CostEstimate(flops=int(flops), transcendentals=0,
                                      bytes_accessed=int(bytes_acc)),
    )(*args)


# ------------------------------- glue (JAX) --------------------------------

def _prep_conv3x3(x_nhwc, stride, tm_target=512):
    """Pad 1px, phase-decompose by `stride`, row-flatten so every 3x3 conv tap
    becomes a contiguous row slice: tap (dy,dx) of output flat row m=i*Wpp+j is
    phase[(dy%s)*s+(dx%s)][m + (dy//s)*Wpp + (dx//s)].  Columns j>=Wo are
    garbage and are stripped by the caller."""
    x_nhwc = x_nhwc.astype(jnp.bfloat16)
    N, H, W, C = x_nhwc.shape
    s = stride
    Ho = (H + 2 - 3) // s + 1
    Wo = (W + 2 - 3) // s + 1
    Hp = _round_up(H + 2, s)
    Wp = _round_up(W + 2, s)
    Hpp, Wpp = Hp // s, Wp // s

    taps = []
    for dy in range(3):
        for dx in range(3):
            taps.append(((dy % s) * s + (dx % s), (dy // s) * Wpp + (dx // s)))
    # tap of a 1x1/stride-s conv on the same (unpadded) input = padded coord (1,1)
    sc_tap = ((1 % s) * s + (1 % s), (1 // s) * Wpp + (1 // s))
    max_off = max(off for _, off in taps + [sc_tap])

    m_span = Ho * Wpp                       # output flat rows to compute
    tm = min(tm_target, _round_up(m_span, 8))
    n_mt = -(-m_span // tm)
    Mg = n_mt * tm
    Lp = _round_up(max(Mg + max_off, Hpp * Wpp), 8)

    xp = jnp.pad(x_nhwc, ((0, 0), (1, Hp - H - 1), (1, Wp - W - 1), (0, 0)))
    xph = xp.reshape(N, Hpp, s, Wpp, s, C).transpose(0, 2, 4, 1, 3, 5)
    xph = xph.reshape(N, s * s, Hpp * Wpp, C)
    xph = jnp.pad(xph, ((0, 0), (0, 0), (0, Lp - Hpp * Wpp), (0, 0)))
    geom = dict(taps=taps, sc_tap=sc_tap, Ho=Ho, Wo=Wo, Wpp=Wpp,
                tm=tm, n_mt=n_mt, Mg=Mg)
    return xph, geom


def _fold_bn(gamma, beta, mean, var, eps=1e-5):
    scale = gamma / jnp.sqrt(var + eps)
    bias = beta - mean * scale
    return scale, bias


def _prep_weight(w_hwio, scale, cp):
    """Fold BN scale into HWIO conv weights, pad Cout to cp, flatten taps, bf16."""
    kh, kw, cin, cout = w_hwio.shape
    w = (w_hwio * scale).reshape(kh * kw, cin, cout)
    w = jnp.pad(w, ((0, 0), (0, 0), (0, cp - cout)))
    return w.astype(jnp.bfloat16)


def _prep_bias(bias, cp):
    return jnp.pad(bias, (0, cp - bias.shape[0])).reshape(1, cp).astype(jnp.float32)


def basic_block_forward(x_nchw, params, stride):
    """Pallas implementation of BasicBlock.forward (inference-mode BN)."""
    x = jnp.transpose(x_nchw, (0, 2, 3, 1)).astype(jnp.float32)   # NHWC
    N, H, W, Cin = x.shape
    planes = params["conv1_w"].shape[-1]
    Cp = _round_up(planes, 128)                   # lane-dense output channels
    has_proj = (stride != 1) or (Cin != planes)

    s1, b1 = _fold_bn(params["bn1_gamma"], params["bn1_beta"],
                      params["bn1_mean"], params["bn1_var"])
    s2, b2 = _fold_bn(params["bn2_gamma"], params["bn2_beta"],
                      params["bn2_mean"], params["bn2_var"])
    w1 = _prep_weight(params["conv1_w"], s1, Cp)
    w2 = _prep_weight(params["conv2_w"], s2, Cp)
    b1 = _prep_bias(b1, Cp)
    b2 = _prep_bias(b2, Cp)

    # ---- conv1 + bn1 + relu (projection shortcut fused into the same kernel) ----
    x1, g1 = _prep_conv3x3(x, stride)
    if has_proj:
        ss, bs = _fold_bn(params["scbn_gamma"], params["scbn_beta"],
                          params["scbn_mean"], params["scbn_var"])
        ws = _prep_weight(params["sc_w"], ss, Cp)[0]          # (Cin, Cp)
        bs = _prep_bias(bs, Cp)
        o1, res = _run_conv(x1, w1, b1, taps=g1["taps"], tm=g1["tm"],
                            n_mt=g1["n_mt"], shortcut=(ws, bs, g1["sc_tap"]))
    else:
        o1 = _run_conv(x1, w1, b1, taps=g1["taps"], tm=g1["tm"], n_mt=g1["n_mt"])
        res = None

    Ho, Wo, Wpp1 = g1["Ho"], g1["Wo"], g1["Wpp"]
    out1 = o1[:, :Ho * Wpp1].reshape(N, Ho, Wpp1, Cp)[:, :, :Wo, :planes]

    # ---- conv2 + bn2 + residual add + relu ----
    x2, g2 = _prep_conv3x3(out1, 1)
    Wpp2, Mg2 = g2["Wpp"], g2["Mg"]
    if has_proj:
        res_nhwc = res[:, :Ho * Wpp1].reshape(N, Ho, Wpp1, Cp)[:, :, :Wo, :]
    else:
        res_nhwc = jnp.pad(x, ((0, 0), (0, 0), (0, 0), (0, Cp - Cin)))
    # re-layout the residual into conv2's width-padded flat geometry
    res2 = jnp.pad(res_nhwc, ((0, 0), (0, 0), (0, Wpp2 - Wo), (0, 0)))
    res2 = res2.reshape(N, Ho * Wpp2, Cp)
    res2 = jnp.pad(res2, ((0, 0), (0, Mg2 - Ho * Wpp2), (0, 0))).astype(jnp.float32)

    o2 = _run_conv(x2, w2, b2, taps=g2["taps"], tm=g2["tm"], n_mt=g2["n_mt"],
                   residual=res2)
    out = o2[:, :Ho * Wpp2].reshape(N, Ho, Wpp2, Cp)[:, :, :Wo, :planes]
    return jnp.transpose(out, (0, 3, 1, 2))       # back to NCHW


# ----------------------------- reference (XLA) ------------------------------

def _ref_forward(x_nchw, params, stride):
    """XLA reference mirroring the kernel numerics (folded BN, bf16 operands)."""
    x = jnp.transpose(x_nchw, (0, 2, 3, 1)).astype(jnp.float32)
    N, H, W, Cin = x.shape
    planes = params["conv1_w"].shape[-1]
    has_proj = (stride != 1) or (Cin != planes)

    def conv(inp, w, s, pad):
        return jax.lax.conv_general_dilated(
            inp, w, (s, s), ((pad, pad), (pad, pad)),
            dimension_numbers=("NHWC", "HWIO", "NHWC"),
            precision=jax.lax.Precision.HIGHEST)

    def bf16(a):
        return a.astype(jnp.bfloat16).astype(jnp.float32)

    s1, b1 = _fold_bn(params["bn1_gamma"], params["bn1_beta"],
                      params["bn1_mean"], params["bn1_var"])
    s2, b2 = _fold_bn(params["bn2_gamma"], params["bn2_beta"],
                      params["bn2_mean"], params["bn2_var"])
    xb = bf16(x)
    out1 = jax.nn.relu(conv(xb, bf16(params["conv1_w"] * s1), stride, 1) + b1)
    out2 = conv(bf16(out1), bf16(params["conv2_w"] * s2), 1, 1) + b2
    if has_proj:
        ss, bs = _fold_bn(params["scbn_gamma"], params["scbn_beta"],
                          params["scbn_mean"], params["scbn_var"])
        shortcut = conv(xb, bf16(params["sc_w"] * ss), stride, 0) + bs
    else:
        shortcut = x
    return jnp.transpose(jax.nn.relu(out2 + shortcut), (0, 3, 1, 2))


# --------------------------------- main -------------------------------------

def _make_params(key, in_planes, planes):
    ks = jax.random.split(key, 16)
    return {
        "conv1_w": 0.1 * jax.random.normal(ks[0], (3, 3, in_planes, planes), jnp.float32),
        "conv2_w": 0.1 * jax.random.normal(ks[1], (3, 3, planes, planes), jnp.float32),
        "sc_w": 0.1 * jax.random.normal(ks[2], (1, 1, in_planes, planes), jnp.float32),
        "bn1_gamma": 1.0 + 0.1 * jax.random.normal(ks[3], (planes,), jnp.float32),
        "bn1_beta": 0.1 * jax.random.normal(ks[4], (planes,), jnp.float32),
        "bn1_mean": 0.1 * jax.random.normal(ks[5], (planes,), jnp.float32),
        "bn1_var": 0.5 + jax.random.uniform(ks[6], (planes,), jnp.float32),
        "bn2_gamma": 1.0 + 0.1 * jax.random.normal(ks[7], (planes,), jnp.float32),
        "bn2_beta": 0.1 * jax.random.normal(ks[8], (planes,), jnp.float32),
        "bn2_mean": 0.1 * jax.random.normal(ks[9], (planes,), jnp.float32),
        "bn2_var": 0.5 + jax.random.uniform(ks[10], (planes,), jnp.float32),
        "scbn_gamma": 1.0 + 0.1 * jax.random.normal(ks[11], (planes,), jnp.float32),
        "scbn_beta": 0.1 * jax.random.normal(ks[12], (planes,), jnp.float32),
        "scbn_mean": 0.1 * jax.random.normal(ks[13], (planes,), jnp.float32),
        "scbn_var": 0.5 + jax.random.uniform(ks[14], (planes,), jnp.float32),
    }


if __name__ == "__main__":
    key = jax.random.PRNGKey(0)
    k_x, k_p = jax.random.split(key)

    N, in_planes, planes, H, W, stride = 2, 4, 8, 16, 16, 2   # projection-shortcut path
    x = jax.random.normal(k_x, (N, in_planes, H, W), jnp.float32)  # NCHW like PyTorch
    params = _make_params(k_p, in_planes, planes)

    fwd = jax.jit(basic_block_forward, static_argnums=2)
    out = jax.block_until_ready(fwd(x, params, stride))
    ref = jax.block_until_ready(_ref_forward(x, params, stride))

    assert out.shape == (N, planes, H // stride, W // stride), out.shape
    err = float(jnp.max(jnp.abs(out - ref)))
    assert err < 1e-2, err
    print("KERNEL_OK")
</pallas_src>

<mosaic_0001>
module attributes {stable_mosaic.version = 11 : i64} {
  func.func @_conv_bn_relu_sc_kernel(%arg0: i32, %arg1: i32, %arg2: memref<1x4x88x4xbf16, #tpu.memory_space<vmem>>, %arg3: memref<9x4x128xbf16, #tpu.memory_space<vmem>>, %arg4: memref<1x128xf32, #tpu.memory_space<vmem>>, %arg5: memref<4x128xbf16, #tpu.memory_space<vmem>>, %arg6: memref<1x128xf32, #tpu.memory_space<vmem>>, %arg7: memref<1x72x128xf32, #tpu.memory_space<vmem>>, %arg8: memref<1x72x128xf32, #tpu.memory_space<vmem>>) attributes {dimension_semantics = [#tpu.dimension_semantics<parallel>, #tpu.dimension_semantics<parallel>], iteration_bounds = array<i64: 2, 1>, scalar_prefetch = 0 : i64, scratch_operands = 0 : i64, tpu.core_type = #tpu.core_type<tc>, window_params = [{transform_indices = @transform_0, window_bounds = array<i64: 1, 4, 88, 4>}, {pipeline_mode = #tpu.pipeline_mode<synchronous>, transform_indices = @transform_1, window_bounds = array<i64: 9, 4, 128>}, {pipeline_mode = #tpu.pipeline_mode<synchronous>, transform_indices = @transform_2, window_bounds = array<i64: 1, 128>}, {pipeline_mode = #tpu.pipeline_mode<synchronous>, transform_indices = @transform_3, window_bounds = array<i64: 4, 128>}, {pipeline_mode = #tpu.pipeline_mode<synchronous>, transform_indices = @transform_4, window_bounds = array<i64: 1, 128>}, {transform_indices = @transform_5, window_bounds = array<i64: 1, 72, 128>}, {transform_indices = @transform_6, window_bounds = array<i64: 1, 72, 128>}]} {
    %c0 = arith.constant 0 : index
    %c0_0 = arith.constant 0 : index
    %c0_1 = arith.constant 0 : index
    %c0_2 = arith.constant 0 : index
    %0 = vector.load %arg2[%c0, %c0_0, %c0_1, %c0_2] : memref<1x4x88x4xbf16, #tpu.memory_space<vmem>>, vector<1x1x72x4xbf16>
    %1 = vector.shape_cast %0 : vector<1x1x72x4xbf16> to vector<72x4xbf16>
    %c0_3 = arith.constant 0 : index
    %c0_4 = arith.constant 0 : index
    %c0_5 = arith.constant 0 : index
    %2 = vector.load %arg3[%c0_3, %c0_4, %c0_5] : memref<9x4x128xbf16, #tpu.memory_space<vmem>>, vector<1x4x128xbf16>
    %3 = vector.shape_cast %2 : vector<1x4x128xbf16> to vector<4x128xbf16>
    %cst = arith.constant dense<0.000000e+00> : vector<72x128xf32>
    %4 = tpu.matmul %1, %3, %cst {dimension_numbers = #tpu.dot_dimension_numbers<[1], [0], [0], [1], [0, 0, 1, 1], [], []>} : vector<72x4xbf16>, vector<4x128xbf16>, vector<72x128xf32> -> vector<72x128xf32>
    %c0_6 = arith.constant 0 : index
    %c1 = arith.constant 1 : index
    %c0_7 = arith.constant 0 : index
    %c0_8 = arith.constant 0 : index
    %5 = vector.load %arg2[%c0_6, %c1, %c0_7, %c0_8] : memref<1x4x88x4xbf16, #tpu.memory_space<vmem>>, vector<1x1x72x4xbf16>
    %6 = vector.shape_cast %5 : vector<1x1x72x4xbf16> to vector<72x4xbf16>
    %c1_9 = arith.constant 1 : index
    %c0_10 = arith.constant 0 : index
    %c0_11 = arith.constant 0 : index
    %7 = vector.load %arg3[%c1_9, %c0_10, %c0_11] : memref<9x4x128xbf16, #tpu.memory_space<vmem>>, vector<1x4x128xbf16>
    %8 = vector.shape_cast %7 : vector<1x4x128xbf16> to vector<4x128xbf16>
    %cst_12 = arith.constant dense<0.000000e+00> : vector<72x128xf32>
    %9 = tpu.matmul %6, %8, %cst_12 {dimension_numbers = #tpu.dot_dimension_numbers<[1], [0], [0], [1], [0, 0, 1, 1], [], []>} : vector<72x4xbf16>, vector<4x128xbf16>, vector<72x128xf32> -> vector<72x128xf32>
    %10 = arith.addf %4, %9 : vector<72x128xf32>
    %c0_13 = arith.constant 0 : index
    %c0_14 = arith.constant 0 : index
    %c1_15 = arith.constant 1 : index
    %c0_16 = arith.constant 0 : index
    %11 = vector.load %arg2[%c0_13, %c0_14, %c1_15, %c0_16] : memref<1x4x88x4xbf16, #tpu.memory_space<vmem>>, vector<1x1x72x4xbf16>
    %12 = vector.shape_cast %11 : vector<1x1x72x4xbf16> to vector<72x4xbf16>
    %c2 = arith.constant 2 : index
    %c0_17 = arith.constant 0 : index
    %c0_18 = arith.constant 0 : index
    %13 = vector.load %arg3[%c2, %c0_17, %c0_18] : memref<9x4x128xbf16, #tpu.memory_space<vmem>>, vector<1x4x128xbf16>
    %14 = vector.shape_cast %13 : vector<1x4x128xbf16> to vector<4x128xbf16>
    %cst_19 = arith.constant dense<0.000000e+00> : vector<72x128xf32>
    %15 = tpu.matmul %12, %14, %cst_19 {dimension_numbers = #tpu.dot_dimension_numbers<[1], [0], [0], [1], [0, 0, 1, 1], [], []>} : vector<72x4xbf16>, vector<4x128xbf16>, vector<72x128xf32> -> vector<72x128xf32>
    %16 = arith.addf %10, %15 : vector<72x128xf32>
    %c0_20 = arith.constant 0 : index
    %c2_21 = arith.constant 2 : index
    %c0_22 = arith.constant 0 : index
    %c0_23 = arith.constant 0 : index
    %17 = vector.load %arg2[%c0_20, %c2_21, %c0_22, %c0_23] : memref<1x4x88x4xbf16, #tpu.memory_space<vmem>>, vector<1x1x72x4xbf16>
    %18 = vector.shape_cast %17 : vector<1x1x72x4xbf16> to vector<72x4xbf16>
    %c3 = arith.constant 3 : index
    %c0_24 = arith.constant 0 : index
    %c0_25 = arith.constant 0 : index
    %19 = vector.load %arg3[%c3, %c0_24, %c0_25] : memref<9x4x128xbf16, #tpu.memory_space<vmem>>, vector<1x4x128xbf16>
    %20 = vector.shape_cast %19 : vector<1x4x128xbf16> to vector<4x128xbf16>
    %cst_26 = arith.constant dense<0.000000e+00> : vector<72x128xf32>
    %21 = tpu.matmul %18, %20, %cst_26 {dimension_numbers = #tpu.dot_dimension_numbers<[1], [0], [0], [1], [0, 0, 1, 1], [], []>} : vector<72x4xbf16>, vector<4x128xbf16>, vector<72x128xf32> -> vector<72x128xf32>
    %22 = arith.addf %16, %21 : vector<72x128xf32>
    %c0_27 = arith.constant 0 : index
    %c3_28 = arith.constant 3 : index
    %c0_29 = arith.constant 0 : index
    %c0_30 = arith.constant 0 : index
    %23 = vector.load %arg2[%c0_27, %c3_28, %c0_29, %c0_30] : memref<1x4x88x4xbf16, #tpu.memory_space<vmem>>, vector<1x1x72x4xbf16>
    %24 = vector.shape_cast %23 : vector<1x1x72x4xbf16> to vector<72x4xbf16>
    %c4 = arith.constant 4 : index
    %c0_31 = arith.constant 0 : index
    %c0_32 = arith.constant 0 : index
    %25 = vector.load %arg3[%c4, %c0_31, %c0_32] : memref<9x4x128xbf16, #tpu.memory_space<vmem>>, vector<1x4x128xbf16>
    %26 = vector.shape_cast %25 : vector<1x4x128xbf16> to vector<4x128xbf16>
    %cst_33 = arith.constant dense<0.000000e+00> : vector<72x128xf32>
    %27 = tpu.matmul %24, %26, %cst_33 {dimension_numbers = #tpu.dot_dimension_numbers<[1], [0], [0], [1], [0, 0, 1, 1], [], []>} : vector<72x4xbf16>, vector<4x128xbf16>, vector<72x128xf32> -> vector<72x128xf32>
    %28 = arith.addf %22, %27 : vector<72x128xf32>
    %c0_34 = arith.constant 0 : index
    %c2_35 = arith.constant 2 : index
    %c1_36 = arith.constant 1 : index
    %c0_37 = arith.constant 0 : index
    %29 = vector.load %arg2[%c0_34, %c2_35, %c1_36, %c0_37] : memref<1x4x88x4xbf16, #tpu.memory_space<vmem>>, vector<1x1x72x4xbf16>
    %30 = vector.shape_cast %29 : vector<1x1x72x4xbf16> to vector<72x4xbf16>
    %c5 = arith.constant 5 : index
    %c0_38 = arith.constant 0 : index
    %c0_39 = arith.constant 0 : index
    %31 = vector.load %arg3[%c5, %c0_38, %c0_39] : memref<9x4x128xbf16, #tpu.memory_space<vmem>>, vector<1x4x128xbf16>
    %32 = vector.shape_cast %31 : vector<1x4x128xbf16> to vector<4x128xbf16>
    %cst_40 = arith.constant dense<0.000000e+00> : vector<72x128xf32>
    %33 = tpu.matmul %30, %32, %cst_40 {dimension_numbers = #tpu.dot_dimension_numbers<[1], [0], [0], [1], [0, 0, 1, 1], [], []>} : vector<72x4xbf16>, vector<4x128xbf16>, vector<72x128xf32> -> vector<72x128xf32>
    %34 = arith.addf %28, %33 : vector<72x128xf32>
    %c0_41 = arith.constant 0 : index
    %c0_42 = arith.constant 0 : index
    %c9 = arith.constant 9 : index
    %c0_43 = arith.constant 0 : index
    %35 = vector.load %arg2[%c0_41, %c0_42, %c9, %c0_43] : memref<1x4x88x4xbf16, #tpu.memory_space<vmem>>, vector<1x1x72x4xbf16>
    %36 = vector.shape_cast %35 : vector<1x1x72x4xbf16> to vector<72x4xbf16>
    %c6 = arith.constant 6 : index
    %c0_44 = arith.constant 0 : index
    %c0_45 = arith.constant 0 : index
    %37 = vector.load %arg3[%c6, %c0_44, %c0_45] : memref<9x4x128xbf16, #tpu.memory_space<vmem>>, vector<1x4x128xbf16>
    %38 = vector.shape_cast %37 : vector<1x4x128xbf16> to vector<4x128xbf16>
    %cst_46 = arith.constant dense<0.000000e+00> : vector<72x128xf32>
    %39 = tpu.matmul %36, %38, %cst_46 {dimension_numbers = #tpu.dot_dimension_numbers<[1], [0], [0], [1], [0, 0, 1, 1], [], []>} : vector<72x4xbf16>, vector<4x128xbf16>, vector<72x128xf32> -> vector<72x128xf32>
    %40 = arith.addf %34, %39 : vector<72x128xf32>
    %c0_47 = arith.constant 0 : index
    %c1_48 = arith.constant 1 : index
    %c9_49 = arith.constant 9 : index
    %c0_50 = arith.constant 0 : index
    %41 = vector.load %arg2[%c0_47, %c1_48, %c9_49, %c0_50] : memref<1x4x88x4xbf16, #tpu.memory_space<vmem>>, vector<1x1x72x4xbf16>
    %42 = vector.shape_cast %41 : vector<1x1x72x4xbf16> to vector<72x4xbf16>
    %c7 = arith.constant 7 : index
    %c0_51 = arith.constant 0 : index
    %c0_52 = arith.constant 0 : index
    %43 = vector.load %arg3[%c7, %c0_51, %c0_52] : memref<9x4x128xbf16, #tpu.memory_space<vmem>>, vector<1x4x128xbf16>
    %44 = vector.shape_cast %43 : vector<1x4x128xbf16> to vector<4x128xbf16>
    %cst_53 = arith.constant dense<0.000000e+00> : vector<72x128xf32>
    %45 = tpu.matmul %42, %44, %cst_53 {dimension_numbers = #tpu.dot_dimension_numbers<[1], [0], [0], [1], [0, 0, 1, 1], [], []>} : vector<72x4xbf16>, vector<4x128xbf16>, vector<72x128xf32> -> vector<72x128xf32>
    %46 = arith.addf %40, %45 : vector<72x128xf32>
    %c0_54 = arith.constant 0 : index
    %c0_55 = arith.constant 0 : index
    %c10 = arith.constant 10 : index
    %c0_56 = arith.constant 0 : index
    %47 = vector.load %arg2[%c0_54, %c0_55, %c10, %c0_56] : memref<1x4x88x4xbf16, #tpu.memory_space<vmem>>, vector<1x1x72x4xbf16>
    %48 = vector.shape_cast %47 : vector<1x1x72x4xbf16> to vector<72x4xbf16>
    %c8 = arith.constant 8 : index
    %c0_57 = arith.constant 0 : index
    %c0_58 = arith.constant 0 : index
    %49 = vector.load %arg3[%c8, %c0_57, %c0_58] : memref<9x4x128xbf16, #tpu.memory_space<vmem>>, vector<1x4x128xbf16>
    %50 = vector.shape_cast %49 : vector<1x4x128xbf16> to vector<4x128xbf16>
    %cst_59 = arith.constant dense<0.000000e+00> : vector<72x128xf32>
    %51 = tpu.matmul %48, %50, %cst_59 {dimension_numbers = #tpu.dot_dimension_numbers<[1], [0], [0], [1], [0, 0, 1, 1], [], []>} : vector<72x4xbf16>, vector<4x128xbf16>, vector<72x128xf32> -> vector<72x128xf32>
    %52 = arith.addf %46, %51 : vector<72x128xf32>
    %c0_60 = arith.constant 0 : index
    %c0_61 = arith.constant 0 : index
    %53 = vector.load %arg4[%c0_60, %c0_61] : memref<1x128xf32, #tpu.memory_space<vmem>>, vector<1x128xf32>
    %54 = vector.broadcast %53 : vector<1x128xf32> to vector<72x128xf32>
    %55 = arith.addf %52, %54 : vector<72x128xf32>
    %cst_62 = arith.constant 0.000000e+00 : f32
    %56 = vector.broadcast %cst_62 : f32 to vector<72x128xf32>
    %57 = arith.maximumf %55, %56 : vector<72x128xf32>
    %c0_63 = arith.constant 0 : index
    %c0_64 = arith.constant 0 : index
    %c0_65 = arith.constant 0 : index
    %58 = vector.load %arg7[%c0_63, %c0_64, %c0_65] : memref<1x72x128xf32, #tpu.memory_space<vmem>>, vector<1x72x128xf32>
    %59 = vector.shape_cast %58 : vector<1x72x128xf32> to vector<72x128xf32>
    %60 = vector.shape_cast %57 : vector<72x128xf32> to vector<1x72x128xf32>
    tpu.vector_store %arg7[%c0_63, %c0_64, %c0_65], %60 {strides = array<i32>} : memref<1x72x128xf32, #tpu.memory_space<vmem>>, vector<1x72x128xf32>,
    %c0_66 = arith.constant 0 : index
    %c3_67 = arith.constant 3 : index
    %c0_68 = arith.constant 0 : index
    %c0_69 = arith.constant 0 : index
    %61 = vector.load %arg2[%c0_66, %c3_67, %c0_68, %c0_69] : memref<1x4x88x4xbf16, #tpu.memory_space<vmem>>, vector<1x1x72x4xbf16>
    %62 = vector.shape_cast %61 : vector<1x1x72x4xbf16> to vector<72x4xbf16>
    %c0_70 = arith.constant 0 : index
    %c0_71 = arith.constant 0 : index
    %63 = vector.load %arg5[%c0_70, %c0_71] : memref<4x128xbf16, #tpu.memory_space<vmem>>, vector<4x128xbf16>
    %cst_72 = arith.constant dense<0.000000e+00> : vector<72x128xf32>
    %64 = tpu.matmul %62, %63, %cst_72 {dimension_numbers = #tpu.dot_dimension_numbers<[1], [0], [0], [1], [0, 0, 1, 1], [], []>} : vector<72x4xbf16>, vector<4x128xbf16>, vector<72x128xf32> -> vector<72x128xf32>
    %c0_73 = arith.constant 0 : index
    %c0_74 = arith.constant 0 : index
    %65 = vector.load %arg6[%c0_73, %c0_74] : memref<1x128xf32, #tpu.memory_space<vmem>>, vector<1x128xf32>
    %66 = vector.broadcast %65 : vector<1x128xf32> to vector<72x128xf32>
    %67 = arith.addf %64, %66 : vector<72x128xf32>
    %c0_75 = arith.constant 0 : index
    %c0_76 = arith.constant 0 : index
    %c0_77 = arith.constant 0 : index
    %68 = vector.load %arg8[%c0_75, %c0_76, %c0_77] : memref<1x72x128xf32, #tpu.memory_space<vmem>>, vector<1x72x128xf32>
    %69 = vector.shape_cast %68 : vector<1x72x128xf32> to vector<72x128xf32>
    %70 = vector.shape_cast %67 : vector<72x128xf32> to vector<1x72x128xf32>
    tpu.vector_store %arg8[%c0_75, %c0_76, %c0_77], %70 {strides = array<i32>} : memref<1x72x128xf32, #tpu.memory_space<vmem>>, vector<1x72x128xf32>,
    return
  }
  func.func @transform_0(%arg0: i32, %arg1: i32) -> (i32, i32, i32, i32) {
    %c0_i32 = arith.constant 0 : i32
    %c0_i32_0 = arith.constant 0 : i32
    %c0_i32_1 = arith.constant 0 : i32
    %c0_i32_2 = arith.constant 0 : i32
    return %arg0, %c0_i32, %c0_i32_0, %c0_i32_1 : i32, i32, i32, i32
  }
  func.func @transform_1(%arg0: i32, %arg1: i32) -> (i32, i32, i32) {
    %c0_i32 = arith.constant 0 : i32
    %c0_i32_0 = arith.constant 0 : i32
    %c0_i32_1 = arith.constant 0 : i32
    %c0_i32_2 = arith.constant 0 : i32
    return %c0_i32, %c0_i32_0, %c0_i32_1 : i32, i32, i32
  }
  func.func @transform_2(%arg0: i32, %arg1: i32) -> (i32, i32) {
    %c0_i32 = arith.constant 0 : i32
    %c0_i32_0 = arith.constant 0 : i32
    %c0_i32_1 = arith.constant 0 : i32
    return %c0_i32, %c0_i32_0 : i32, i32
  }
  func.func @transform_3(%arg0: i32, %arg1: i32) -> (i32, i32) {
    %c0_i32 = arith.constant 0 : i32
    %c0_i32_0 = arith.constant 0 : i32
    %c0_i32_1 = arith.constant 0 : i32
    return %c0_i32, %c0_i32_0 : i32, i32
  }
  func.func @transform_4(%arg0: i32, %arg1: i32) -> (i32, i32) {
    %c0_i32 = arith.constant 0 : i32
    %c0_i32_0 = arith.constant 0 : i32
    %c0_i32_1 = arith.constant 0 : i32
    return %c0_i32, %c0_i32_0 : i32, i32
  }
  func.func @transform_5(%arg0: i32, %arg1: i32) -> (i32, i32, i32) {
    %c0_i32 = arith.constant 0 : i32
    %c0_i32_0 = arith.constant 0 : i32
    return %arg0, %arg1, %c0_i32 : i32, i32, i32
  }
  func.func @transform_6(%arg0: i32, %arg1: i32) -> (i32, i32, i32) {
    %c0_i32 = arith.constant 0 : i32
    %c0_i32_0 = arith.constant 0 : i32
    return %arg0, %arg1, %c0_i32 : i32, i32, i32
  }
}

module attributes {stable_mosaic.version = 11 : i64} {
  func.func @_conv_bn_add_relu_kernel(%arg0: i32, %arg1: i32, %arg2: memref<1x1x104x8xbf16, #tpu.memory_space<vmem>>, %arg3: memref<9x8x128xbf16, #tpu.memory_space<vmem>>, %arg4: memref<1x128xf32, #tpu.memory_space<vmem>>, %arg5: memref<1x80x128xf32, #tpu.memory_space<vmem>>, %arg6: memref<1x80x128xf32, #tpu.memory_space<vmem>>) attributes {dimension_semantics = [#tpu.dimension_semantics<parallel>, #tpu.dimension_semantics<parallel>], iteration_bounds = array<i64: 2, 1>, scalar_prefetch = 0 : i64, scratch_operands = 0 : i64, tpu.core_type = #tpu.core_type<tc>, window_params = [{transform_indices = @transform_0, window_bounds = array<i64: 1, 1, 104, 8>}, {pipeline_mode = #tpu.pipeline_mode<synchronous>, transform_indices = @transform_1, window_bounds = array<i64: 9, 8, 128>}, {pipeline_mode = #tpu.pipeline_mode<synchronous>, transform_indices = @transform_2, window_bounds = array<i64: 1, 128>}, {transform_indices = @transform_3, window_bounds = array<i64: 1, 80, 128>}, {transform_indices = @transform_4, window_bounds = array<i64: 1, 80, 128>}]} {
    %c0 = arith.constant 0 : index
    %c0_0 = arith.constant 0 : index
    %c0_1 = arith.constant 0 : index
    %c0_2 = arith.constant 0 : index
    %0 = vector.load %arg2[%c0, %c0_0, %c0_1, %c0_2] : memref<1x1x104x8xbf16, #tpu.memory_space<vmem>>, vector<1x1x80x8xbf16>
    %1 = vector.shape_cast %0 : vector<1x1x80x8xbf16> to vector<80x8xbf16>
    %c0_3 = arith.constant 0 : index
    %c0_4 = arith.constant 0 : index
    %c0_5 = arith.constant 0 : index
    %2 = vector.load %arg3[%c0_3, %c0_4, %c0_5] : memref<9x8x128xbf16, #tpu.memory_space<vmem>>, vector<1x8x128xbf16>
    %3 = vector.shape_cast %2 : vector<1x8x128xbf16> to vector<8x128xbf16>
    %cst = arith.constant dense<0.000000e+00> : vector<80x128xf32>
    %4 = tpu.matmul %1, %3, %cst {dimension_numbers = #tpu.dot_dimension_numbers<[1], [0], [0], [1], [0, 0, 1, 1], [], []>} : vector<80x8xbf16>, vector<8x128xbf16>, vector<80x128xf32> -> vector<80x128xf32>
    %c0_6 = arith.constant 0 : index
    %c0_7 = arith.constant 0 : index
    %c1 = arith.constant 1 : index
    %c0_8 = arith.constant 0 : index
    %5 = vector.load %arg2[%c0_6, %c0_7, %c1, %c0_8] : memref<1x1x104x8xbf16, #tpu.memory_space<vmem>>, vector<1x1x80x8xbf16>
    %6 = vector.shape_cast %5 : vector<1x1x80x8xbf16> to vector<80x8xbf16>
    %c1_9 = arith.constant 1 : index
    %c0_10 = arith.constant 0 : index
    %c0_11 = arith.constant 0 : index
    %7 = vector.load %arg3[%c1_9, %c0_10, %c0_11] : memref<9x8x128xbf16, #tpu.memory_space<vmem>>, vector<1x8x128xbf16>
    %8 = vector.shape_cast %7 : vector<1x8x128xbf16> to vector<8x128xbf16>
    %cst_12 = arith.constant dense<0.000000e+00> : vector<80x128xf32>
    %9 = tpu.matmul %6, %8, %cst_12 {dimension_numbers = #tpu.dot_dimension_numbers<[1], [0], [0], [1], [0, 0, 1, 1], [], []>} : vector<80x8xbf16>, vector<8x128xbf16>, vector<80x128xf32> -> vector<80x128xf32>
    %10 = arith.addf %4, %9 : vector<80x128xf32>
    %c0_13 = arith.constant 0 : index
    %c0_14 = arith.constant 0 : index
    %c2 = arith.constant 2 : index
    %c0_15 = arith.constant 0 : index
    %11 = vector.load %arg2[%c0_13, %c0_14, %c2, %c0_15] : memref<1x1x104x8xbf16, #tpu.memory_space<vmem>>, vector<1x1x80x8xbf16>
    %12 = vector.shape_cast %11 : vector<1x1x80x8xbf16> to vector<80x8xbf16>
    %c2_16 = arith.constant 2 : index
    %c0_17 = arith.constant 0 : index
    %c0_18 = arith.constant 0 : index
    %13 = vector.load %arg3[%c2_16, %c0_17, %c0_18] : memref<9x8x128xbf16, #tpu.memory_space<vmem>>, vector<1x8x128xbf16>
    %14 = vector.shape_cast %13 : vector<1x8x128xbf16> to vector<8x128xbf16>
    %cst_19 = arith.constant dense<0.000000e+00> : vector<80x128xf32>
    %15 = tpu.matmul %12, %14, %cst_19 {dimension_numbers = #tpu.dot_dimension_numbers<[1], [0], [0], [1], [0, 0, 1, 1], [], []>} : vector<80x8xbf16>, vector<8x128xbf16>, vector<80x128xf32> -> vector<80x128xf32>
    %16 = arith.addf %10, %15 : vector<80x128xf32>
    %c0_20 = arith.constant 0 : index
    %c0_21 = arith.constant 0 : index
    %c10 = arith.constant 10 : index
    %c0_22 = arith.constant 0 : index
    %17 = vector.load %arg2[%c0_20, %c0_21, %c10, %c0_22] : memref<1x1x104x8xbf16, #tpu.memory_space<vmem>>, vector<1x1x80x8xbf16>
    %18 = vector.shape_cast %17 : vector<1x1x80x8xbf16> to vector<80x8xbf16>
    %c3 = arith.constant 3 : index
    %c0_23 = arith.constant 0 : index
    %c0_24 = arith.constant 0 : index
    %19 = vector.load %arg3[%c3, %c0_23, %c0_24] : memref<9x8x128xbf16, #tpu.memory_space<vmem>>, vector<1x8x128xbf16>
    %20 = vector.shape_cast %19 : vector<1x8x128xbf16> to vector<8x128xbf16>
    %cst_25 = arith.constant dense<0.000000e+00> : vector<80x128xf32>
    %21 = tpu.matmul %18, %20, %cst_25 {dimension_numbers = #tpu.dot_dimension_numbers<[1], [0], [0], [1], [0, 0, 1, 1], [], []>} : vector<80x8xbf16>, vector<8x128xbf16>, vector<80x128xf32> -> vector<80x128xf32>
    %22 = arith.addf %16, %21 : vector<80x128xf32>
    %c0_26 = arith.constant 0 : index
    %c0_27 = arith.constant 0 : index
    %c11 = arith.constant 11 : index
    %c0_28 = arith.constant 0 : index
    %23 = vector.load %arg2[%c0_26, %c0_27, %c11, %c0_28] : memref<1x1x104x8xbf16, #tpu.memory_space<vmem>>, vector<1x1x80x8xbf16>
    %24 = vector.shape_cast %23 : vector<1x1x80x8xbf16> to vector<80x8xbf16>
    %c4 = arith.constant 4 : index
    %c0_29 = arith.constant 0 : index
    %c0_30 = arith.constant 0 : index
    %25 = vector.load %arg3[%c4, %c0_29, %c0_30] : memref<9x8x128xbf16, #tpu.memory_space<vmem>>, vector<1x8x128xbf16>
    %26 = vector.shape_cast %25 : vector<1x8x128xbf16> to vector<8x128xbf16>
    %cst_31 = arith.constant dense<0.000000e+00> : vector<80x128xf32>
    %27 = tpu.matmul %24, %26, %cst_31 {dimension_numbers = #tpu.dot_dimension_numbers<[1], [0], [0], [1], [0, 0, 1, 1], [], []>} : vector<80x8xbf16>, vector<8x128xbf16>, vector<80x128xf32> -> vector<80x128xf32>
    %28 = arith.addf %22, %27 : vector<80x128xf32>
    %c0_32 = arith.constant 0 : index
    %c0_33 = arith.constant 0 : index
    %c12 = arith.constant 12 : index
    %c0_34 = arith.constant 0 : index
    %29 = vector.load %arg2[%c0_32, %c0_33, %c12, %c0_34] : memref<1x1x104x8xbf16, #tpu.memory_space<vmem>>, vector<1x1x80x8xbf16>
    %30 = vector.shape_cast %29 : vector<1x1x80x8xbf16> to vector<80x8xbf16>
    %c5 = arith.constant 5 : index
    %c0_35 = arith.constant 0 : index
    %c0_36 = arith.constant 0 : index
    %31 = vector.load %arg3[%c5, %c0_35, %c0_36] : memref<9x8x128xbf16, #tpu.memory_space<vmem>>, vector<1x8x128xbf16>
    %32 = vector.shape_cast %31 : vector<1x8x128xbf16> to vector<8x128xbf16>
    %cst_37 = arith.constant dense<0.000000e+00> : vector<80x128xf32>
    %33 = tpu.matmul %30, %32, %cst_37 {dimension_numbers = #tpu.dot_dimension_numbers<[1], [0], [0], [1], [0, 0, 1, 1], [], []>} : vector<80x8xbf16>, vector<8x128xbf16>, vector<80x128xf32> -> vector<80x128xf32>
    %34 = arith.addf %28, %33 : vector<80x128xf32>
    %c0_38 = arith.constant 0 : index
    %c0_39 = arith.constant 0 : index
    %c20 = arith.constant 20 : index
    %c0_40 = arith.constant 0 : index
    %35 = vector.load %arg2[%c0_38, %c0_39, %c20, %c0_40] : memref<1x1x104x8xbf16, #tpu.memory_space<vmem>>, vector<1x1x80x8xbf16>
    %36 = vector.shape_cast %35 : vector<1x1x80x8xbf16> to vector<80x8xbf16>
    %c6 = arith.constant 6 : index
    %c0_41 = arith.constant 0 : index
    %c0_42 = arith.constant 0 : index
    %37 = vector.load %arg3[%c6, %c0_41, %c0_42] : memref<9x8x128xbf16, #tpu.memory_space<vmem>>, vector<1x8x128xbf16>
    %38 = vector.shape_cast %37 : vector<1x8x128xbf16> to vector<8x128xbf16>
    %cst_43 = arith.constant dense<0.000000e+00> : vector<80x128xf32>
    %39 = tpu.matmul %36, %38, %cst_43 {dimension_numbers = #tpu.dot_dimension_numbers<[1], [0], [0], [1], [0, 0, 1, 1], [], []>} : vector<80x8xbf16>, vector<8x128xbf16>, vector<80x128xf32> -> vector<80x128xf32>
    %40 = arith.addf %34, %39 : vector<80x128xf32>
    %c0_44 = arith.constant 0 : index
    %c0_45 = arith.constant 0 : index
    %c21 = arith.constant 21 : index
    %c0_46 = arith.constant 0 : index
    %41 = vector.load %arg2[%c0_44, %c0_45, %c21, %c0_46] : memref<1x1x104x8xbf16, #tpu.memory_space<vmem>>, vector<1x1x80x8xbf16>
    %42 = vector.shape_cast %41 : vector<1x1x80x8xbf16> to vector<80x8xbf16>
    %c7 = arith.constant 7 : index
    %c0_47 = arith.constant 0 : index
    %c0_48 = arith.constant 0 : index
    %43 = vector.load %arg3[%c7, %c0_47, %c0_48] : memref<9x8x128xbf16, #tpu.memory_space<vmem>>, vector<1x8x128xbf16>
    %44 = vector.shape_cast %43 : vector<1x8x128xbf16> to vector<8x128xbf16>
    %cst_49 = arith.constant dense<0.000000e+00> : vector<80x128xf32>
    %45 = tpu.matmul %42, %44, %cst_49 {dimension_numbers = #tpu.dot_dimension_numbers<[1], [0], [0], [1], [0, 0, 1, 1], [], []>} : vector<80x8xbf16>, vector<8x128xbf16>, vector<80x128xf32> -> vector<80x128xf32>
    %46 = arith.addf %40, %45 : vector<80x128xf32>
    %c0_50 = arith.constant 0 : index
    %c0_51 = arith.constant 0 : index
    %c22 = arith.constant 22 : index
    %c0_52 = arith.constant 0 : index
    %47 = vector.load %arg2[%c0_50, %c0_51, %c22, %c0_52] : memref<1x1x104x8xbf16, #tpu.memory_space<vmem>>, vector<1x1x80x8xbf16>
    %48 = vector.shape_cast %47 : vector<1x1x80x8xbf16> to vector<80x8xbf16>
    %c8 = arith.constant 8 : index
    %c0_53 = arith.constant 0 : index
    %c0_54 = arith.constant 0 : index
    %49 = vector.load %arg3[%c8, %c0_53, %c0_54] : memref<9x8x128xbf16, #tpu.memory_space<vmem>>, vector<1x8x128xbf16>
    %50 = vector.shape_cast %49 : vector<1x8x128xbf16> to vector<8x128xbf16>
    %cst_55 = arith.constant dense<0.000000e+00> : vector<80x128xf32>
    %51 = tpu.matmul %48, %50, %cst_55 {dimension_numbers = #tpu.dot_dimension_numbers<[1], [0], [0], [1], [0, 0, 1, 1], [], []>} : vector<80x8xbf16>, vector<8x128xbf16>, vector<80x128xf32> -> vector<80x128xf32>
    %52 = arith.addf %46, %51 : vector<80x128xf32>
    %c0_56 = arith.constant 0 : index
    %c0_57 = arith.constant 0 : index
    %53 = vector.load %arg4[%c0_56, %c0_57] : memref<1x128xf32, #tpu.memory_space<vmem>>, vector<1x128xf32>
    %54 = vector.broadcast %53 : vector<1x128xf32> to vector<80x128xf32>
    %55 = arith.addf %52, %54 : vector<80x128xf32>
    %c0_58 = arith.constant 0 : index
    %c0_59 = arith.constant 0 : index
    %c0_60 = arith.constant 0 : index
    %56 = vector.load %arg5[%c0_58, %c0_59, %c0_60] : memref<1x80x128xf32, #tpu.memory_space<vmem>>, vector<1x80x128xf32>
    %57 = vector.shape_cast %56 : vector<1x80x128xf32> to vector<80x128xf32>
    %58 = arith.addf %55, %57 : vector<80x128xf32>
    %cst_61 = arith.constant 0.000000e+00 : f32
    %59 = vector.broadcast %cst_61 : f32 to vector<80x128xf32>
    %60 = arith.maximumf %58, %59 : vector<80x128xf32>
    %c0_62 = arith.constant 0 : index
    %c0_63 = arith.constant 0 : index
    %c0_64 = arith.constant 0 : index
    %61 = vector.load %arg6[%c0_62, %c0_63, %c0_64] : memref<1x80x128xf32, #tpu.memory_space<vmem>>, vector<1x80x128xf32>
    %62 = vector.shape_cast %61 : vector<1x80x128xf32> to vector<80x128xf32>
    %63 = vector.shape_cast %60 : vector<80x128xf32> to vector<1x80x128xf32>
    tpu.vector_store %arg6[%c0_62, %c0_63, %c0_64], %63 {strides = array<i32>} : memref<1x80x128xf32, #tpu.memory_space<vmem>>, vector<1x80x128xf32>,
    return
  }
  func.func @transform_0(%arg0: i32, %arg1: i32) -> (i32, i32, i32, i32) {
    %c0_i32 = arith.constant 0 : i32
    %c0_i32_0 = arith.constant 0 : i32
    %c0_i32_1 = arith.constant 0 : i32
    %c0_i32_2 = arith.constant 0 : i32
    return %arg0, %c0_i32, %c0_i32_0, %c0_i32_1 : i32, i32, i32, i32
  }
  func.func @transform_1(%arg0: i32, %arg1: i32) -> (i32, i32, i32) {
    %c0_i32 = arith.constant 0 : i32
    %c0_i32_0 = arith.constant 0 : i32
    %c0_i32_1 = arith.constant 0 : i32
    %c0_i32_2 = arith.constant 0 : i32
    return %c0_i32, %c0_i32_0, %c0_i32_1 : i32, i32, i32
  }
  func.func @transform_2(%arg0: i32, %arg1: i32) -> (i32, i32) {
    %c0_i32 = arith.constant 0 : i32
    %c0_i32_0 = arith.constant 0 : i32
    %c0_i32_1 = arith.constant 0 : i32
    return %c0_i32, %c0_i32_0 : i32, i32
  }
  func.func @transform_3(%arg0: i32, %arg1: i32) -> (i32, i32, i32) {
    %c0_i32 = arith.constant 0 : i32
    %c0_i32_0 = arith.constant 0 : i32
    return %arg0, %arg1, %c0_i32 : i32, i32, i32
  }
  func.func @transform_4(%arg0: i32, %arg1: i32) -> (i32, i32, i32) {
    %c0_i32 = arith.constant 0 : i32
    %c0_i32_0 = arith.constant 0 : i32
    return %arg0, %arg1, %c0_i32 : i32, i32, i32
  }
}

</mosaic_0001>

<llo_original>
// kernel: basic_block_forward.2
$region0: #{basic_block_forward.2}
  #allocation0 [shape = 'u32[]', space=smem, size = 0x4, offset = 0x4, fixed_abs, tag = 'smem constant byte address 0x4 - core index']
  #allocation1 [shape = 'u32[144,128]{1,0:T(1,128)}', space=vmem, size = 0x12000, scoped, tag = 'internal scratch']
  %s0 = inlined_call_operand.vmem [shape: bf16[2,4,88,4], index: 0, kind: input, shape index: {}]
  %s1 = inlined_call_operand.vmem [shape: bf16[9,4,128], index: 1, kind: input, shape index: {}]
  %s2 = inlined_call_operand.vmem [shape: f32[1,128], index: 2, kind: input, shape index: {}]
  %s3 = inlined_call_operand.vmem [shape: bf16[4,128], index: 3, kind: input, shape index: {}]
  %s4 = inlined_call_operand.vmem [shape: f32[1,128], index: 4, kind: input, shape index: {}]
  %s5 = inlined_call_operand.vmem [shape: f32[2,72,128], index: 5, kind: output, shape index: {0}]
  %s6 = inlined_call_operand.vmem [shape: f32[2,72,128], index: 6, kind: output, shape index: {1}]
  %7 = xla_tuple %s5, %s6
  %s8 = sld [smem:[#allocation0]]
  $region61: #{basic_block_forward.2} parent=0
    _
  %s10 = ssub.s32 1, %s8
  %s11 = scalar_select 0, %s10, %s8
  loop: start=0, step=1, limit=4
  $region2: #{basic_block_forward.2} parent=0 // loop_pre_header
    _
  $region3: #{basic_block_forward.2} parent=0 // loop_header
    %s13 = sphi 0, %s17
    %p14 = scmp.ge.s32.totalorder %s13, 4
    %s20 = sphi 0, %s32
    %s21 = sphi 0, %s28
    %s22 = sphi 0, %s20
    %s23 = sphi 0, %s21
    %s24 = sphi 0, %s22
    %s25 = sphi 0, %s23
    %s35 = sphi 0, %s37
    %s38 = sphi 0, %s35
    %s39 = sphi 0, %s38
    %s55 = sphi 0, %s39
    %s59 = sphi 0, %s59
    %s61 = sphi 0, %s59
    %s62 = sphi 0, %s61
    %s76 = sphi 0, %s62
    %s80 = sphi 0, %s80
    %s82 = sphi 0, %s80
    %s83 = sphi 0, %s82
    %s97 = sphi 0, %s83
    %s101 = sphi 0, %s101
    %s103 = sphi 0, %s101
    %s104 = sphi 0, %s103
    %s118 = sphi 0, %s104
    %s122 = sphi 0, %s122
    %s124 = sphi 0, %s122
    %s125 = sphi 0, %s124
    %s139 = sphi 0, %s125
    %s147 = sphi 0, %s149
    %s150 = sphi 0, %s147
    %s151 = sphi 0, %s150
    %s167 = sphi 0, %s151
    %s175 = sphi 0, %s177
    %s178 = sphi 0, %s175
    %s179 = sphi 0, %s178
    %s195 = sphi 0, %s179
  $region4: #{basic_block_forward.2} parent=0 // loop_header_branch
    %16 = sbr.rel (%p14) target = $region8
  $region5: #{basic_block_forward.2} parent=0 // loop_body
    %s18 = ssub.s32 %s13, 1
    %s19 = ssub.s32 %s13, 2
    %s26 = sadd.s32 1, %s21
    %p27 = scmp.ge.s32.totalorder %s26, 1
    %s28 = scalar_select %p27, 0, %s26
    %s29 = sadd.s32 1, %s20
    %s30 = scalar_select %p27, %s29, %s20
    %p31 = scmp.ge.s32.totalorder %s30, 2
    %s32 = scalar_select %p31, 0, %s30
    %s33 = ssub.s32 %s20, %s32
    %p34 = scmp.eq.s32.totalorder %s33, 0
    %s36 = sadd.s32 %s35, 1
    %s37 = scalar_select %p34, %s35, %s36
    %p40 = pneg %p34
    %p41 = scmp.eq.s32.totalorder %s13, 1
    %p42 = por %p40, %p41
    %p43 = scmp.ne.s32.totalorder %s35, %s38
    %p44 = scmp.eq.s32.totalorder %s13, 0
    %p45 = por %p43, %p44
    %p46 = scmp.ne.s32.totalorder %s35, %s38
    %p47 = scmp.eq.s32.totalorder %s18, 1
    %p48 = por %p46, %p47
    %p49 = scmp.ne.s32.totalorder %s38, %s39
    %p50 = scmp.eq.s32.totalorder %s18, 0
    %p51 = por %p49, %p50
    %p52 = scmp.ne.s32.totalorder %s38, %s39
    %p53 = scmp.eq.s32.totalorder %s19, 1
    %p54 = por %p52, %p53
    %p56 = scmp.ne.s32.totalorder %s39, %s55
    %p57 = scmp.eq.s32.totalorder %s19, 0
    %p58 = por %p56, %p57
    %s60 = sadd.s32 %s59, 1
    %p63 = scmp.eq.s32.totalorder %s13, 1
    %p64 = scmp.ne.s32.totalorder %s59, %s61
    %p65 = scmp.eq.s32.totalorder %s13, 0
    %p66 = por %p64, %p65
    %p67 = scmp.ne.s32.totalorder %s59, %s61
    %p68 = scmp.eq.s32.totalorder %s18, 1
    %p69 = por %p67, %p68
    %p70 = scmp.ne.s32.totalorder %s61, %s62
    %p71 = scmp.eq.s32.totalorder %s18, 0
    %p72 = por %p70, %p71
    %p73 = scmp.ne.s32.totalorder %s61, %s62
    %p74 = scmp.eq.s32.totalorder %s19, 1
    %p75 = por %p73, %p74
    %p77 = scmp.ne.s32.totalorder %s62, %s76
    %p78 = scmp.eq.s32.totalorder %s19, 0
    %p79 = por %p77, %p78
    %s81 = sadd.s32 %s80, 1
    %p84 = scmp.eq.s32.totalorder %s13, 1
    %p85 = scmp.ne.s32.totalorder %s80, %s82
    %p86 = scmp.eq.s32.totalorder %s13, 0
    %p87 = por %p85, %p86
    %p88 = scmp.ne.s32.totalorder %s80, %s82
    %p89 = scmp.eq.s32.totalorder %s18, 1
    %p90 = por %p88, %p89
    %p91 = scmp.ne.s32.totalorder %s82, %s83
    %p92 = scmp.eq.s32.totalorder %s18, 0
    %p93 = por %p91, %p92
    %p94 = scmp.ne.s32.totalorder %s82, %s83
    %p95 = scmp.eq.s32.totalorder %s19, 1
    %p96 = por %p94, %p95
    %p98 = scmp.ne.s32.totalorder %s83, %s97
    %p99 = scmp.eq.s32.totalorder %s19, 0
    %p100 = por %p98, %p99
    %s102 = sadd.s32 %s101, 1
    %p105 = scmp.eq.s32.totalorder %s13, 1
    %p106 = scmp.ne.s32.totalorder %s101, %s103
    %p107 = scmp.eq.s32.totalorder %s13, 0
    %p108 = por %p106, %p107
    %p109 = scmp.ne.s32.totalorder %s101, %s103
    %p110 = scmp.eq.s32.totalorder %s18, 1
    %p111 = por %p109, %p110
    %p112 = scmp.ne.s32.totalorder %s103, %s104
    %p113 = scmp.eq.s32.totalorder %s18, 0
    %p114 = por %p112, %p113
    %p115 = scmp.ne.s32.totalorder %s103, %s104
    %p116 = scmp.eq.s32.totalorder %s19, 1
    %p117 = por %p115, %p116
    %p119 = scmp.ne.s32.totalorder %s104, %s118
    %p120 = scmp.eq.s32.totalorder %s19, 0
    %p121 = por %p119, %p120
    %s123 = sadd.s32 %s122, 1
    %p126 = scmp.eq.s32.totalorder %s13, 1
    %p127 = scmp.ne.s32.totalorder %s122, %s124
    %p128 = scmp.eq.s32.totalorder %s13, 0
    %p129 = por %p127, %p128
    %p130 = scmp.ne.s32.totalorder %s122, %s124
    %p131 = scmp.eq.s32.totalorder %s18, 1
    %p132 = por %p130, %p131
    %p133 = scmp.ne.s32.totalorder %s124, %s125
    %p134 = scmp.eq.s32.totalorder %s18, 0
    %p135 = por %p133, %p134
    %p136 = scmp.ne.s32.totalorder %s124, %s125
    %p137 = scmp.eq.s32.totalorder %s19, 1
    %p138 = por %p136, %p137
    %p140 = scmp.ne.s32.totalorder %s125, %s139
    %p141 = scmp.eq.s32.totalorder %s19, 0
    %p142 = por %p140, %p141
    %s143 = ssub.s32 %s20, %s32
    %s144 = ssub.s32 %s21, %s28
    %s145 = sor.u32 %s143, %s144
    %p146 = scmp.eq.s32.totalorder %s145, 0
    %s148 = sadd.s32 %s147, 1
    %s149 = scalar_select %p146, %s147, %s148
    %p152 = pneg %p146
    %p153 = scmp.eq.s32.totalorder %s13, 1
    %p154 = por %p152, %p153
    %p155 = scmp.ne.s32.totalorder %s147, %s150
    %p156 = scmp.eq.s32.totalorder %s13, 0
    %p157 = por %p155, %p156
    %p158 = scmp.ne.s32.totalorder %s147, %s150
    %p159 = scmp.eq.s32.totalorder %s18, 1
    %p160 = por %p158, %p159
    %p161 = scmp.ne.s32.totalorder %s150, %s151
    %p162 = scmp.eq.s32.totalorder %s18, 0
    %p163 = por %p161, %p162
    %p164 = scmp.ne.s32.totalorder %s150, %s151
    %p165 = scmp.eq.s32.totalorder %s19, 1
    %p166 = por %p164, %p165
    %p168 = scmp.ne.s32.totalorder %s151, %s167
    %p169 = scmp.eq.s32.totalorder %s19, 0
    %p170 = por %p168, %p169
    %s171 = ssub.s32 %s20, %s32
    %s172 = ssub.s32 %s21, %s28
    %s173 = sor.u32 %s171, %s172
    %p174 = scmp.eq.s32.totalorder %s173, 0
    %s176 = sadd.s32 %s175, 1
    %s177 = scalar_select %p174, %s175, %s176
    %p180 = pneg %p174
    %p181 = scmp.eq.s32.totalorder %s13, 1
    %p182 = por %p180, %p181
    %p183 = scmp.ne.s32.totalorder %s175, %s178
    %p184 = scmp.eq.s32.totalorder %s13, 0
    %p185 = por %p183, %p184
    %p186 = scmp.ne.s32.totalorder %s175, %s178
    %p187 = scmp.eq.s32.totalorder %s18, 1
    %p188 = por %p186, %p187
    %p189 = scmp.ne.s32.totalorder %s178, %s179
    %p190 = scmp.eq.s32.totalorder %s18, 0
    %p191 = por %p189, %p190
    %p192 = scmp.ne.s32.totalorder %s178, %s179
    %p193 = scmp.eq.s32.totalorder %s19, 1
    %p194 = por %p192, %p193
    %p196 = scmp.ne.s32.totalorder %s179, %s195
    %p197 = scmp.eq.s32.totalorder %s19, 0
    %p198 = por %p196, %p197
    %p199 = scmp.le.s32.totalorder 1, %s13
    %p200 = scmp.lt.s32.totalorder %s13, 3
    %p201 = pnand %p199, %p200
    %p202 = pneg %p201
    // Predicated region
    $region9: #{basic_block_forward.2} parent=5 // pred_check
      _
    $region10: #{basic_block_forward.2} parent=5 // pred_check_branch
      %204 = sbr.rel (%p201) target = $region12
    $region11: #{basic_block_forward.2} parent=5 // pred_region
      %s205 = ssub.s32 %s13, 1
      // Predicated region
      $region13: #{basic_block_forward.2} parent=11 // pred_check
        %p206 = pneg %p72
      $region14: #{basic_block_forward.2} parent=11 // pred_check_branch
        %208 = sbr.rel (%p206) target = $region16
      $region15: #{basic_block_forward.2} parent=11 // pred_region
        _
      $region16: #{basic_block_forward.2} parent=11 // pred_fallthru
        _
      // Predicated region
      $region17: #{basic_block_forward.2} parent=11 // pred_check
        %p209 = pneg %p93
      $region18: #{basic_block_forward.2} parent=11 // pred_check_branch
        %211 = sbr.rel (%p209) target = $region20
      $region19: #{basic_block_forward.2} parent=11 // pred_region
        _
      $region20: #{basic_block_forward.2} parent=11 // pred_fallthru
        _
      // Predicated region
      $region21: #{basic_block_forward.2} parent=11 // pred_check
        %p212 = pneg %p114
      $region22: #{basic_block_forward.2} parent=11 // pred_check_branch
        %214 = sbr.rel (%p212) target = $region24
      $region23: #{basic_block_forward.2} parent=11 // pred_region
        _
      $region24: #{basic_block_forward.2} parent=11 // pred_fallthru
        _
      // Predicated region
      $region25: #{basic_block_forward.2} parent=11 // pred_check
        %p215 = pneg %p135
      $region26: #{basic_block_forward.2} parent=11 // pred_check_branch
        %217 = sbr.rel (%p215) target = $region28
      $region27: #{basic_block_forward.2} parent=11 // pred_region
        _
      $region28: #{basic_block_forward.2} parent=11 // pred_fallthru
        _
    $region12: #{basic_block_forward.2} parent=5 // pred_fallthru
      _
    %p218 = scmp.lt.s32.totalorder %s13, 2
    // Predicated region
    $region29: #{basic_block_forward.2} parent=5 // pred_check
      %p219 = pneg %p218
    $region30: #{basic_block_forward.2} parent=5 // pred_check_branch
      %221 = sbr.rel (%p219) target = $region32
    $region31: #{basic_block_forward.2} parent=5 // pred_region
      // Predicated region
      $region33: #{basic_block_forward.2} parent=31 // pred_check
        %p222 = pneg %p45
      $region34: #{basic_block_forward.2} parent=31 // pred_check_branch
        %224 = sbr.rel (%p222) target = $region36
      $region35: #{basic_block_forward.2} parent=31 // pred_region
        %p225 = scmp.lt.s32.totalorder %s20, 1
        %s226 = scalar_select %p225, %s20, 1
        %s227 = smul.addr %s226, 44
        %s228 = smul.addr %s227, 4
        %s229 = scalar_lea.vmem %s0, %s228
      $region36: #{basic_block_forward.2} parent=31 // pred_fallthru
        _
    $region32: #{basic_block_forward.2} parent=5 // pred_fallthru
      _
    %p230 = scmp.le.s32.totalorder 1, %s13
    %p231 = scmp.lt.s32.totalorder %s13, 3
    %p232 = pnand %p230, %p231
    %p233 = pneg %p232
    // Predicated region
    $region37: #{basic_block_forward.2} parent=5 // pred_check
      _
    $region38: #{basic_block_forward.2} parent=5 // pred_check_branch
      %235 = sbr.rel (%p232) target = $region40
    $region39: #{basic_block_forward.2} parent=5 // pred_region
      %s236 = ssub.s32 %s13, 1
      %p237 = scmp.lt.s32.totalorder %s22, 1
      %s238 = scalar_select %p237, %s22, 1
      %s239 = smul.addr %s238, 44
      %s240 = smul.addr %s239, 4
      %s241 = scalar_lea.vmem %s0, %s240
      %p242 = pneg %p51
      %p243 = pneg %p48
      %p244 = pneg %p72
      %p245 = pneg %p69
      %p246 = pneg %p93
      %p247 = pneg %p90
      %p248 = pneg %p114
      %p249 = pneg %p111
      %p250 = pneg %p135
      %p251 = pneg %p132
      %p252 = pneg %p163
      %p253 = pneg %p160
      %s254 = smul.u32 9, %s23
      %p255 = scmp.lt.s32.totalorder %s22, 1
      %s256 = scalar_select %p255, %s22, 1
      %p257 = scmp.lt.s32.totalorder %s254, 8
      %s258 = scalar_select %p257, %s254, 8
      %s259 = smul.addr %s256, 9
      %s260 = sadd.s32 %s258, %s259
      %s261 = smul.addr %s260, 8
      %s262 = scalar_lea.vmem %s5, %s261
      %p263 = pneg %p191
      %p264 = pneg %p188
      %s265 = smul.u32 9, %s23
      %p266 = scmp.lt.s32.totalorder %s22, 1
      %s267 = scalar_select %p266, %s22, 1
      %p268 = scmp.lt.s32.totalorder %s265, 8
      %s269 = scalar_select %p268, %s265, 8
      %s270 = smul.addr %s267, 9
      %s271 = sadd.s32 %s269, %s270
      %s272 = smul.addr %s271, 8
      %s273 = scalar_lea.vmem %s6, %s272
      %p274 = scmp.lt.s32.totalorder %s22, 1
      %s275 = scalar_select %p274, %s22, 1
      %s276 = smul.addr %s275, 44
      %s277 = smul.addr %s276, 4
      %s278 = scalar_lea.vmem %s0, %s277
      %s279 = smul.u32 9, %s23
      %p280 = scmp.lt.s32.totalorder %s22, 1
      %s281 = scalar_select %p280, %s22, 1
      %p282 = scmp.lt.s32.totalorder %s279, 8
      %s283 = scalar_select %p282, %s279, 8
      %s284 = smul.addr %s281, 9
      %s285 = sadd.s32 %s283, %s284
      %s286 = smul.addr %s285, 8
      %s287 = scalar_lea.vmem %s5, %s286
      %s288 = smul.u32 9, %s23
      %s289 = smul.u32 9, %s23
      %p290 = scmp.lt.s32.totalorder %s22, 1
      %s291 = scalar_select %p290, %s22, 1
      %p292 = scmp.lt.s32.totalorder %s289, 8
      %s293 = scalar_select %p292, %s289, 8
      %s294 = smul.addr %s291, 9
      %s295 = sadd.s32 %s293, %s294
      %s296 = smul.addr %s295, 8
      %s297 = scalar_lea.vmem %s6, %s296
      %s298 = smul.u32 9, %s23
      %v300 = vld [vmem:[%s278] sm:$0xf]
      %v301 = vld [vmem:[%s278 + $0x4] sm:$0xf]
      %v302 = vld [vmem:[%s278 + $0x8] sm:$0xf]
      %v303 = vld [vmem:[%s278 + $0xc] sm:$0xf]
      %v304 = vld [vmem:[%s278 + $0x10] sm:$0xf]
      %v305 = vld [vmem:[%s278 + $0x14] sm:$0xf]
      %v306 = vld [vmem:[%s278 + $0x18] sm:$0xf]
      %v307 = vld [vmem:[%s278 + $0x1c] sm:$0xf]
      %v308 = vld [vmem:[%s278 + $0x20] sm:$0xf]
      %v309 = vld [vmem:[%s1] sm:$0x3]
      %s310 = scalar_lea.vmem %s278, 44
      %v311 = vld [vmem:[%s310] sm:$0xf]
      %v312 = vld [vmem:[%s310 + $0x4] sm:$0xf]
      %v313 = vld [vmem:[%s310 + $0x8] sm:$0xf]
      %v314 = vld [vmem:[%s310 + $0xc] sm:$0xf]
      %v315 = vld [vmem:[%s310 + $0x10] sm:$0xf]
      %v316 = vld [vmem:[%s310 + $0x14] sm:$0xf]
      %v317 = vld [vmem:[%s310 + $0x18] sm:$0xf]
      %v318 = vld [vmem:[%s310 + $0x1c] sm:$0xf]
      %v319 = vld [vmem:[%s310 + $0x20] sm:$0xf]
      %s320 = scalar_lea.vmem %s1, 2
      %v321 = vld [vmem:[%s320] sm:$0x3]
      %v331 = vunpack.c.l.b16 %v311
      %v332 = vunpack.c.l.b16 %v312
      %v333 = vunpack.c.l.b16 %v313
      %v334 = vunpack.c.l.b16 %v314
      %v335 = vunpack.c.l.b16 %v315
      %v336 = vunpack.c.l.b16 %v316
      %v337 = vunpack.c.l.b16 %v317
      %v338 = vunpack.c.l.b16 %v318
      %v339 = vunpack.c.l.b16 %v319
      %v340 = vpack.c.b16 %v332, %v331
      %v341 = vpack.c.b16 %v334, %v333
      %v342 = vpack.c.b16 %v336, %v335
      %v343 = vpack.c.b16 %v338, %v337
      %v344 = vpack.c.b16 %v339, %v339
      %vm345 = vcmask 31744
      %v347 = vsel %vm345, %v340, 0
      %v350 = vsel %vm345, %v341, 0
      %v353 = vsel %vm345, %v342, 0
      %v356 = vsel %vm345, %v343, 0
      %v359 = vsel %vm345, %v344, 0
      %vm361 = vcmask 1041408
      %v363 = vsel %vm361, %v321, 0
      %365 = vmatprep.subr.bf16.mxu0 0
      %366 = vmatpush1.bf16.msra.mxu0 0
      %367 = vmatprep.subr.bf16.mxu0 0
      %368 = vmatpush1.bf16.msra.mxu0 0
      %369 = vmatprep.subr.bf16.mxu0 0
      %370 = vmatpush1.bf16.msra.mxu0 0
      %371 = vmatprep.subr.bf16.mxu0 0
      %372 = vmatpush1.bf16.msra.mxu0 0
      %373 = vmatprep.subr.bf16.mxu0 0
      %374 = vmatpush1.bf16.msra.mxu0 0
      %375 = vmatprep.subr.bf16.mxu0 0
      %376 = vmatpush1.bf16.msra.mxu0 0
      %377 = vmatprep.subr.bf16.mxu0 0
      %378 = vmatpush1.bf16.msra.mxu0 0
      %379 = vmatprep.subr.bf16.mxu0 0
      %380 = vmatpush1.bf16.msra.mxu0 %v363
      %381 = vmatprep.subr.bf16.mxu0 0
      %382 = vmatpush2.bf16.msra.mxu0 0
      %383 = vmatprep.subr.bf16.mxu0 0
      %384 = vmatpush2.bf16.msra.mxu0 0
      %385 = vmatprep.subr.bf16.mxu0 0
      %386 = vmatpush2.bf16.msra.mxu0 0
      %387 = vmatprep.subr.bf16.mxu0 0
      %388 = vmatpush2.bf16.msra.mxu0 0
      %389 = vmatprep.subr.bf16.mxu0 0
      %390 = vmatpush2.bf16.msra.mxu0 0
      %391 = vmatprep.subr.bf16.mxu0 0
      %392 = vmatpush2.bf16.msra.mxu0 0
      %393 = vmatprep.subr.bf16.mxu0 0
      %394 = vmatpush2.bf16.msra.mxu0 0
      %395 = vmatprep.subr.bf16.mxu0 0
      %396 = vmatpush2.bf16.msra.mxu0 0
      %397 = vmatprep.mubr.bf16.mxu0 0
      %398 = vmatmul.mubr.bf16.gmra.mxu0 %v347
      %v399 = vpop.f32.mrf.mxu0
      %v400 = vadd.f32 0.0, %v399
      %v401 = vpop.f32.mrf.mxu0
      %v402 = vpop.f32.mrf.mxu0
      %v403 = vadd.f32 0.0, %v402
      %v404 = vpop.f32.mrf.mxu0
      %405 = vmatprep.mubr.bf16.mxu0 0
      %406 = vmatmul.mubr.bf16.gmra.mxu0 %v350
      %v407 = vpop.f32.mrf.mxu0
      %v408 = vadd.f32 0.0, %v407
      %v409 = vpop.f32.mrf.mxu0
      %v410 = vpop.f32.mrf.mxu0
      %v411 = vadd.f32 0.0, %v410
      %v412 = vpop.f32.mrf.mxu0
      %413 = vmatprep.mubr.bf16.mxu0 0
      %414 = vmatmul.mubr.bf16.gmra.mxu0 %v353
      %v415 = vpop.f32.mrf.mxu0
      %v416 = vadd.f32 0.0, %v415
      %v417 = vpop.f32.mrf.mxu0
      %v418 = vpop.f32.mrf.mxu0
      %v419 = vadd.f32 0.0, %v418
      %v420 = vpop.f32.mrf.mxu0
      %421 = vmatprep.mubr.bf16.mxu0 0
      %422 = vmatmul.mubr.bf16.gmra.mxu0 %v356
      %v423 = vpop.f32.mrf.mxu0
      %v424 = vadd.f32 0.0, %v423
      %v425 = vpop.f32.mrf.mxu0
      %v426 = vpop.f32.mrf.mxu0
      %v427 = vadd.f32 0.0, %v426
      %v428 = vpop.f32.mrf.mxu0
      %429 = vmatprep.mubr.bf16.mxu0 0
      %430 = vmatmul.mubr.bf16.gmra.mxu0 %v359
      %v431 = vpop.f32.mrf.mxu0
      %v432 = vadd.f32 0.0, %v431
      %v433 = vpop.f32.mrf.mxu0
      %v434 = vpop.f32.mrf.mxu0
      %v435 = vpop.f32.mrf.mxu0
      %436 = vdwg.mxu0
      %v446 = vunpack.c.l.b16 %v300
      %v447 = vunpack.c.l.b16 %v301
      %v448 = vunpack.c.l.b16 %v302
      %v449 = vunpack.c.l.b16 %v303
      %v450 = vunpack.c.l.b16 %v304
      %v451 = vunpack.c.l.b16 %v305
      %v452 = vunpack.c.l.b16 %v306
      %v453 = vunpack.c.l.b16 %v307
      %v454 = vunpack.c.l.b16 %v308
      %v455 = vpack.c.b16 %v447, %v446
      %v456 = vpack.c.b16 %v449, %v448
      %v457 = vpack.c.b16 %v451, %v450
      %v458 = vpack.c.b16 %v453, %v452
      %v459 = vpack.c.b16 %v454, %v454
      %v461 = vsel %vm345, %v455, 0
      %v464 = vsel %vm345, %v456, 0
      %v467 = vsel %vm345, %v457, 0
      %v470 = vsel %vm345, %v458, 0
      %v473 = vsel %vm345, %v459, 0
      %v476 = vsel %vm361, %v309, 0
      %478 = vmatprep.subr.bf16.mxu0 0
      %479 = vmatpush1.bf16.msra.mxu0 0
      %480 = vmatprep.subr.bf16.mxu0 0
      %481 = vmatpush1.bf16.msra.mxu0 0
      %482 = vmatprep.subr.bf16.mxu0 0
      %483 = vmatpush1.bf16.msra.mxu0 0
      %484 = vmatprep.subr.bf16.mxu0 0
      %485 = vmatpush1.bf16.msra.mxu0 0
      %486 = vmatprep.subr.bf16.mxu0 0
      %487 = vmatpush1.bf16.msra.mxu0 0
      %488 = vmatprep.subr.bf16.mxu0 0
      %489 = vmatpush1.bf16.msra.mxu0 0
      %490 = vmatprep.subr.bf16.mxu0 0
      %491 = vmatpush1.bf16.msra.mxu0 0
      %492 = vmatprep.subr.bf16.mxu0 0
      %493 = vmatpush1.bf16.msra.mxu0 %v476
      %494 = vmatprep.subr.bf16.mxu0 0
      %495 = vmatpush2.bf16.msra.mxu0 0
      %496 = vmatprep.subr.bf16.mxu0 0
      %497 = vmatpush2.bf16.msra.mxu0 0
      %498 = vmatprep.subr.bf16.mxu0 0
      %499 = vmatpush2.bf16.msra.mxu0 0
      %500 = vmatprep.subr.bf16.mxu0 0
      %501 = vmatpush2.bf16.msra.mxu0 0
      %502 = vmatprep.subr.bf16.mxu0 0
      %503 = vmatpush2.bf16.msra.mxu0 0
      %504 = vmatprep.subr.bf16.mxu0 0
      %505 = vmatpush2.bf16.msra.mxu0 0
      %506 = vmatprep.subr.bf16.mxu0 0
      %507 = vmatpush2.bf16.msra.mxu0 0
      %508 = vmatprep.subr.bf16.mxu0 0
      %509 = vmatpush2.bf16.msra.mxu0 0
      %510 = vmatprep.mubr.bf16.mxu0 0
      %511 = vmatmul.mubr.bf16.gmra.mxu0 %v461
      %v512 = vpop.f32.mrf.mxu0
      %v513 = vadd.f32 %v400, %v512
      %v514 = vpop.f32.mrf.mxu0
      %v515 = vpop.f32.mrf.mxu0
      %v516 = vadd.f32 %v403, %v515
      %v517 = vpop.f32.mrf.mxu0
      %518 = vmatprep.mubr.bf16.mxu0 0
      %519 = vmatmul.mubr.bf16.gmra.mxu0 %v464
      %v520 = vpop.f32.mrf.mxu0
      %v521 = vadd.f32 %v408, %v520
      %v522 = vpop.f32.mrf.mxu0
      %v523 = vpop.f32.mrf.mxu0
      %v524 = vadd.f32 %v411, %v523
      %v525 = vpop.f32.mrf.mxu0
      %526 = vmatprep.mubr.bf16.mxu0 0
      %527 = vmatmul.mubr.bf16.gmra.mxu0 %v467
      %v528 = vpop.f32.mrf.mxu0
      %v529 = vadd.f32 %v416, %v528
      %v530 = vpop.f32.mrf.mxu0
      %v531 = vpop.f32.mrf.mxu0
      %v532 = vadd.f32 %v419, %v531
      %v533 = vpop.f32.mrf.mxu0
      %534 = vmatprep.mubr.bf16.mxu0 0
      %535 = vmatmul.mubr.bf16.gmra.mxu0 %v470
      %v536 = vpop.f32.mrf.mxu0
      %v537 = vadd.f32 %v424, %v536
      %v538 = vpop.f32.mrf.mxu0
      %v539 = vpop.f32.mrf.mxu0
      %v540 = vadd.f32 %v427, %v539
      %v541 = vpop.f32.mrf.mxu0
      %542 = vmatprep.mubr.bf16.mxu0 0
      %543 = vmatmul.mubr.bf16.gmra.mxu0 %v473
      %v544 = vpop.f32.mrf.mxu0
      %v545 = vadd.f32 %v432, %v544
      %v546 = vpop.f32.mrf.mxu0
      %v547 = vpop.f32.mrf.mxu0
      %v548 = vpop.f32.mrf.mxu0
      %549 = vdwg.mxu0
      %v550 = vld [vmem:[%s278] sm:$0xf]
      %v551 = vld [vmem:[%s278 + $0x4] sm:$0xf]
      %v552 = vld [vmem:[%s278 + $0x8] sm:$0xf]
      %v553 = vld [vmem:[%s278 + $0xc] sm:$0xf]
      %v554 = vld [vmem:[%s278 + $0x10] sm:$0xf]
      %v555 = vld [vmem:[%s278 + $0x14] sm:$0xf]
      %v556 = vld [vmem:[%s278 + $0x18] sm:$0xf]
      %v557 = vld [vmem:[%s278 + $0x1c] sm:$0xf]
      %v558 = vld [vmem:[%s278 + $0x20] sm:$0xf]
      %v559 = vld [vmem:[%s278 + $0x24] sm:$0x1]
      %s560 = scalar_lea.vmem %s1, 4
      %v561 = vld [vmem:[%s560] sm:$0x3]
      %v572 = vunpack.c.l.b16 %v550
      %v573 = vunpack.c.l.b16 %v551
      %v574 = vunpack.c.l.b16 %v552
      %v575 = vunpack.c.l.b16 %v553
      %v576 = vunpack.c.l.b16 %v554
      %v577 = vunpack.c.l.b16 %v555
      %v578 = vunpack.c.l.b16 %v556
      %v579 = vunpack.c.l.b16 %v557
      %v580 = vunpack.c.l.b16 %v558
      %v581 = vunpack.c.l.b16 %v559
      %v582 = vpack.c.b16 %v573, %v572
      %v583 = vpack.c.b16 %v575, %v574
      %v584 = vpack.c.b16 %v577, %v576
      %v585 = vpack.c.b16 %v579, %v578
      %v586 = vpack.c.b16 %v581, %v580
      %vm587 = vsmask.f32 7424
      %v589 = vshrl.u32 %v582, 16
      %v591 = vshll.u32 %v582, 16
      %v593 = vrot.slane %v591, 1
      %v594 = vor.u32 %v589, %v593
      %v596 = vshll.u32 %v583, 16
      %v598 = vrot.slane %v596, 1
      %v599 = vsel %vm587, %v594, %v598
      %v600 = vshrl.u32 %v583, 16
      %v602 = vor.u32 %v600, %v598
      %v604 = vshll.u32 %v584, 16
      %v606 = vrot.slane %v604, 1
      %v607 = vsel %vm587, %v602, %v606
      %v608 = vshrl.u32 %v584, 16
      %v610 = vor.u32 %v608, %v606
      %v612 = vshll.u32 %v585, 16
      %v614 = vrot.slane %v612, 1
      %v615 = vsel %vm587, %v610, %v614
      %v616 = vshrl.u32 %v585, 16
      %v618 = vor.u32 %v616, %v614
      %v620 = vshll.u32 %v586, 16
      %v622 = vrot.slane %v620, 1
      %v623 = vsel %vm587, %v618, %v622
      %v624 = vshrl.u32 %v586, 16
      %v626 = vor.u32 %v624, %v622
      %v628 = vsel %vm345, %v599, 0
      %v631 = vsel %vm345, %v607, 0
      %v634 = vsel %vm345, %v615, 0
      %v637 = vsel %vm345, %v623, 0
      %v640 = vsel %vm345, %v626, 0
      %v643 = vsel %vm361, %v561, 0
      %645 = vmatprep.subr.bf16.mxu0 0
      %646 = vmatpush1.bf16.msra.mxu0 0
      %647 = vmatprep.subr.bf16.mxu0 0
      %648 = vmatpush1.bf16.msra.mxu0 0
      %649 = vmatprep.subr.bf16.mxu0 0
      %650 = vmatpush1.bf16.msra.mxu0 0
      %651 = vmatprep.subr.bf16.mxu0 0
      %652 = vmatpush1.bf16.msra.mxu0 0
      %653 = vmatprep.subr.bf16.mxu0 0
      %654 = vmatpush1.bf16.msra.mxu0 0
      %655 = vmatprep.subr.bf16.mxu0 0
      %656 = vmatpush1.bf16.msra.mxu0 0
      %657 = vmatprep.subr.bf16.mxu0 0
      %658 = vmatpush1.bf16.msra.mxu0 0
      %659 = vmatprep.subr.bf16.mxu0 0
      %660 = vmatpush1.bf16.msra.mxu0 %v643
      %661 = vmatprep.subr.bf16.mxu0 0
      %662 = vmatpush2.bf16.msra.mxu0 0
      %663 = vmatprep.subr.bf16.mxu0 0
      %664 = vmatpush2.bf16.msra.mxu0 0
      %665 = vmatprep.subr.bf16.mxu0 0
      %666 = vmatpush2.bf16.msra.mxu0 0
      %667 = vmatprep.subr.bf16.mxu0 0
      %668 = vmatpush2.bf16.msra.mxu0 0
      %669 = vmatprep.subr.bf16.mxu0 0
      %670 = vmatpush2.bf16.msra.mxu0 0
      %671 = vmatprep.subr.bf16.mxu0 0
      %672 = vmatpush2.bf16.msra.mxu0 0
      %673 = vmatprep.subr.bf16.mxu0 0
      %674 = vmatpush2.bf16.msra.mxu0 0
      %675 = vmatprep.subr.bf16.mxu0 0
      %676 = vmatpush2.bf16.msra.mxu0 0
      %677 = vmatprep.mubr.bf16.mxu0 0
      %678 = vmatmul.mubr.bf16.gmra.mxu0 %v628
      %v679 = vpop.f32.mrf.mxu0
      %v680 = vadd.f32 0.0, %v679
      %v681 = vpop.f32.mrf.mxu0
      %v682 = vpop.f32.mrf.mxu0
      %v683 = vadd.f32 0.0, %v682
      %v684 = vpop.f32.mrf.mxu0
      %685 = vmatprep.mubr.bf16.mxu0 0
      %686 = vmatmul.mubr.bf16.gmra.mxu0 %v631
      %v687 = vpop.f32.mrf.mxu0
      %v688 = vadd.f32 0.0, %v687
      %v689 = vpop.f32.mrf.mxu0
      %v690 = vpop.f32.mrf.mxu0
      %v691 = vadd.f32 0.0, %v690
      %v692 = vpop.f32.mrf.mxu0
      %693 = vmatprep.mubr.bf16.mxu0 0
      %694 = vmatmul.mubr.bf16.gmra.mxu0 %v634
      %v695 = vpop.f32.mrf.mxu0
      %v696 = vadd.f32 0.0, %v695
      %v697 = vpop.f32.mrf.mxu0
      %v698 = vpop.f32.mrf.mxu0
      %v699 = vadd.f32 0.0, %v698
      %v700 = vpop.f32.mrf.mxu0
      %701 = vmatprep.mubr.bf16.mxu0 0
      %702 = vmatmul.mubr.bf16.gmra.mxu0 %v637
      %v703 = vpop.f32.mrf.mxu0
      %v704 = vadd.f32 0.0, %v703
      %v705 = vpop.f32.mrf.mxu0
      %v706 = vpop.f32.mrf.mxu0
      %v707 = vadd.f32 0.0, %v706
      %v708 = vpop.f32.mrf.mxu0
      %709 = vmatprep.mubr.bf16.mxu0 0
      %710 = vmatmul.mubr.bf16.gmra.mxu0 %v640
      %v711 = vpop.f32.mrf.mxu0
      %v712 = vadd.f32 0.0, %v711
      %v713 = vpop.f32.mrf.mxu0
      %v714 = vpop.f32.mrf.mxu0
      %v715 = vpop.f32.mrf.mxu0
      %716 = vdwg.mxu0
      %v717 = vadd.f32 %v513, %v680
      %v718 = vadd.f32 %v516, %v683
      %v719 = vadd.f32 %v521, %v688
      %v720 = vadd.f32 %v524, %v691
      %v721 = vadd.f32 %v529, %v696
      %v722 = vadd.f32 %v532, %v699
      %v723 = vadd.f32 %v537, %v704
      %v724 = vadd.f32 %v540, %v707
      %v725 = vadd.f32 %v545, %v712
      %s726 = scalar_lea.vmem %s278, 88
      %v727 = vld [vmem:[%s726] sm:$0xf]
      %v728 = vld [vmem:[%s726 + $0x4] sm:$0xf]
      %v729 = vld [vmem:[%s726 + $0x8] sm:$0xf]
      %v730 = vld [vmem:[%s726 + $0xc] sm:$0xf]
      %v731 = vld [vmem:[%s726 + $0x10] sm:$0xf]
      %v732 = vld [vmem:[%s726 + $0x14] sm:$0xf]
      %v733 = vld [vmem:[%s726 + $0x18] sm:$0xf]
      %v734 = vld [vmem:[%s726 + $0x1c] sm:$0xf]
      %v735 = vld [vmem:[%s726 + $0x20] sm:$0xf]
      %s736 = scalar_lea.vmem %s1, 6
      %v737 = vld [vmem:[%s736] sm:$0x3]
      %v747 = vunpack.c.l.b16 %v727
      %v748 = vunpack.c.l.b16 %v728
      %v749 = vunpack.c.l.b16 %v729
      %v750 = vunpack.c.l.b16 %v730
      %v751 = vunpack.c.l.b16 %v731
      %v752 = vunpack.c.l.b16 %v732
      %v753 = vunpack.c.l.b16 %v733
      %v754 = vunpack.c.l.b16 %v734
      %v755 = vunpack.c.l.b16 %v735
      %v756 = vpack.c.b16 %v748, %v747
      %v757 = vpack.c.b16 %v750, %v749
      %v758 = vpack.c.b16 %v752, %v751
      %v759 = vpack.c.b16 %v754, %v753
      %v760 = vpack.c.b16 %v755, %v755
      %v762 = vsel %vm345, %v756, 0
      %v765 = vsel %vm345, %v757, 0
      %v768 = vsel %vm345, %v758, 0
      %v771 = vsel %vm345, %v759, 0
      %v774 = vsel %vm345, %v760, 0
      %v777 = vsel %vm361, %v737, 0
      %779 = vmatprep.subr.bf16.mxu0 0
      %780 = vmatpush1.bf16.msra.mxu0 0
      %781 = vmatprep.subr.bf16.mxu0 0
      %782 = vmatpush1.bf16.msra.mxu0 0
      %783 = vmatprep.subr.bf16.mxu0 0
      %784 = vmatpush1.bf16.msra.mxu0 0
      %785 = vmatprep.subr.bf16.mxu0 0
      %786 = vmatpush1.bf16.msra.mxu0 0
      %787 = vmatprep.subr.bf16.mxu0 0
      %788 = vmatpush1.bf16.msra.mxu0 0
      %789 = vmatprep.subr.bf16.mxu0 0
      %790 = vmatpush1.bf16.msra.mxu0 0
      %791 = vmatprep.subr.bf16.mxu0 0
      %792 = vmatpush1.bf16.msra.mxu0 0
      %793 = vmatprep.subr.bf16.mxu0 0
      %794 = vmatpush1.bf16.msra.mxu0 %v777
      %795 = vmatprep.subr.bf16.mxu0 0
      %796 = vmatpush2.bf16.msra.mxu0 0
      %797 = vmatprep.subr.bf16.mxu0 0
      %798 = vmatpush2.bf16.msra.mxu0 0
      %799 = vmatprep.subr.bf16.mxu0 0
      %800 = vmatpush2.bf16.msra.mxu0 0
      %801 = vmatprep.subr.bf16.mxu0 0
      %802 = vmatpush2.bf16.msra.mxu0 0
      %803 = vmatprep.subr.bf16.mxu0 0
      %804 = vmatpush2.bf16.msra.mxu0 0
      %805 = vmatprep.subr.bf16.mxu0 0
      %806 = vmatpush2.bf16.msra.mxu0 0
      %807 = vmatprep.subr.bf16.mxu0 0
      %808 = vmatpush2.bf16.msra.mxu0 0
      %809 = vmatprep.subr.bf16.mxu0 0
      %810 = vmatpush2.bf16.msra.mxu0 0
      %811 = vmatprep.mubr.bf16.mxu0 0
      %812 = vmatmul.mubr.bf16.gmra.mxu0 %v762
      %v813 = vpop.f32.mrf.mxu0
      %v814 = vadd.f32 0.0, %v813
      %v815 = vpop.f32.mrf.mxu0
      %v816 = vpop.f32.mrf.mxu0
      %v817 = vadd.f32 0.0, %v816
      %v818 = vpop.f32.mrf.mxu0
      %819 = vmatprep.mubr.bf16.mxu0 0
      %820 = vmatmul.mubr.bf16.gmra.mxu0 %v765
      %v821 = vpop.f32.mrf.mxu0
      %v822 = vadd.f32 0.0, %v821
      %v823 = vpop.f32.mrf.mxu0
      %v824 = vpop.f32.mrf.mxu0
      %v825 = vadd.f32 0.0, %v824
      %v826 = vpop.f32.mrf.mxu0
      %827 = vmatprep.mubr.bf16.mxu0 0
      %828 = vmatmul.mubr.bf16.gmra.mxu0 %v768
      %v829 = vpop.f32.mrf.mxu0
      %v830 = vadd.f32 0.0, %v829
      %v831 = vpop.f32.mrf.mxu0
      %v832 = vpop.f32.mrf.mxu0
      %v833 = vadd.f32 0.0, %v832
      %v834 = vpop.f32.mrf.mxu0
      %835 = vmatprep.mubr.bf16.mxu0 0
      %836 = vmatmul.mubr.bf16.gmra.mxu0 %v771
      %v837 = vpop.f32.mrf.mxu0
      %v838 = vadd.f32 0.0, %v837
      %v839 = vpop.f32.mrf.mxu0
      %v840 = vpop.f32.mrf.mxu0
      %v841 = vadd.f32 0.0, %v840
      %v842 = vpop.f32.mrf.mxu0
      %843 = vmatprep.mubr.bf16.mxu0 0
      %844 = vmatmul.mubr.bf16.gmra.mxu0 %v774
      %v845 = vpop.f32.mrf.mxu0
      %v846 = vadd.f32 0.0, %v845
      %v847 = vpop.f32.mrf.mxu0
      %v848 = vpop.f32.mrf.mxu0
      %v849 = vpop.f32.mrf.mxu0
      %850 = vdwg.mxu0
      %v851 = vadd.f32 %v717, %v814
      %v852 = vadd.f32 %v718, %v817
      %v853 = vadd.f32 %v719, %v822
      %v854 = vadd.f32 %v720, %v825
      %v855 = vadd.f32 %v721, %v830
      %v856 = vadd.f32 %v722, %v833
      %v857 = vadd.f32 %v723, %v838
      %v858 = vadd.f32 %v724, %v841
      %v859 = vadd.f32 %v725, %v846
      %s860 = scalar_lea.vmem %s278, 132
      %v861 = vld [vmem:[%s860] sm:$0xf]
      %v862 = vld [vmem:[%s860 + $0x4] sm:$0xf]
      %v863 = vld [vmem:[%s860 + $0x8] sm:$0xf]
      %v864 = vld [vmem:[%s860 + $0xc] sm:$0xf]
      %v865 = vld [vmem:[%s860 + $0x10] sm:$0xf]
      %v866 = vld [vmem:[%s860 + $0x14] sm:$0xf]
      %v867 = vld [vmem:[%s860 + $0x18] sm:$0xf]
      %v868 = vld [vmem:[%s860 + $0x1c] sm:$0xf]
      %v869 = vld [vmem:[%s860 + $0x20] sm:$0xf]
      %s870 = scalar_lea.vmem %s1, 8
      %v871 = vld [vmem:[%s870] sm:$0x3]
      %v881 = vunpack.c.l.b16 %v861
      %v882 = vunpack.c.l.b16 %v862
      %v883 = vunpack.c.l.b16 %v863
      %v884 = vunpack.c.l.b16 %v864
      %v885 = vunpack.c.l.b16 %v865
      %v886 = vunpack.c.l.b16 %v866
      %v887 = vunpack.c.l.b16 %v867
      %v888 = vunpack.c.l.b16 %v868
      %v889 = vunpack.c.l.b16 %v869
      %v890 = vpack.c.b16 %v882, %v881
      %v891 = vpack.c.b16 %v884, %v883
      %v892 = vpack.c.b16 %v886, %v885
      %v893 = vpack.c.b16 %v888, %v887
      %v894 = vpack.c.b16 %v889, %v889
      %v896 = vsel %vm345, %v890, 0
      %v899 = vsel %vm345, %v891, 0
      %v902 = vsel %vm345, %v892, 0
      %v905 = vsel %vm345, %v893, 0
      %v908 = vsel %vm345, %v894, 0
      %v911 = vsel %vm361, %v871, 0
      %913 = vmatprep.subr.bf16.mxu0 0
      %914 = vmatpush1.bf16.msra.mxu0 0
      %915 = vmatprep.subr.bf16.mxu0 0
      %916 = vmatpush1.bf16.msra.mxu0 0
      %917 = vmatprep.subr.bf16.mxu0 0
      %918 = vmatpush1.bf16.msra.mxu0 0
      %919 = vmatprep.subr.bf16.mxu0 0
      %920 = vmatpush1.bf16.msra.mxu0 0
      %921 = vmatprep.subr.bf16.mxu0 0
      %922 = vmatpush1.bf16.msra.mxu0 0
      %923 = vmatprep.subr.bf16.mxu0 0
      %924 = vmatpush1.bf16.msra.mxu0 0
      %925 = vmatprep.subr.bf16.mxu0 0
      %926 = vmatpush1.bf16.msra.mxu0 0
      %927 = vmatprep.subr.bf16.mxu0 0
      %928 = vmatpush1.bf16.msra.mxu0 %v911
      %929 = vmatprep.subr.bf16.mxu0 0
      %930 = vmatpush2.bf16.msra.mxu0 0
      %931 = vmatprep.subr.bf16.mxu0 0
      %932 = vmatpush2.bf16.msra.mxu0 0
      %933 = vmatprep.subr.bf16.mxu0 0
      %934 = vmatpush2.bf16.msra.mxu0 0
      %935 = vmatprep.subr.bf16.mxu0 0
      %936 = vmatpush2.bf16.msra.mxu0 0
      %937 = vmatprep.subr.bf16.mxu0 0
      %938 = vmatpush2.bf16.msra.mxu0 0
      %939 = vmatprep.subr.bf16.mxu0 0
      %940 = vmatpush2.bf16.msra.mxu0 0
      %941 = vmatprep.subr.bf16.mxu0 0
      %942 = vmatpush2.bf16.msra.mxu0 0
      %943 = vmatprep.subr.bf16.mxu0 0
      %944 = vmatpush2.bf16.msra.mxu0 0
      %945 = vmatprep.mubr.bf16.mxu0 0
      %946 = vmatmul.mubr.bf16.gmra.mxu0 %v896
      %v947 = vpop.f32.mrf.mxu0
      %v948 = vadd.f32 0.0, %v947
      %v949 = vpop.f32.mrf.mxu0
      %v950 = vpop.f32.mrf.mxu0
      %v951 = vadd.f32 0.0, %v950
      %v952 = vpop.f32.mrf.mxu0
      %953 = vmatprep.mubr.bf16.mxu0 0
      %954 = vmatmul.mubr.bf16.gmra.mxu0 %v899
      %v955 = vpop.f32.mrf.mxu0
      %v956 = vadd.f32 0.0, %v955
      %v957 = vpop.f32.mrf.mxu0
      %v958 = vpop.f32.mrf.mxu0
      %v959 = vadd.f32 0.0, %v958
      %v960 = vpop.f32.mrf.mxu0
      %961 = vmatprep.mubr.bf16.mxu0 0
      %962 = vmatmul.mubr.bf16.gmra.mxu0 %v902
      %v963 = vpop.f32.mrf.mxu0
      %v964 = vadd.f32 0.0, %v963
      %v965 = vpop.f32.mrf.mxu0
      %v966 = vpop.f32.mrf.mxu0
      %v967 = vadd.f32 0.0, %v966
      %v968 = vpop.f32.mrf.mxu0
      %969 = vmatprep.mubr.bf16.mxu0 0
      %970 = vmatmul.mubr.bf16.gmra.mxu0 %v905
      %v971 = vpop.f32.mrf.mxu0
      %v972 = vadd.f32 0.0, %v971
      %v973 = vpop.f32.mrf.mxu0
      %v974 = vpop.f32.mrf.mxu0
      %v975 = vadd.f32 0.0, %v974
      %v976 = vpop.f32.mrf.mxu0
      %977 = vmatprep.mubr.bf16.mxu0 0
      %978 = vmatmul.mubr.bf16.gmra.mxu0 %v908
      %v979 = vpop.f32.mrf.mxu0
      %v980 = vadd.f32 0.0, %v979
      %v981 = vpop.f32.mrf.mxu0
      %v982 = vpop.f32.mrf.mxu0
      %v983 = vpop.f32.mrf.mxu0
      %984 = vdwg.mxu0
      %v985 = vadd.f32 %v851, %v948
      %v986 = vadd.f32 %v852, %v951
      %v987 = vadd.f32 %v853, %v956
      %v988 = vadd.f32 %v854, %v959
      %v989 = vadd.f32 %v855, %v964
      %v990 = vadd.f32 %v856, %v967
      %v991 = vadd.f32 %v857, %v972
      %v992 = vadd.f32 %v858, %v975
      %v993 = vadd.f32 %v859, %v980
      %v994 = vld [vmem:[%s726] sm:$0xf]
      %v995 = vld [vmem:[%s726 + $0x4] sm:$0xf]
      %v996 = vld [vmem:[%s726 + $0x8] sm:$0xf]
      %v997 = vld [vmem:[%s726 + $0xc] sm:$0xf]
      %v998 = vld [vmem:[%s726 + $0x10] sm:$0xf]
      %v999 = vld [vmem:[%s726 + $0x14] sm:$0xf]
      %v1000 = vld [vmem:[%s726 + $0x18] sm:$0xf]
      %v1001 = vld [vmem:[%s726 + $0x1c] sm:$0xf]
      %v1002 = vld [vmem:[%s726 + $0x20] sm:$0xf]
      %v1003 = vld [vmem:[%s726 + $0x24] sm:$0x1]
      %s1004 = scalar_lea.vmem %s1, 10
      %v1005 = vld [vmem:[%s1004] sm:$0x3]
      %v1016 = vunpack.c.l.b16 %v994
      %v1017 = vunpack.c.l.b16 %v995
      %v1018 = vunpack.c.l.b16 %v996
      %v1019 = vunpack.c.l.b16 %v997
      %v1020 = vunpack.c.l.b16 %v998
      %v1021 = vunpack.c.l.b16 %v999
      %v1022 = vunpack.c.l.b16 %v1000
      %v1023 = vunpack.c.l.b16 %v1001
      %v1024 = vunpack.c.l.b16 %v1002
      %v1025 = vunpack.c.l.b16 %v1003
      %v1026 = vpack.c.b16 %v1017, %v1016
      %v1027 = vpack.c.b16 %v1019, %v1018
      %v1028 = vpack.c.b16 %v1021, %v1020
      %v1029 = vpack.c.b16 %v1023, %v1022
      %v1030 = vpack.c.b16 %v1025, %v1024
      %v1032 = vshrl.u32 %v1026, 16
      %v1034 = vshll.u32 %v1026, 16
      %v1036 = vrot.slane %v1034, 1
      %v1037 = vor.u32 %v1032, %v1036
      %v1039 = vshll.u32 %v1027, 16
      %v1041 = vrot.slane %v1039, 1
      %v1042 = vsel %vm587, %v1037, %v1041
      %v1043 = vshrl.u32 %v1027, 16
      %v1045 = vor.u32 %v1043, %v1041
      %v1047 = vshll.u32 %v1028, 16
      %v1049 = vrot.slane %v1047, 1
      %v1050 = vsel %vm587, %v1045, %v1049
      %v1051 = vshrl.u32 %v1028, 16
      %v1053 = vor.u32 %v1051, %v1049
      %v1055 = vshll.u32 %v1029, 16
      %v1057 = vrot.slane %v1055, 1
      %v1058 = vsel %vm587, %v1053, %v1057
      %v1059 = vshrl.u32 %v1029, 16
      %v1061 = vor.u32 %v1059, %v1057
      %v1063 = vshll.u32 %v1030, 16
      %v1065 = vrot.slane %v1063, 1
      %v1066 = vsel %vm587, %v1061, %v1065
      %v1067 = vshrl.u32 %v1030, 16
      %v1069 = vor.u32 %v1067, %v1065
      %v1071 = vsel %vm345, %v1042, 0
      %v1074 = vsel %vm345, %v1050, 0
      %v1077 = vsel %vm345, %v1058, 0
      %v1080 = vsel %vm345, %v1066, 0
      %v1083 = vsel %vm345, %v1069, 0
      %v1086 = vsel %vm361, %v1005, 0
      %1088 = vmatprep.subr.bf16.mxu0 0
      %1089 = vmatpush1.bf16.msra.mxu0 0
      %1090 = vmatprep.subr.bf16.mxu0 0
      %1091 = vmatpush1.bf16.msra.mxu0 0
      %1092 = vmatprep.subr.bf16.mxu0 0
      %1093 = vmatpush1.bf16.msra.mxu0 0
      %1094 = vmatprep.subr.bf16.mxu0 0
      %1095 = vmatpush1.bf16.msra.mxu0 0
      %1096 = vmatprep.subr.bf16.mxu0 0
      %1097 = vmatpush1.bf16.msra.mxu0 0
      %1098 = vmatprep.subr.bf16.mxu0 0
      %1099 = vmatpush1.bf16.msra.mxu0 0
      %1100 = vmatprep.subr.bf16.mxu0 0
      %1101 = vmatpush1.bf16.msra.mxu0 0
      %1102 = vmatprep.subr.bf16.mxu0 0
      %1103 = vmatpush1.bf16.msra.mxu0 %v1086
      %1104 = vmatprep.subr.bf16.mxu0 0
      %1105 = vmatpush2.bf16.msra.mxu0 0
      %1106 = vmatprep.subr.bf16.mxu0 0
      %1107 = vmatpush2.bf16.msra.mxu0 0
      %1108 = vmatprep.subr.bf16.mxu0 0
      %1109 = vmatpush2.bf16.msra.mxu0 0
      %1110 = vmatprep.subr.bf16.mxu0 0
      %1111 = vmatpush2.bf16.msra.mxu0 0
      %1112 = vmatprep.subr.bf16.mxu0 0
      %1113 = vmatpush2.bf16.msra.mxu0 0
      %1114 = vmatprep.subr.bf16.mxu0 0
      %1115 = vmatpush2.bf16.msra.mxu0 0
      %1116 = vmatprep.subr.bf16.mxu0 0
      %1117 = vmatpush2.bf16.msra.mxu0 0
      %1118 = vmatprep.subr.bf16.mxu0 0
      %1119 = vmatpush2.bf16.msra.mxu0 0
      %1120 = vmatprep.mubr.bf16.mxu0 0
      %1121 = vmatmul.mubr.bf16.gmra.mxu0 %v1071
      %v1122 = vpop.f32.mrf.mxu0
      %v1123 = vadd.f32 0.0, %v1122
      %v1124 = vpop.f32.mrf.mxu0
      %v1125 = vpop.f32.mrf.mxu0
      %v1126 = vadd.f32 0.0, %v1125
      %v1127 = vpop.f32.mrf.mxu0
      %1128 = vmatprep.mubr.bf16.mxu0 0
      %1129 = vmatmul.mubr.bf16.gmra.mxu0 %v1074
      %v1130 = vpop.f32.mrf.mxu0
      %v1131 = vadd.f32 0.0, %v1130
      %v1132 = vpop.f32.mrf.mxu0
      %v1133 = vpop.f32.mrf.mxu0
      %v1134 = vadd.f32 0.0, %v1133
      %v1135 = vpop.f32.mrf.mxu0
      %1136 = vmatprep.mubr.bf16.mxu0 0
      %1137 = vmatmul.mubr.bf16.gmra.mxu0 %v1077
      %v1138 = vpop.f32.mrf.mxu0
      %v1139 = vadd.f32 0.0, %v1138
      %v1140 = vpop.f32.mrf.mxu0
      %v1141 = vpop.f32.mrf.mxu0
      %v1142 = vadd.f32 0.0, %v1141
      %v1143 = vpop.f32.mrf.mxu0
      %1144 = vmatprep.mubr.bf16.mxu0 0
      %1145 = vmatmul.mubr.bf16.gmra.mxu0 %v1080
      %v1146 = vpop.f32.mrf.mxu0
      %v1147 = vadd.f32 0.0, %v1146
      %v1148 = vpop.f32.mrf.mxu0
      %v1149 = vpop.f32.mrf.mxu0
      %v1150 = vadd.f32 0.0, %v1149
      %v1151 = vpop.f32.mrf.mxu0
      %1152 = vmatprep.mubr.bf16.mxu0 0
      %1153 = vmatmul.mubr.bf16.gmra.mxu0 %v1083
      %v1154 = vpop.f32.mrf.mxu0
      %v1155 = vadd.f32 0.0, %v1154
      %v1156 = vpop.f32.mrf.mxu0
      %v1157 = vpop.f32.mrf.mxu0
      %v1158 = vpop.f32.mrf.mxu0
      %1159 = vdwg.mxu0
      %v1160 = vadd.f32 %v985, %v1123
      %v1161 = vadd.f32 %v986, %v1126
      %v1162 = vadd.f32 %v987, %v1131
      %v1163 = vadd.f32 %v988, %v1134
      %v1164 = vadd.f32 %v989, %v1139
      %v1165 = vadd.f32 %v990, %v1142
      %v1166 = vadd.f32 %v991, %v1147
      %v1167 = vadd.f32 %v992, %v1150
      %v1168 = vadd.f32 %v993, %v1155
      %v1169 = vld [vmem:[%s278 + $0x4] sm:$0xf]
      %v1170 = vld [vmem:[%s278 + $0x8] sm:$0xf]
      %v1171 = vld [vmem:[%s278 + $0xc] sm:$0xf]
      %v1172 = vld [vmem:[%s278 + $0x10] sm:$0xf]
      %v1173 = vld [vmem:[%s278 + $0x14] sm:$0xf]
      %v1174 = vld [vmem:[%s278 + $0x18] sm:$0xf]
      %v1175 = vld [vmem:[%s278 + $0x1c] sm:$0xf]
      %v1176 = vld [vmem:[%s278 + $0x20] sm:$0xf]
      %v1177 = vld [vmem:[%s278 + $0x24] sm:$0xf]
      %v1178 = vld [vmem:[%s278 + $0x28] sm:$0x1]
      %s1179 = scalar_lea.vmem %s1, 12
      %v1180 = vld [vmem:[%s1179] sm:$0x3]
      %v1191 = vunpack.c.l.b16 %v1169
      %v1192 = vunpack.c.l.b16 %v1170
      %v1193 = vunpack.c.l.b16 %v1171
      %v1194 = vunpack.c.l.b16 %v1172
      %v1195 = vunpack.c.l.b16 %v1173
      %v1196 = vunpack.c.l.b16 %v1174
      %v1197 = vunpack.c.l.b16 %v1175
      %v1198 = vunpack.c.l.b16 %v1176
      %v1199 = vunpack.c.l.b16 %v1177
      %v1200 = vunpack.c.l.b16 %v1178
      %v1201 = vpack.c.b16 %v1192, %v1191
      %v1202 = vpack.c.b16 %v1194, %v1193
      %v1203 = vpack.c.b16 %v1196, %v1195
      %v1204 = vpack.c.b16 %v1198, %v1197
      %v1205 = vpack.c.b16 %v1200, %v1199
      %v1207 = vshrl.u32 %v1201, 16
      %v1209 = vshll.u32 %v1201, 16
      %v1211 = vrot.slane %v1209, 1
      %v1212 = vor.u32 %v1207, %v1211
      %v1214 = vshll.u32 %v1202, 16
      %v1216 = vrot.slane %v1214, 1
      %v1217 = vsel %vm587, %v1212, %v1216
      %v1218 = vshrl.u32 %v1202, 16
      %v1220 = vor.u32 %v1218, %v1216
      %v1222 = vshll.u32 %v1203, 16
      %v1224 = vrot.slane %v1222, 1
      %v1225 = vsel %vm587, %v1220, %v1224
      %v1226 = vshrl.u32 %v1203, 16
      %v1228 = vor.u32 %v1226, %v1224
      %v1230 = vshll.u32 %v1204, 16
      %v1232 = vrot.slane %v1230, 1
      %v1233 = vsel %vm587, %v1228, %v1232
      %v1234 = vshrl.u32 %v1204, 16
      %v1236 = vor.u32 %v1234, %v1232
      %v1238 = vshll.u32 %v1205, 16
      %v1240 = vrot.slane %v1238, 1
      %v1241 = vsel %vm587, %v1236, %v1240
      %v1242 = vshrl.u32 %v1205, 16
      %v1244 = vor.u32 %v1242, %v1240
      %v1246 = vsel %vm345, %v1217, 0
      %v1249 = vsel %vm345, %v1225, 0
      %v1252 = vsel %vm345, %v1233, 0
      %v1255 = vsel %vm345, %v1241, 0
      %v1258 = vsel %vm345, %v1244, 0
      %v1261 = vsel %vm361, %v1180, 0
      %1263 = vmatprep.subr.bf16.mxu0 0
      %1264 = vmatpush1.bf16.msra.mxu0 0
      %1265 = vmatprep.subr.bf16.mxu0 0
      %1266 = vmatpush1.bf16.msra.mxu0 0
      %1267 = vmatprep.subr.bf16.mxu0 0
      %1268 = vmatpush1.bf16.msra.mxu0 0
      %1269 = vmatprep.subr.bf16.mxu0 0
      %1270 = vmatpush1.bf16.msra.mxu0 0
      %1271 = vmatprep.subr.bf16.mxu0 0
      %1272 = vmatpush1.bf16.msra.mxu0 0
      %1273 = vmatprep.subr.bf16.mxu0 0
      %1274 = vmatpush1.bf16.msra.mxu0 0
      %1275 = vmatprep.subr.bf16.mxu0 0
      %1276 = vmatpush1.bf16.msra.mxu0 0
      %1277 = vmatprep.subr.bf16.mxu0 0
      %1278 = vmatpush1.bf16.msra.mxu0 %v1261
      %1279 = vmatprep.subr.bf16.mxu0 0
      %1280 = vmatpush2.bf16.msra.mxu0 0
      %1281 = vmatprep.subr.bf16.mxu0 0
      %1282 = vmatpush2.bf16.msra.mxu0 0
      %1283 = vmatprep.subr.bf16.mxu0 0
      %1284 = vmatpush2.bf16.msra.mxu0 0
      %1285 = vmatprep.subr.bf16.mxu0 0
      %1286 = vmatpush2.bf16.msra.mxu0 0
      %1287 = vmatprep.subr.bf16.mxu0 0
      %1288 = vmatpush2.bf16.msra.mxu0 0
      %1289 = vmatprep.subr.bf16.mxu0 0
      %1290 = vmatpush2.bf16.msra.mxu0 0
      %1291 = vmatprep.subr.bf16.mxu0 0
      %1292 = vmatpush2.bf16.msra.mxu0 0
      %1293 = vmatprep.subr.bf16.mxu0 0
      %1294 = vmatpush2.bf16.msra.mxu0 0
      %1295 = vmatprep.mubr.bf16.mxu0 0
      %1296 = vmatmul.mubr.bf16.gmra.mxu0 %v1246
      %v1297 = vpop.f32.mrf.mxu0
      %v1298 = vadd.f32 0.0, %v1297
      %v1299 = vpop.f32.mrf.mxu0
      %v1300 = vpop.f32.mrf.mxu0
      %v1301 = vadd.f32 0.0, %v1300
      %v1302 = vpop.f32.mrf.mxu0
      %1303 = vmatprep.mubr.bf16.mxu0 0
      %1304 = vmatmul.mubr.bf16.gmra.mxu0 %v1249
      %v1305 = vpop.f32.mrf.mxu0
      %v1306 = vadd.f32 0.0, %v1305
      %v1307 = vpop.f32.mrf.mxu0
      %v1308 = vpop.f32.mrf.mxu0
      %v1309 = vadd.f32 0.0, %v1308
      %v1310 = vpop.f32.mrf.mxu0
      %1311 = vmatprep.mubr.bf16.mxu0 0
      %1312 = vmatmul.mubr.bf16.gmra.mxu0 %v1252
      %v1313 = vpop.f32.mrf.mxu0
      %v1314 = vadd.f32 0.0, %v1313
      %v1315 = vpop.f32.mrf.mxu0
      %v1316 = vpop.f32.mrf.mxu0
      %v1317 = vadd.f32 0.0, %v1316
      %v1318 = vpop.f32.mrf.mxu0
      %1319 = vmatprep.mubr.bf16.mxu0 0
      %1320 = vmatmul.mubr.bf16.gmra.mxu0 %v1255
      %v1321 = vpop.f32.mrf.mxu0
      %v1322 = vadd.f32 0.0, %v1321
      %v1323 = vpop.f32.mrf.mxu0
      %v1324 = vpop.f32.mrf.mxu0
      %v1325 = vadd.f32 0.0, %v1324
      %v1326 = vpop.f32.mrf.mxu0
      %1327 = vmatprep.mubr.bf16.mxu0 0
      %1328 = vmatmul.mubr.bf16.gmra.mxu0 %v1258
      %v1329 = vpop.f32.mrf.mxu0
      %v1330 = vadd.f32 0.0, %v1329
      %v1331 = vpop.f32.mrf.mxu0
      %v1332 = vpop.f32.mrf.mxu0
      %v1333 = vpop.f32.mrf.mxu0
      %1334 = vdwg.mxu0
      %v1335 = vadd.f32 %v1160, %v1298
      %v1336 = vadd.f32 %v1161, %v1301
      %v1337 = vadd.f32 %v1162, %v1306
      %v1338 = vadd.f32 %v1163, %v1309
      %v1339 = vadd.f32 %v1164, %v1314
      %v1340 = vadd.f32 %v1165, %v1317
      %v1341 = vadd.f32 %v1166, %v1322
      %v1342 = vadd.f32 %v1167, %v1325
      %v1343 = vadd.f32 %v1168, %v1330
      %v1344 = vld [vmem:[%s310 + $0x4] sm:$0xf]
      %v1345 = vld [vmem:[%s310 + $0x8] sm:$0xf]
      %v1346 = vld [vmem:[%s310 + $0xc] sm:$0xf]
      %v1347 = vld [vmem:[%s310 + $0x10] sm:$0xf]
      %v1348 = vld [vmem:[%s310 + $0x14] sm:$0xf]
      %v1349 = vld [vmem:[%s310 + $0x18] sm:$0xf]
      %v1350 = vld [vmem:[%s310 + $0x1c] sm:$0xf]
      %v1351 = vld [vmem:[%s310 + $0x20] sm:$0xf]
      %v1352 = vld [vmem:[%s310 + $0x24] sm:$0xf]
      %v1353 = vld [vmem:[%s310 + $0x28] sm:$0x1]
      %s1354 = scalar_lea.vmem %s1, 14
      %v1355 = vld [vmem:[%s1354] sm:$0x3]
      %v1366 = vunpack.c.l.b16 %v1344
      %v1367 = vunpack.c.l.b16 %v1345
      %v1368 = vunpack.c.l.b16 %v1346
      %v1369 = vunpack.c.l.b16 %v1347
      %v1370 = vunpack.c.l.b16 %v1348
      %v1371 = vunpack.c.l.b16 %v1349
      %v1372 = vunpack.c.l.b16 %v1350
      %v1373 = vunpack.c.l.b16 %v1351
      %v1374 = vunpack.c.l.b16 %v1352
      %v1375 = vunpack.c.l.b16 %v1353
      %v1376 = vpack.c.b16 %v1367, %v1366
      %v1377 = vpack.c.b16 %v1369, %v1368
      %v1378 = vpack.c.b16 %v1371, %v1370
      %v1379 = vpack.c.b16 %v1373, %v1372
      %v1380 = vpack.c.b16 %v1375, %v1374
      %v1382 = vshrl.u32 %v1376, 16
      %v1384 = vshll.u32 %v1376, 16
      %v1386 = vrot.slane %v1384, 1
      %v1387 = vor.u32 %v1382, %v1386
      %v1389 = vshll.u32 %v1377, 16
      %v1391 = vrot.slane %v1389, 1
      %v1392 = vsel %vm587, %v1387, %v1391
      %v1393 = vshrl.u32 %v1377, 16
      %v1395 = vor.u32 %v1393, %v1391
      %v1397 = vshll.u32 %v1378, 16
      %v1399 = vrot.slane %v1397, 1
      %v1400 = vsel %vm587, %v1395, %v1399
      %v1401 = vshrl.u32 %v1378, 16
      %v1403 = vor.u32 %v1401, %v1399
      %v1405 = vshll.u32 %v1379, 16
      %v1407 = vrot.slane %v1405, 1
      %v1408 = vsel %vm587, %v1403, %v1407
      %v1409 = vshrl.u32 %v1379, 16
      %v1411 = vor.u32 %v1409, %v1407
      %v1413 = vshll.u32 %v1380, 16
      %v1415 = vrot.slane %v1413, 1
      %v1416 = vsel %vm587, %v1411, %v1415
      %v1417 = vshrl.u32 %v1380, 16
      %v1419 = vor.u32 %v1417, %v1415
      %v1421 = vsel %vm345, %v1392, 0
      %v1424 = vsel %vm345, %v1400, 0
      %v1427 = vsel %vm345, %v1408, 0
      %v1430 = vsel %vm345, %v1416, 0
      %v1433 = vsel %vm345, %v1419, 0
      %v1436 = vsel %vm361, %v1355, 0
      %1438 = vmatprep.subr.bf16.mxu0 0
      %1439 = vmatpush1.bf16.msra.mxu0 0
      %1440 = vmatprep.subr.bf16.mxu0 0
      %1441 = vmatpush1.bf16.msra.mxu0 0
      %1442 = vmatprep.subr.bf16.mxu0 0
      %1443 = vmatpush1.bf16.msra.mxu0 0
      %1444 = vmatprep.subr.bf16.mxu0 0
      %1445 = vmatpush1.bf16.msra.mxu0 0
      %1446 = vmatprep.subr.bf16.mxu0 0
      %1447 = vmatpush1.bf16.msra.mxu0 0
      %1448 = vmatprep.subr.bf16.mxu0 0
      %1449 = vmatpush1.bf16.msra.mxu0 0
      %1450 = vmatprep.subr.bf16.mxu0 0
      %1451 = vmatpush1.bf16.msra.mxu0 0
      %1452 = vmatprep.subr.bf16.mxu0 0
      %1453 = vmatpush1.bf16.msra.mxu0 %v1436
      %1454 = vmatprep.subr.bf16.mxu0 0
      %1455 = vmatpush2.bf16.msra.mxu0 0
      %1456 = vmatprep.subr.bf16.mxu0 0
      %1457 = vmatpush2.bf16.msra.mxu0 0
      %1458 = vmatprep.subr.bf16.mxu0 0
      %1459 = vmatpush2.bf16.msra.mxu0 0
      %1460 = vmatprep.subr.bf16.mxu0 0
      %1461 = vmatpush2.bf16.msra.mxu0 0
      %1462 = vmatprep.subr.bf16.mxu0 0
      %1463 = vmatpush2.bf16.msra.mxu0 0
      %1464 = vmatprep.subr.bf16.mxu0 0
      %1465 = vmatpush2.bf16.msra.mxu0 0
      %1466 = vmatprep.subr.bf16.mxu0 0
      %1467 = vmatpush2.bf16.msra.mxu0 0
      %1468 = vmatprep.subr.bf16.mxu0 0
      %1469 = vmatpush2.bf16.msra.mxu0 0
      %1470 = vmatprep.mubr.bf16.mxu0 0
      %1471 = vmatmul.mubr.bf16.gmra.mxu0 %v1421
      %v1472 = vpop.f32.mrf.mxu0
      %v1473 = vadd.f32 0.0, %v1472
      %v1474 = vpop.f32.mrf.mxu0
      %v1475 = vpop.f32.mrf.mxu0
      %v1476 = vadd.f32 0.0, %v1475
      %v1477 = vpop.f32.mrf.mxu0
      %1478 = vmatprep.mubr.bf16.mxu0 0
      %1479 = vmatmul.mubr.bf16.gmra.mxu0 %v1424
      %v1480 = vpop.f32.mrf.mxu0
      %v1481 = vadd.f32 0.0, %v1480
      %v1482 = vpop.f32.mrf.mxu0
      %v1483 = vpop.f32.mrf.mxu0
      %v1484 = vadd.f32 0.0, %v1483
      %v1485 = vpop.f32.mrf.mxu0
      %1486 = vmatprep.mubr.bf16.mxu0 0
      %1487 = vmatmul.mubr.bf16.gmra.mxu0 %v1427
      %v1488 = vpop.f32.mrf.mxu0
      %v1489 = vadd.f32 0.0, %v1488
      %v1490 = vpop.f32.mrf.mxu0
      %v1491 = vpop.f32.mrf.mxu0
      %v1492 = vadd.f32 0.0, %v1491
      %v1493 = vpop.f32.mrf.mxu0
      %1494 = vmatprep.mubr.bf16.mxu0 0
      %1495 = vmatmul.mubr.bf16.gmra.mxu0 %v1430
      %v1496 = vpop.f32.mrf.mxu0
      %v1497 = vadd.f32 0.0, %v1496
      %v1498 = vpop.f32.mrf.mxu0
      %v1499 = vpop.f32.mrf.mxu0
      %v1500 = vadd.f32 0.0, %v1499
      %v1501 = vpop.f32.mrf.mxu0
      %1502 = vmatprep.mubr.bf16.mxu0 0
      %1503 = vmatmul.mubr.bf16.gmra.mxu0 %v1433
      %v1504 = vpop.f32.mrf.mxu0
      %v1505 = vadd.f32 0.0, %v1504
      %v1506 = vpop.f32.mrf.mxu0
      %v1507 = vpop.f32.mrf.mxu0
      %v1508 = vpop.f32.mrf.mxu0
      %1509 = vdwg.mxu0
      %v1510 = vadd.f32 %v1335, %v1473
      %v1511 = vadd.f32 %v1336, %v1476
      %v1512 = vadd.f32 %v1337, %v1481
      %v1513 = vadd.f32 %v1338, %v1484
      %v1514 = vadd.f32 %v1339, %v1489
      %v1515 = vadd.f32 %v1340, %v1492
      %v1516 = vadd.f32 %v1341, %v1497
      %v1517 = vadd.f32 %v1342, %v1500
      %v1518 = vadd.f32 %v1343, %v1505
      %v1519 = vld [vmem:[%s278 + $0x4] sm:$0xe]
      %s1520 = scalar_lea.vmem %s1, 16
      %v1521 = vld [vmem:[%s1520] sm:$0x3]
      %v1523 = vunpack.c.l.b16 %v1519
      %v1524 = vpack.c.b16 %v1192, %v1523
      %vm1525 = vcmask 1046528
      %v1526 = vrot.slane %v1524, 1
      %v1527 = vrot.slane %v1202, 1
      %v1528 = vsel %vm1525, %v1526, %v1527
      %v1529 = vrot.slane %v1203, 1
      %v1530 = vsel %vm1525, %v1527, %v1529
      %v1531 = vrot.slane %v1204, 1
      %v1532 = vsel %vm1525, %v1529, %v1531
      %v1533 = vrot.slane %v1205, 1
      %v1534 = vsel %vm1525, %v1531, %v1533
      %v1536 = vsel %vm345, %v1528, 0
      %v1539 = vsel %vm345, %v1530, 0
      %v1542 = vsel %vm345, %v1532, 0
      %v1545 = vsel %vm345, %v1534, 0
      %v1548 = vsel %vm345, %v1533, 0
      %v1551 = vsel %vm361, %v1521, 0
      %1553 = vmatprep.subr.bf16.mxu0 0
      %1554 = vmatpush1.bf16.msra.mxu0 0
      %1555 = vmatprep.subr.bf16.mxu0 0
      %1556 = vmatpush1.bf16.msra.mxu0 0
      %1557 = vmatprep.subr.bf16.mxu0 0
      %1558 = vmatpush1.bf16.msra.mxu0 0
      %1559 = vmatprep.subr.bf16.mxu0 0
      %1560 = vmatpush1.bf16.msra.mxu0 0
      %1561 = vmatprep.subr.bf16.mxu0 0
      %1562 = vmatpush1.bf16.msra.mxu0 0
      %1563 = vmatprep.subr.bf16.mxu0 0
      %1564 = vmatpush1.bf16.msra.mxu0 0
      %1565 = vmatprep.subr.bf16.mxu0 0
      %1566 = vmatpush1.bf16.msra.mxu0 0
      %1567 = vmatprep.subr.bf16.mxu0 0
      %1568 = vmatpush1.bf16.msra.mxu0 %v1551
      %1569 = vmatprep.subr.bf16.mxu0 0
      %1570 = vmatpush2.bf16.msra.mxu0 0
      %1571 = vmatprep.subr.bf16.mxu0 0
      %1572 = vmatpush2.bf16.msra.mxu0 0
      %1573 = vmatprep.subr.bf16.mxu0 0
      %1574 = vmatpush2.bf16.msra.mxu0 0
      %1575 = vmatprep.subr.bf16.mxu0 0
      %1576 = vmatpush2.bf16.msra.mxu0 0
      %1577 = vmatprep.subr.bf16.mxu0 0
      %1578 = vmatpush2.bf16.msra.mxu0 0
      %1579 = vmatprep.subr.bf16.mxu0 0
      %1580 = vmatpush2.bf16.msra.mxu0 0
      %1581 = vmatprep.subr.bf16.mxu0 0
      %1582 = vmatpush2.bf16.msra.mxu0 0
      %1583 = vmatprep.subr.bf16.mxu0 0
      %1584 = vmatpush2.bf16.msra.mxu0 0
      %1585 = vmatprep.mubr.bf16.mxu0 0
      %1586 = vmatmul.mubr.bf16.gmra.mxu0 %v1536
      %v1587 = vpop.f32.mrf.mxu0
      %v1588 = vadd.f32 0.0, %v1587
      %v1589 = vpop.f32.mrf.mxu0
      %v1590 = vpop.f32.mrf.mxu0
      %v1591 = vadd.f32 0.0, %v1590
      %v1592 = vpop.f32.mrf.mxu0
      %1593 = vmatprep.mubr.bf16.mxu0 0
      %1594 = vmatmul.mubr.bf16.gmra.mxu0 %v1539
      %v1595 = vpop.f32.mrf.mxu0
      %v1596 = vadd.f32 0.0, %v1595
      %v1597 = vpop.f32.mrf.mxu0
      %v1598 = vpop.f32.mrf.mxu0
      %v1599 = vadd.f32 0.0, %v1598
      %v1600 = vpop.f32.mrf.mxu0
      %1601 = vmatprep.mubr.bf16.mxu0 0
      %1602 = vmatmul.mubr.bf16.gmra.mxu0 %v1542
      %v1603 = vpop.f32.mrf.mxu0
      %v1604 = vadd.f32 0.0, %v1603
      %v1605 = vpop.f32.mrf.mxu0
      %v1606 = vpop.f32.mrf.mxu0
      %v1607 = vadd.f32 0.0, %v1606
      %v1608 = vpop.f32.mrf.mxu0
      %1609 = vmatprep.mubr.bf16.mxu0 0
      %1610 = vmatmul.mubr.bf16.gmra.mxu0 %v1545
      %v1611 = vpop.f32.mrf.mxu0
      %v1612 = vadd.f32 0.0, %v1611
      %v1613 = vpop.f32.mrf.mxu0
      %v1614 = vpop.f32.mrf.mxu0
      %v1615 = vadd.f32 0.0, %v1614
      %v1616 = vpop.f32.mrf.mxu0
      %1617 = vmatprep.mubr.bf16.mxu0 0
      %1618 = vmatmul.mubr.bf16.gmra.mxu0 %v1548
      %v1619 = vpop.f32.mrf.mxu0
      %v1620 = vadd.f32 0.0, %v1619
      %v1621 = vpop.f32.mrf.mxu0
      %v1622 = vpop.f32.mrf.mxu0
      %v1623 = vpop.f32.mrf.mxu0
      %1624 = vdwg.mxu0
      %v1625 = vadd.f32 %v1510, %v1588
      %v1626 = vadd.f32 %v1511, %v1591
      %v1627 = vadd.f32 %v1512, %v1596
      %v1628 = vadd.f32 %v1513, %v1599
      %v1629 = vadd.f32 %v1514, %v1604
      %v1630 = vadd.f32 %v1515, %v1607
      %v1631 = vadd.f32 %v1516, %v1612
      %v1632 = vadd.f32 %v1517, %v1615
      %v1633 = vadd.f32 %v1518, %v1620
      %v1634 = vld [vmem:[%s2] sm:$0x1]
      %v1636 = vlaneseq
      %v1637 = vshrl.u32 %v1636, 7
      %v1638 = vsub.s32 0, %v1637
      %v1639 = vrot.slane %v1634, %v1638
      %v1641 = vadd.f32 %v1625, %v1639
      %v1642 = vadd.f32 %v1626, %v1639
      %v1643 = vadd.f32 %v1627, %v1639
      %v1644 = vadd.f32 %v1628, %v1639
      %v1645 = vadd.f32 %v1629, %v1639
      %v1646 = vadd.f32 %v1630, %v1639
      %v1647 = vadd.f32 %v1631, %v1639
      %v1648 = vadd.f32 %v1632, %v1639
      %v1649 = vadd.f32 %v1633, %v1639
      %v1650 = vmax.f32 %v1641, 0.0
      %v1651 = vmax.f32 %v1642, 0.0
      %v1652 = vmax.f32 %v1643, 0.0
      %v1653 = vmax.f32 %v1644, 0.0
      %v1654 = vmax.f32 %v1645, 0.0
      %v1655 = vmax.f32 %v1646, 0.0
      %v1656 = vmax.f32 %v1647, 0.0
      %v1657 = vmax.f32 %v1648, 0.0
      %v1658 = vmax.f32 %v1649, 0.0
      %1659 = vst [vmem:[%s287] sm:$0xff] %v1650
      %1660 = vst [vmem:[%s287 + $0x8] sm:$0xff] %v1651
      %1661 = vst [vmem:[%s287 + $0x10] sm:$0xff] %v1652
      %1662 = vst [vmem:[%s287 + $0x18] sm:$0xff] %v1653
      %1663 = vst [vmem:[%s287 + $0x20] sm:$0xff] %v1654
      %1664 = vst [vmem:[%s287 + $0x28] sm:$0xff] %v1655
      %1665 = vst [vmem:[%s287 + $0x30] sm:$0xff] %v1656
      %1666 = vst [vmem:[%s287 + $0x38] sm:$0xff] %v1657
      %1667 = vst [vmem:[%s287 + $0x40] sm:$0xff] %v1658
      %v1668 = vld [vmem:[%s860] sm:$0xf]
      %v1669 = vld [vmem:[%s860 + $0x4] sm:$0xf]
      %v1670 = vld [vmem:[%s860 + $0x8] sm:$0xf]
      %v1671 = vld [vmem:[%s860 + $0xc] sm:$0xf]
      %v1672 = vld [vmem:[%s860 + $0x10] sm:$0xf]
      %v1673 = vld [vmem:[%s860 + $0x14] sm:$0xf]
      %v1674 = vld [vmem:[%s860 + $0x18] sm:$0xf]
      %v1675 = vld [vmem:[%s860 + $0x1c] sm:$0xf]
      %v1676 = vld [vmem:[%s860 + $0x20] sm:$0xf]
      %v1677 = vld [vmem:[%s3] sm:$0x3]
      %v1678 = vld [vmem:[%s4] sm:$0x1]
      %v1680 = vlaneseq
      %v1681 = vshrl.u32 %v1680, 7
      %v1682 = vsub.s32 0, %v1681
      %v1683 = vrot.slane %v1678, %v1682
      %v1694 = vunpack.c.l.b16 %v1668
      %v1695 = vunpack.c.l.b16 %v1669
      %v1696 = vunpack.c.l.b16 %v1670
      %v1697 = vunpack.c.l.b16 %v1671
      %v1698 = vunpack.c.l.b16 %v1672
      %v1699 = vunpack.c.l.b16 %v1673
      %v1700 = vunpack.c.l.b16 %v1674
      %v1701 = vunpack.c.l.b16 %v1675
      %v1702 = vunpack.c.l.b16 %v1676
      %v1703 = vpack.c.b16 %v1695, %v1694
      %v1704 = vpack.c.b16 %v1697, %v1696
      %v1705 = vpack.c.b16 %v1699, %v1698
      %v1706 = vpack.c.b16 %v1701, %v1700
      %v1707 = vpack.c.b16 %v1702, %v1702
      %v1709 = vsel %vm345, %v1703, 0
      %v1712 = vsel %vm345, %v1704, 0
      %v1715 = vsel %vm345, %v1705, 0
      %v1718 = vsel %vm345, %v1706, 0
      %v1721 = vsel %vm345, %v1707, 0
      %v1724 = vsel %vm361, %v1677, 0
      %1726 = vmatprep.subr.bf16.mxu0 0
      %1727 = vmatpush1.bf16.msra.mxu0 0
      %1728 = vmatprep.subr.bf16.mxu0 0
      %1729 = vmatpush1.bf16.msra.mxu0 0
      %1730 = vmatprep.subr.bf16.mxu0 0
      %1731 = vmatpush1.bf16.msra.mxu0 0
      %1732 = vmatprep.subr.bf16.mxu0 0
      %1733 = vmatpush1.bf16.msra.mxu0 0
      %1734 = vmatprep.subr.bf16.mxu0 0
      %1735 = vmatpush1.bf16.msra.mxu0 0
      %1736 = vmatprep.subr.bf16.mxu0 0
      %1737 = vmatpush1.bf16.msra.mxu0 0
      %1738 = vmatprep.subr.bf16.mxu0 0
      %1739 = vmatpush1.bf16.msra.mxu0 0
      %1740 = vmatprep.subr.bf16.mxu0 0
      %1741 = vmatpush1.bf16.msra.mxu0 %v1724
      %1742 = vmatprep.subr.bf16.mxu0 0
      %1743 = vmatpush2.bf16.msra.mxu0 0
      %1744 = vmatprep.subr.bf16.mxu0 0
      %1745 = vmatpush2.bf16.msra.mxu0 0
      %1746 = vmatprep.subr.bf16.mxu0 0
      %1747 = vmatpush2.bf16.msra.mxu0 0
      %1748 = vmatprep.subr.bf16.mxu0 0
      %1749 = vmatpush2.bf16.msra.mxu0 0
      %1750 = vmatprep.subr.bf16.mxu0 0
      %1751 = vmatpush2.bf16.msra.mxu0 0
      %1752 = vmatprep.subr.bf16.mxu0 0
      %1753 = vmatpush2.bf16.msra.mxu0 0
      %1754 = vmatprep.subr.bf16.mxu0 0
      %1755 = vmatpush2.bf16.msra.mxu0 0
      %1756 = vmatprep.subr.bf16.mxu0 0
      %1757 = vmatpush2.bf16.msra.mxu0 0
      %1758 = vmatprep.mubr.bf16.mxu0 0
      %1759 = vmatmul.mubr.bf16.gmra.mxu0 %v1709
      %v1760 = vpop.f32.mrf.mxu0
      %v1761 = vadd.f32 %v1683, %v1760
      %v1762 = vpop.f32.mrf.mxu0
      %v1763 = vpop.f32.mrf.mxu0
      %v1764 = vadd.f32 %v1683, %v1763
      %v1765 = vpop.f32.mrf.mxu0
      %1766 = vmatprep.mubr.bf16.mxu0 0
      %1767 = vmatmul.mubr.bf16.gmra.mxu0 %v1712
      %v1768 = vpop.f32.mrf.mxu0
      %v1769 = vadd.f32 %v1683, %v1768
      %v1770 = vpop.f32.mrf.mxu0
      %v1771 = vpop.f32.mrf.mxu0
      %v1772 = vadd.f32 %v1683, %v1771
      %v1773 = vpop.f32.mrf.mxu0
      %1774 = vmatprep.mubr.bf16.mxu0 0
      %1775 = vmatmul.mubr.bf16.gmra.mxu0 %v1715
      %v1776 = vpop.f32.mrf.mxu0
      %v1777 = vadd.f32 %v1683, %v1776
      %v1778 = vpop.f32.mrf.mxu0
      %v1779 = vpop.f32.mrf.mxu0
      %v1780 = vadd.f32 %v1683, %v1779
      %v1781 = vpop.f32.mrf.mxu0
      %1782 = vmatprep.mubr.bf16.mxu0 0
      %1783 = vmatmul.mubr.bf16.gmra.mxu0 %v1718
      %v1784 = vpop.f32.mrf.mxu0
      %v1785 = vadd.f32 %v1683, %v1784
      %v1786 = vpop.f32.mrf.mxu0
      %v1787 = vpop.f32.mrf.mxu0
      %v1788 = vadd.f32 %v1683, %v1787
      %v1789 = vpop.f32.mrf.mxu0
      %1790 = vmatprep.mubr.bf16.mxu0 0
      %1791 = vmatmul.mubr.bf16.gmra.mxu0 %v1721
      %v1792 = vpop.f32.mrf.mxu0
      %v1793 = vadd.f32 %v1683, %v1792
      %v1794 = vpop.f32.mrf.mxu0
      %v1795 = vpop.f32.mrf.mxu0
      %v1796 = vpop.f32.mrf.mxu0
      %1797 = vdwg.mxu0
      %1798 = vst [vmem:[%s297] sm:$0xff] %v1761
      %1799 = vst [vmem:[%s297 + $0x8] sm:$0xff] %v1764
      %1800 = vst [vmem:[%s297 + $0x10] sm:$0xff] %v1769
      %1801 = vst [vmem:[%s297 + $0x18] sm:$0xff] %v1772
      %1802 = vst [vmem:[%s297 + $0x20] sm:$0xff] %v1777
      %1803 = vst [vmem:[%s297 + $0x28] sm:$0xff] %v1780
      %1804 = vst [vmem:[%s297 + $0x30] sm:$0xff] %v1785
      %1805 = vst [vmem:[%s297 + $0x38] sm:$0xff] %v1788
      %1806 = vst [vmem:[%s297 + $0x40] sm:$0xff] %v1793
      %s1807 = smul.u32 9, %s23
      %p1808 = scmp.lt.s32.totalorder %s22, 1
      %s1809 = scalar_select %p1808, %s22, 1
      %p1810 = scmp.lt.s32.totalorder %s1807, 8
      %s1811 = scalar_select %p1810, %s1807, 8
      %s1812 = smul.addr %s1809, 9
      %s1813 = sadd.s32 %s1811, %s1812
      %s1814 = smul.addr %s1813, 8
      %s1815 = scalar_lea.vmem %s5, %s1814
      %s1816 = smul.u32 9, %s23
      %p1817 = scmp.lt.s32.totalorder %s22, 1
      %s1818 = scalar_select %p1817, %s22, 1
      %p1819 = scmp.lt.s32.totalorder %s1816, 8
      %s1820 = scalar_select %p1819, %s1816, 8
      %s1821 = smul.addr %s1818, 9
      %s1822 = sadd.s32 %s1820, %s1821
      %s1823 = smul.addr %s1822, 8
      %s1824 = scalar_lea.vmem %s6, %s1823
      // Predicated region
      $region41: #{basic_block_forward.2} parent=39 // pred_check
        %p1825 = pneg %p160
      $region42: #{basic_block_forward.2} parent=39 // pred_check_branch
        %1827 = sbr.rel (%p1825) target = $region44
      $region43: #{basic_block_forward.2} parent=39 // pred_region
        %s1828 = smul.u32 9, %s23
      $region44: #{basic_block_forward.2} parent=39 // pred_fallthru
        _
      // Predicated region
      $region45: #{basic_block_forward.2} parent=39 // pred_check
        %p1829 = pneg %p188
      $region46: #{basic_block_forward.2} parent=39 // pred_check_branch
        %1831 = sbr.rel (%p1829) target = $region48
      $region47: #{basic_block_forward.2} parent=39 // pred_region
        %s1832 = smul.u32 9, %s23
      $region48: #{basic_block_forward.2} parent=39 // pred_fallthru
        _
    $region40: #{basic_block_forward.2} parent=5 // pred_fallthru
      _
    %p1833 = scmp.le.s32.totalorder 2, %s13
    // Predicated region
    $region49: #{basic_block_forward.2} parent=5 // pred_check
      %p1834 = pneg %p1833
    $region50: #{basic_block_forward.2} parent=5 // pred_check_branch
      %1836 = sbr.rel (%p1834) target = $region52
    $region51: #{basic_block_forward.2} parent=5 // pred_region
      %s1837 = ssub.s32 %s13, 2
      // Predicated region
      $region53: #{basic_block_forward.2} parent=51 // pred_check
        %p1838 = pneg %p166
      $region54: #{basic_block_forward.2} parent=51 // pred_check_branch
        %1840 = sbr.rel (%p1838) target = $region56
      $region55: #{basic_block_forward.2} parent=51 // pred_region
        %s1841 = smul.u32 9, %s25
        %p1842 = scmp.lt.s32.totalorder %s24, 1
        %s1843 = scalar_select %p1842, %s24, 1
        %p1844 = scmp.lt.s32.totalorder %s1841, 8
        %s1845 = scalar_select %p1844, %s1841, 8
        %s1846 = smul.addr %s1843, 9
        %s1847 = sadd.s32 %s1845, %s1846
        %s1848 = smul.addr %s1847, 8
        %s1849 = scalar_lea.vmem %s5, %s1848
      $region56: #{basic_block_forward.2} parent=51 // pred_fallthru
        _
      // Predicated region
      $region57: #{basic_block_forward.2} parent=51 // pred_check
        %p1850 = pneg %p194
      $region58: #{basic_block_forward.2} parent=51 // pred_check_branch
        %1852 = sbr.rel (%p1850) target = $region60
      $region59: #{basic_block_forward.2} parent=51 // pred_region
        %s1853 = smul.u32 9, %s25
        %p1854 = scmp.lt.s32.totalorder %s24, 1
        %s1855 = scalar_select %p1854, %s24, 1
        %p1856 = scmp.lt.s32.totalorder %s1853, 8
        %s1857 = scalar_select %p1856, %s1853, 8
        %s1858 = smul.addr %s1855, 9
        %s1859 = sadd.s32 %s1857, %s1858
        %s1860 = smul.addr %s1859, 8
        %s1861 = scalar_lea.vmem %s6, %s1860
      $region60: #{basic_block_forward.2} parent=51 // pred_fallthru
        _
    $region52: #{basic_block_forward.2} parent=5 // pred_fallthru
      _
  $region6: #{basic_block_forward.2} parent=0 // loop_footer
    %s17 = sadd.s32 1, %s13
  $region7: #{basic_block_forward.2} parent=0 // loop_footer_branch
    %12 = sbr.rel target = $region3
  $region8: #{basic_block_forward.2} parent=0 // loop_exit
    _

// kernel: basic_block_forward.3
$region0: #{basic_block_forward.3}
  #allocation0 [shape = 'u32[]', space=smem, size = 0x4, offset = 0x4, fixed_abs, tag = 'smem constant byte address 0x4 - core index']
  #allocation1 [shape = 'u32[144,128]{1,0:T(1,128)}', space=vmem, size = 0x12000, scoped, tag = 'internal scratch']
  %s0 = inlined_call_operand.vmem [shape: bf16[2,1,104,8], index: 0, kind: input, shape index: {}]
  %s1 = inlined_call_operand.vmem [shape: bf16[9,8,128], index: 1, kind: input, shape index: {}]
  %s2 = inlined_call_operand.vmem [shape: f32[1,128], index: 2, kind: input, shape index: {}]
  %s3 = inlined_call_operand.vmem [shape: f32[2,80,128], index: 3, kind: input, shape index: {}]
  %s4 = inlined_call_operand.vmem [shape: f32[2,80,128], index: 4, kind: output, shape index: {}]
  %s5 = sld [smem:[#allocation0]]
  $region49: #{basic_block_forward.3} parent=0
    _
  %s7 = ssub.s32 1, %s5
  %s8 = scalar_select 0, %s7, %s5
  loop: start=0, step=1, limit=4
  $region2: #{basic_block_forward.3} parent=0 // loop_pre_header
    _
  $region3: #{basic_block_forward.3} parent=0 // loop_header
    %s10 = sphi 0, %s14
    %p11 = scmp.ge.s32.totalorder %s10, 4
    %s17 = sphi 0, %s29
    %s18 = sphi 0, %s25
    %s19 = sphi 0, %s17
    %s20 = sphi 0, %s18
    %s21 = sphi 0, %s19
    %s22 = sphi 0, %s20
    %s32 = sphi 0, %s34
    %s35 = sphi 0, %s32
    %s36 = sphi 0, %s35
    %s52 = sphi 0, %s36
    %s56 = sphi 0, %s56
    %s58 = sphi 0, %s56
    %s59 = sphi 0, %s58
    %s73 = sphi 0, %s59
    %s77 = sphi 0, %s77
    %s79 = sphi 0, %s77
    %s80 = sphi 0, %s79
    %s94 = sphi 0, %s80
    %s102 = sphi 0, %s104
    %s105 = sphi 0, %s102
    %s106 = sphi 0, %s105
    %s122 = sphi 0, %s106
    %s130 = sphi 0, %s132
    %s133 = sphi 0, %s130
    %s134 = sphi 0, %s133
    %s150 = sphi 0, %s134
  $region4: #{basic_block_forward.3} parent=0 // loop_header_branch
    %13 = sbr.rel (%p11) target = $region8
  $region5: #{basic_block_forward.3} parent=0 // loop_body
    %s15 = ssub.s32 %s10, 1
    %s16 = ssub.s32 %s10, 2
    %s23 = sadd.s32 1, %s18
    %p24 = scmp.ge.s32.totalorder %s23, 1
    %s25 = scalar_select %p24, 0, %s23
    %s26 = sadd.s32 1, %s17
    %s27 = scalar_select %p24, %s26, %s17
    %p28 = scmp.ge.s32.totalorder %s27, 2
    %s29 = scalar_select %p28, 0, %s27
    %s30 = ssub.s32 %s17, %s29
    %p31 = scmp.eq.s32.totalorder %s30, 0
    %s33 = sadd.s32 %s32, 1
    %s34 = scalar_select %p31, %s32, %s33
    %p37 = pneg %p31
    %p38 = scmp.eq.s32.totalorder %s10, 1
    %p39 = por %p37, %p38
    %p40 = scmp.ne.s32.totalorder %s32, %s35
    %p41 = scmp.eq.s32.totalorder %s10, 0
    %p42 = por %p40, %p41
    %p43 = scmp.ne.s32.totalorder %s32, %s35
    %p44 = scmp.eq.s32.totalorder %s15, 1
    %p45 = por %p43, %p44
    %p46 = scmp.ne.s32.totalorder %s35, %s36
    %p47 = scmp.eq.s32.totalorder %s15, 0
    %p48 = por %p46, %p47
    %p49 = scmp.ne.s32.totalorder %s35, %s36
    %p50 = scmp.eq.s32.totalorder %s16, 1
    %p51 = por %p49, %p50
    %p53 = scmp.ne.s32.totalorder %s36, %s52
    %p54 = scmp.eq.s32.totalorder %s16, 0
    %p55 = por %p53, %p54
    %s57 = sadd.s32 %s56, 1
    %p60 = scmp.eq.s32.totalorder %s10, 1
    %p61 = scmp.ne.s32.totalorder %s56, %s58
    %p62 = scmp.eq.s32.totalorder %s10, 0
    %p63 = por %p61, %p62
    %p64 = scmp.ne.s32.totalorder %s56, %s58
    %p65 = scmp.eq.s32.totalorder %s15, 1
    %p66 = por %p64, %p65
    %p67 = scmp.ne.s32.totalorder %s58, %s59
    %p68 = scmp.eq.s32.totalorder %s15, 0
    %p69 = por %p67, %p68
    %p70 = scmp.ne.s32.totalorder %s58, %s59
    %p71 = scmp.eq.s32.totalorder %s16, 1
    %p72 = por %p70, %p71
    %p74 = scmp.ne.s32.totalorder %s59, %s73
    %p75 = scmp.eq.s32.totalorder %s16, 0
    %p76 = por %p74, %p75
    %s78 = sadd.s32 %s77, 1
    %p81 = scmp.eq.s32.totalorder %s10, 1
    %p82 = scmp.ne.s32.totalorder %s77, %s79
    %p83 = scmp.eq.s32.totalorder %s10, 0
    %p84 = por %p82, %p83
    %p85 = scmp.ne.s32.totalorder %s77, %s79
    %p86 = scmp.eq.s32.totalorder %s15, 1
    %p87 = por %p85, %p86
    %p88 = scmp.ne.s32.totalorder %s79, %s80
    %p89 = scmp.eq.s32.totalorder %s15, 0
    %p90 = por %p88, %p89
    %p91 = scmp.ne.s32.totalorder %s79, %s80
    %p92 = scmp.eq.s32.totalorder %s16, 1
    %p93 = por %p91, %p92
    %p95 = scmp.ne.s32.totalorder %s80, %s94
    %p96 = scmp.eq.s32.totalorder %s16, 0
    %p97 = por %p95, %p96
    %s98 = ssub.s32 %s17, %s29
    %s99 = ssub.s32 %s18, %s25
    %s100 = sor.u32 %s98, %s99
    %p101 = scmp.eq.s32.totalorder %s100, 0
    %s103 = sadd.s32 %s102, 1
    %s104 = scalar_select %p101, %s102, %s103
    %p107 = pneg %p101
    %p108 = scmp.eq.s32.totalorder %s10, 1
    %p109 = por %p107, %p108
    %p110 = scmp.ne.s32.totalorder %s102, %s105
    %p111 = scmp.eq.s32.totalorder %s10, 0
    %p112 = por %p110, %p111
    %p113 = scmp.ne.s32.totalorder %s102, %s105
    %p114 = scmp.eq.s32.totalorder %s15, 1
    %p115 = por %p113, %p114
    %p116 = scmp.ne.s32.totalorder %s105, %s106
    %p117 = scmp.eq.s32.totalorder %s15, 0
    %p118 = por %p116, %p117
    %p119 = scmp.ne.s32.totalorder %s105, %s106
    %p120 = scmp.eq.s32.totalorder %s16, 1
    %p121 = por %p119, %p120
    %p123 = scmp.ne.s32.totalorder %s106, %s122
    %p124 = scmp.eq.s32.totalorder %s16, 0
    %p125 = por %p123, %p124
    %s126 = ssub.s32 %s17, %s29
    %s127 = ssub.s32 %s18, %s25
    %s128 = sor.u32 %s126, %s127
    %p129 = scmp.eq.s32.totalorder %s128, 0
    %s131 = sadd.s32 %s130, 1
    %s132 = scalar_select %p129, %s130, %s131
    %p135 = pneg %p129
    %p136 = scmp.eq.s32.totalorder %s10, 1
    %p137 = por %p135, %p136
    %p138 = scmp.ne.s32.totalorder %s130, %s133
    %p139 = scmp.eq.s32.totalorder %s10, 0
    %p140 = por %p138, %p139
    %p141 = scmp.ne.s32.totalorder %s130, %s133
    %p142 = scmp.eq.s32.totalorder %s15, 1
    %p143 = por %p141, %p142
    %p144 = scmp.ne.s32.totalorder %s133, %s134
    %p145 = scmp.eq.s32.totalorder %s15, 0
    %p146 = por %p144, %p145
    %p147 = scmp.ne.s32.totalorder %s133, %s134
    %p148 = scmp.eq.s32.totalorder %s16, 1
    %p149 = por %p147, %p148
    %p151 = scmp.ne.s32.totalorder %s134, %s150
    %p152 = scmp.eq.s32.totalorder %s16, 0
    %p153 = por %p151, %p152
    %p154 = scmp.le.s32.totalorder 1, %s10
    %p155 = scmp.lt.s32.totalorder %s10, 3
    %p156 = pnand %p154, %p155
    %p157 = pneg %p156
    // Predicated region
    $region9: #{basic_block_forward.3} parent=5 // pred_check
      _
    $region10: #{basic_block_forward.3} parent=5 // pred_check_branch
      %159 = sbr.rel (%p156) target = $region12
    $region11: #{basic_block_forward.3} parent=5 // pred_region
      %s160 = ssub.s32 %s10, 1
      // Predicated region
      $region13: #{basic_block_forward.3} parent=11 // pred_check
        %p161 = pneg %p69
      $region14: #{basic_block_forward.3} parent=11 // pred_check_branch
        %163 = sbr.rel (%p161) target = $region16
      $region15: #{basic_block_forward.3} parent=11 // pred_region
        _
      $region16: #{basic_block_forward.3} parent=11 // pred_fallthru
        _
      // Predicated region
      $region17: #{basic_block_forward.3} parent=11 // pred_check
        %p164 = pneg %p90
      $region18: #{basic_block_forward.3} parent=11 // pred_check_branch
        %166 = sbr.rel (%p164) target = $region20
      $region19: #{basic_block_forward.3} parent=11 // pred_region
        _
      $region20: #{basic_block_forward.3} parent=11 // pred_fallthru
        _
    $region12: #{basic_block_forward.3} parent=5 // pred_fallthru
      _
    %p167 = scmp.lt.s32.totalorder %s10, 2
    // Predicated region
    $region21: #{basic_block_forward.3} parent=5 // pred_check
      %p168 = pneg %p167
    $region22: #{basic_block_forward.3} parent=5 // pred_check_branch
      %170 = sbr.rel (%p168) target = $region24
    $region23: #{basic_block_forward.3} parent=5 // pred_region
      // Predicated region
      $region25: #{basic_block_forward.3} parent=23 // pred_check
        %p171 = pneg %p42
      $region26: #{basic_block_forward.3} parent=23 // pred_check_branch
        %173 = sbr.rel (%p171) target = $region28
      $region27: #{basic_block_forward.3} parent=23 // pred_region
        %p174 = scmp.lt.s32.totalorder %s17, 1
        %s175 = scalar_select %p174, %s17, 1
        %s176 = smul.addr %s175, 13
        %s177 = smul.addr %s176, 4
        %s178 = scalar_lea.vmem %s0, %s177
      $region28: #{basic_block_forward.3} parent=23 // pred_fallthru
        _
      // Predicated region
      $region29: #{basic_block_forward.3} parent=23 // pred_check
        %p179 = pneg %p112
      $region30: #{basic_block_forward.3} parent=23 // pred_check_branch
        %181 = sbr.rel (%p179) target = $region32
      $region31: #{basic_block_forward.3} parent=23 // pred_region
        %s182 = smul.u32 10, %s18
        %p183 = scmp.lt.s32.totalorder %s17, 1
        %s184 = scalar_select %p183, %s17, 1
        %p185 = scmp.lt.s32.totalorder %s182, 9
        %s186 = scalar_select %p185, %s182, 9
        %s187 = smul.addr %s184, 10
        %s188 = sadd.s32 %s186, %s187
        %s189 = smul.addr %s188, 8
        %s190 = scalar_lea.vmem %s3, %s189
        %s191 = smul.u32 10, %s18
      $region32: #{basic_block_forward.3} parent=23 // pred_fallthru
        _
    $region24: #{basic_block_forward.3} parent=5 // pred_fallthru
      _
    %p192 = scmp.le.s32.totalorder 1, %s10
    %p193 = scmp.lt.s32.totalorder %s10, 3
    %p194 = pnand %p192, %p193
    %p195 = pneg %p194
    // Predicated region
    $region33: #{basic_block_forward.3} parent=5 // pred_check
      _
    $region34: #{basic_block_forward.3} parent=5 // pred_check_branch
      %197 = sbr.rel (%p194) target = $region36
    $region35: #{basic_block_forward.3} parent=5 // pred_region
      %s198 = ssub.s32 %s10, 1
      %p199 = scmp.lt.s32.totalorder %s19, 1
      %s200 = scalar_select %p199, %s19, 1
      %s201 = smul.addr %s200, 13
      %s202 = smul.addr %s201, 4
      %s203 = scalar_lea.vmem %s0, %s202
      %p204 = pneg %p48
      %p205 = pneg %p45
      %p206 = pneg %p69
      %p207 = pneg %p66
      %p208 = pneg %p90
      %p209 = pneg %p87
      %s210 = smul.u32 10, %s20
      %p211 = scmp.lt.s32.totalorder %s19, 1
      %s212 = scalar_select %p211, %s19, 1
      %p213 = scmp.lt.s32.totalorder %s210, 9
      %s214 = scalar_select %p213, %s210, 9
      %s215 = smul.addr %s212, 10
      %s216 = sadd.s32 %s214, %s215
      %s217 = smul.addr %s216, 8
      %s218 = scalar_lea.vmem %s3, %s217
      %p219 = pneg %p118
      %p220 = pneg %p115
      %p221 = pneg %p146
      %p222 = pneg %p143
      %s223 = smul.u32 10, %s20
      %p224 = scmp.lt.s32.totalorder %s19, 1
      %s225 = scalar_select %p224, %s19, 1
      %p226 = scmp.lt.s32.totalorder %s223, 9
      %s227 = scalar_select %p226, %s223, 9
      %s228 = smul.addr %s225, 10
      %s229 = sadd.s32 %s227, %s228
      %s230 = smul.addr %s229, 8
      %s231 = scalar_lea.vmem %s4, %s230
      %p232 = scmp.lt.s32.totalorder %s19, 1
      %s233 = scalar_select %p232, %s19, 1
      %s234 = smul.addr %s233, 13
      %s235 = smul.addr %s234, 4
      %s236 = scalar_lea.vmem %s0, %s235
      %s237 = smul.u32 10, %s20
      %p238 = scmp.lt.s32.totalorder %s19, 1
      %s239 = scalar_select %p238, %s19, 1
      %p240 = scmp.lt.s32.totalorder %s237, 9
      %s241 = scalar_select %p240, %s237, 9
      %s242 = smul.addr %s239, 10
      %s243 = sadd.s32 %s241, %s242
      %s244 = smul.addr %s243, 8
      %s245 = scalar_lea.vmem %s3, %s244
      %s246 = smul.u32 10, %s20
      %s247 = smul.u32 10, %s20
      %p248 = scmp.lt.s32.totalorder %s19, 1
      %s249 = scalar_select %p248, %s19, 1
      %p250 = scmp.lt.s32.totalorder %s247, 9
      %s251 = scalar_select %p250, %s247, 9
      %s252 = smul.addr %s249, 10
      %s253 = sadd.s32 %s251, %s252
      %s254 = smul.addr %s253, 8
      %s255 = scalar_lea.vmem %s4, %s254
      %s256 = smul.u32 10, %s20
      %v258 = vld [vmem:[%s236] sm:$0xf]
      %v259 = vld [vmem:[%s236 + $0x4] sm:$0xf]
      %v260 = vld [vmem:[%s236 + $0x8] sm:$0xf]
      %v261 = vld [vmem:[%s236 + $0xc] sm:$0xf]
      %v262 = vld [vmem:[%s236 + $0x10] sm:$0xf]
      %v263 = vld [vmem:[%s236 + $0x14] sm:$0xf]
      %v264 = vld [vmem:[%s236 + $0x18] sm:$0xf]
      %v265 = vld [vmem:[%s236 + $0x1c] sm:$0xf]
      %v266 = vld [vmem:[%s236 + $0x20] sm:$0xf]
      %v267 = vld [vmem:[%s236 + $0x24] sm:$0xf]
      %v268 = vld [vmem:[%s1] sm:$0xf]
      %v269 = vld [vmem:[%s236 + $0x28] sm:$0x1]
      %s270 = scalar_lea.vmem %s1, 4
      %v271 = vld [vmem:[%s270] sm:$0xf]
      %v283 = vunpack.c.l.b16 %v258
      %v284 = vunpack.c.l.b16 %v259
      %v285 = vunpack.c.l.b16 %v260
      %v286 = vunpack.c.l.b16 %v261
      %v287 = vunpack.c.l.b16 %v262
      %v288 = vunpack.c.l.b16 %v263
      %v289 = vunpack.c.l.b16 %v264
      %v290 = vunpack.c.l.b16 %v265
      %v291 = vunpack.c.l.b16 %v266
      %v292 = vunpack.c.l.b16 %v267
      %v293 = vunpack.c.l.b16 %v269
      %v294 = vpack.c.b16 %v284, %v283
      %v295 = vpack.c.b16 %v286, %v285
      %v296 = vpack.c.b16 %v288, %v287
      %v297 = vpack.c.b16 %v290, %v289
      %v298 = vpack.c.b16 %v292, %v291
      %v299 = vpack.c.b16 %v293, %v293
      %vm300 = vsmask.f32 7424
      %v302 = vshrl.u32 %v294, 16
      %v304 = vshll.u32 %v294, 16
      %v306 = vrot.slane %v304, 1
      %v307 = vor.u32 %v302, %v306
      %v309 = vshll.u32 %v295, 16
      %v311 = vrot.slane %v309, 1
      %v312 = vsel %vm300, %v307, %v311
      %v313 = vshrl.u32 %v295, 16
      %v315 = vor.u32 %v313, %v311
      %v317 = vshll.u32 %v296, 16
      %v319 = vrot.slane %v317, 1
      %v320 = vsel %vm300, %v315, %v319
      %v321 = vshrl.u32 %v296, 16
      %v323 = vor.u32 %v321, %v319
      %v325 = vshll.u32 %v297, 16
      %v327 = vrot.slane %v325, 1
      %v328 = vsel %vm300, %v323, %v327
      %v329 = vshrl.u32 %v297, 16
      %v331 = vor.u32 %v329, %v327
      %v333 = vshll.u32 %v298, 16
      %v335 = vrot.slane %v333, 1
      %v336 = vsel %vm300, %v331, %v335
      %v337 = vshrl.u32 %v298, 16
      %v339 = vor.u32 %v337, %v335
      %v341 = vshll.u32 %v299, 16
      %v343 = vrot.slane %v341, 1
      %v344 = vsel %vm300, %v339, %v343
      %vm345 = vcmask 64512
      %v347 = vsel %vm345, %v312, 0
      %v350 = vsel %vm345, %v320, 0
      %v353 = vsel %vm345, %v328, 0
      %v356 = vsel %vm345, %v336, 0
      %v359 = vsel %vm345, %v344, 0
      %vm361 = vcmask 1043456
      %v363 = vsel %vm361, %v271, 0
      %365 = vmatprep.subr.bf16.mxu0 0
      %366 = vmatpush1.bf16.msra.mxu0 0
      %367 = vmatprep.subr.bf16.mxu0 0
      %368 = vmatpush1.bf16.msra.mxu0 0
      %369 = vmatprep.subr.bf16.mxu0 0
      %370 = vmatpush1.bf16.msra.mxu0 0
      %371 = vmatprep.subr.bf16.mxu0 0
      %372 = vmatpush1.bf16.msra.mxu0 0
      %373 = vmatprep.subr.bf16.mxu0 0
      %374 = vmatpush1.bf16.msra.mxu0 0
      %375 = vmatprep.subr.bf16.mxu0 0
      %376 = vmatpush1.bf16.msra.mxu0 0
      %377 = vmatprep.subr.bf16.mxu0 0
      %378 = vmatpush1.bf16.msra.mxu0 0
      %379 = vmatprep.subr.bf16.mxu0 0
      %380 = vmatpush1.bf16.msra.mxu0 %v363
      %381 = vmatprep.subr.bf16.mxu0 0
      %382 = vmatpush2.bf16.msra.mxu0 0
      %383 = vmatprep.subr.bf16.mxu0 0
      %384 = vmatpush2.bf16.msra.mxu0 0
      %385 = vmatprep.subr.bf16.mxu0 0
      %386 = vmatpush2.bf16.msra.mxu0 0
      %387 = vmatprep.subr.bf16.mxu0 0
      %388 = vmatpush2.bf16.msra.mxu0 0
      %389 = vmatprep.subr.bf16.mxu0 0
      %390 = vmatpush2.bf16.msra.mxu0 0
      %391 = vmatprep.subr.bf16.mxu0 0
      %392 = vmatpush2.bf16.msra.mxu0 0
      %393 = vmatprep.subr.bf16.mxu0 0
      %394 = vmatpush2.bf16.msra.mxu0 0
      %395 = vmatprep.subr.bf16.mxu0 0
      %396 = vmatpush2.bf16.msra.mxu0 0
      %397 = vmatprep.mubr.bf16.mxu0 0
      %398 = vmatmul.mubr.bf16.gmra.mxu0 %v347
      %v399 = vpop.f32.mrf.mxu0
      %v400 = vadd.f32 0.0, %v399
      %v401 = vpop.f32.mrf.mxu0
      %v402 = vpop.f32.mrf.mxu0
      %v403 = vadd.f32 0.0, %v402
      %v404 = vpop.f32.mrf.mxu0
      %405 = vmatprep.mubr.bf16.mxu0 0
      %406 = vmatmul.mubr.bf16.gmra.mxu0 %v350
      %v407 = vpop.f32.mrf.mxu0
      %v408 = vadd.f32 0.0, %v407
      %v409 = vpop.f32.mrf.mxu0
      %v410 = vpop.f32.mrf.mxu0
      %v411 = vadd.f32 0.0, %v410
      %v412 = vpop.f32.mrf.mxu0
      %413 = vmatprep.mubr.bf16.mxu0 0
      %414 = vmatmul.mubr.bf16.gmra.mxu0 %v353
      %v415 = vpop.f32.mrf.mxu0
      %v416 = vadd.f32 0.0, %v415
      %v417 = vpop.f32.mrf.mxu0
      %v418 = vpop.f32.mrf.mxu0
      %v419 = vadd.f32 0.0, %v418
      %v420 = vpop.f32.mrf.mxu0
      %421 = vmatprep.mubr.bf16.mxu0 0
      %422 = vmatmul.mubr.bf16.gmra.mxu0 %v356
      %v423 = vpop.f32.mrf.mxu0
      %v424 = vadd.f32 0.0, %v423
      %v425 = vpop.f32.mrf.mxu0
      %v426 = vpop.f32.mrf.mxu0
      %v427 = vadd.f32 0.0, %v426
      %v428 = vpop.f32.mrf.mxu0
      %429 = vmatprep.mubr.bf16.mxu0 0
      %430 = vmatmul.mubr.bf16.gmra.mxu0 %v359
      %v431 = vpop.f32.mrf.mxu0
      %v432 = vadd.f32 0.0, %v431
      %v433 = vpop.f32.mrf.mxu0
      %v434 = vpop.f32.mrf.mxu0
      %v435 = vadd.f32 0.0, %v434
      %v436 = vpop.f32.mrf.mxu0
      %437 = vdwg.mxu0
      %v438 = vsel %vm345, %v294, 0
      %v440 = vsel %vm345, %v295, 0
      %v442 = vsel %vm345, %v296, 0
      %v444 = vsel %vm345, %v297, 0
      %v446 = vsel %vm345, %v298, 0
      %v449 = vsel %vm361, %v268, 0
      %451 = vmatprep.subr.bf16.mxu0 0
      %452 = vmatpush1.bf16.msra.mxu0 0
      %453 = vmatprep.subr.bf16.mxu0 0
      %454 = vmatpush1.bf16.msra.mxu0 0
      %455 = vmatprep.subr.bf16.mxu0 0
      %456 = vmatpush1.bf16.msra.mxu0 0
      %457 = vmatprep.subr.bf16.mxu0 0
      %458 = vmatpush1.bf16.msra.mxu0 0
      %459 = vmatprep.subr.bf16.mxu0 0
      %460 = vmatpush1.bf16.msra.mxu0 0
      %461 = vmatprep.subr.bf16.mxu0 0
      %462 = vmatpush1.bf16.msra.mxu0 0
      %463 = vmatprep.subr.bf16.mxu0 0
      %464 = vmatpush1.bf16.msra.mxu0 0
      %465 = vmatprep.subr.bf16.mxu0 0
      %466 = vmatpush1.bf16.msra.mxu0 %v449
      %467 = vmatprep.subr.bf16.mxu0 0
      %468 = vmatpush2.bf16.msra.mxu0 0
      %469 = vmatprep.subr.bf16.mxu0 0
      %470 = vmatpush2.bf16.msra.mxu0 0
      %471 = vmatprep.subr.bf16.mxu0 0
      %472 = vmatpush2.bf16.msra.mxu0 0
      %473 = vmatprep.subr.bf16.mxu0 0
      %474 = vmatpush2.bf16.msra.mxu0 0
      %475 = vmatprep.subr.bf16.mxu0 0
      %476 = vmatpush2.bf16.msra.mxu0 0
      %477 = vmatprep.subr.bf16.mxu0 0
      %478 = vmatpush2.bf16.msra.mxu0 0
      %479 = vmatprep.subr.bf16.mxu0 0
      %480 = vmatpush2.bf16.msra.mxu0 0
      %481 = vmatprep.subr.bf16.mxu0 0
      %482 = vmatpush2.bf16.msra.mxu0 0
      %483 = vmatprep.mubr.bf16.mxu0 0
      %484 = vmatmul.mubr.bf16.gmra.mxu0 %v438
      %v485 = vpop.f32.mrf.mxu0
      %v486 = vadd.f32 %v400, %v485
      %v487 = vpop.f32.mrf.mxu0
      %v488 = vpop.f32.mrf.mxu0
      %v489 = vadd.f32 %v403, %v488
      %v490 = vpop.f32.mrf.mxu0
      %491 = vmatprep.mubr.bf16.mxu0 0
      %492 = vmatmul.mubr.bf16.gmra.mxu0 %v440
      %v493 = vpop.f32.mrf.mxu0
      %v494 = vadd.f32 %v408, %v493
      %v495 = vpop.f32.mrf.mxu0
      %v496 = vpop.f32.mrf.mxu0
      %v497 = vadd.f32 %v411, %v496
      %v498 = vpop.f32.mrf.mxu0
      %499 = vmatprep.mubr.bf16.mxu0 0
      %500 = vmatmul.mubr.bf16.gmra.mxu0 %v442
      %v501 = vpop.f32.mrf.mxu0
      %v502 = vadd.f32 %v416, %v501
      %v503 = vpop.f32.mrf.mxu0
      %v504 = vpop.f32.mrf.mxu0
      %v505 = vadd.f32 %v419, %v504
      %v506 = vpop.f32.mrf.mxu0
      %507 = vmatprep.mubr.bf16.mxu0 0
      %508 = vmatmul.mubr.bf16.gmra.mxu0 %v444
      %v509 = vpop.f32.mrf.mxu0
      %v510 = vadd.f32 %v424, %v509
      %v511 = vpop.f32.mrf.mxu0
      %v512 = vpop.f32.mrf.mxu0
      %v513 = vadd.f32 %v427, %v512
      %v514 = vpop.f32.mrf.mxu0
      %515 = vmatprep.mubr.bf16.mxu0 0
      %516 = vmatmul.mubr.bf16.gmra.mxu0 %v446
      %v517 = vpop.f32.mrf.mxu0
      %v518 = vadd.f32 %v432, %v517
      %v519 = vpop.f32.mrf.mxu0
      %v520 = vpop.f32.mrf.mxu0
      %v521 = vadd.f32 %v435, %v520
      %v522 = vpop.f32.mrf.mxu0
      %523 = vdwg.mxu0
      %v524 = vld [vmem:[%s236] sm:$0xe]
      %s525 = scalar_lea.vmem %s1, 8
      %v526 = vld [vmem:[%s525] sm:$0xf]
      %v528 = vunpack.c.l.b16 %v524
      %v529 = vpack.c.b16 %v284, %v528
      %vm530 = vcmask 1046528
      %v531 = vrot.slane %v529, 1
      %v532 = vrot.slane %v295, 1
      %v533 = vsel %vm530, %v531, %v532
      %v534 = vrot.slane %v296, 1
      %v535 = vsel %vm530, %v532, %v534
      %v536 = vrot.slane %v297, 1
      %v537 = vsel %vm530, %v534, %v536
      %v538 = vrot.slane %v298, 1
      %v539 = vsel %vm530, %v536, %v538
      %v540 = vrot.slane %v299, 1
      %v541 = vsel %vm530, %v538, %v540
      %v543 = vsel %vm345, %v533, 0
      %v546 = vsel %vm345, %v535, 0
      %v549 = vsel %vm345, %v537, 0
      %v552 = vsel %vm345, %v539, 0
      %v555 = vsel %vm345, %v541, 0
      %v558 = vsel %vm361, %v526, 0
      %560 = vmatprep.subr.bf16.mxu0 0
      %561 = vmatpush1.bf16.msra.mxu0 0
      %562 = vmatprep.subr.bf16.mxu0 0
      %563 = vmatpush1.bf16.msra.mxu0 0
      %564 = vmatprep.subr.bf16.mxu0 0
      %565 = vmatpush1.bf16.msra.mxu0 0
      %566 = vmatprep.subr.bf16.mxu0 0
      %567 = vmatpush1.bf16.msra.mxu0 0
      %568 = vmatprep.subr.bf16.mxu0 0
      %569 = vmatpush1.bf16.msra.mxu0 0
      %570 = vmatprep.subr.bf16.mxu0 0
      %571 = vmatpush1.bf16.msra.mxu0 0
      %572 = vmatprep.subr.bf16.mxu0 0
      %573 = vmatpush1.bf16.msra.mxu0 0
      %574 = vmatprep.subr.bf16.mxu0 0
      %575 = vmatpush1.bf16.msra.mxu0 %v558
      %576 = vmatprep.subr.bf16.mxu0 0
      %577 = vmatpush2.bf16.msra.mxu0 0
      %578 = vmatprep.subr.bf16.mxu0 0
      %579 = vmatpush2.bf16.msra.mxu0 0
      %580 = vmatprep.subr.bf16.mxu0 0
      %581 = vmatpush2.bf16.msra.mxu0 0
      %582 = vmatprep.subr.bf16.mxu0 0
      %583 = vmatpush2.bf16.msra.mxu0 0
      %584 = vmatprep.subr.bf16.mxu0 0
      %585 = vmatpush2.bf16.msra.mxu0 0
      %586 = vmatprep.subr.bf16.mxu0 0
      %587 = vmatpush2.bf16.msra.mxu0 0
      %588 = vmatprep.subr.bf16.mxu0 0
      %589 = vmatpush2.bf16.msra.mxu0 0
      %590 = vmatprep.subr.bf16.mxu0 0
      %591 = vmatpush2.bf16.msra.mxu0 0
      %592 = vmatprep.mubr.bf16.mxu0 0
      %593 = vmatmul.mubr.bf16.gmra.mxu0 %v543
      %v594 = vpop.f32.mrf.mxu0
      %v595 = vadd.f32 0.0, %v594
      %v596 = vpop.f32.mrf.mxu0
      %v597 = vpop.f32.mrf.mxu0
      %v598 = vadd.f32 0.0, %v597
      %v599 = vpop.f32.mrf.mxu0
      %600 = vmatprep.mubr.bf16.mxu0 0
      %601 = vmatmul.mubr.bf16.gmra.mxu0 %v546
      %v602 = vpop.f32.mrf.mxu0
      %v603 = vadd.f32 0.0, %v602
      %v604 = vpop.f32.mrf.mxu0
      %v605 = vpop.f32.mrf.mxu0
      %v606 = vadd.f32 0.0, %v605
      %v607 = vpop.f32.mrf.mxu0
      %608 = vmatprep.mubr.bf16.mxu0 0
      %609 = vmatmul.mubr.bf16.gmra.mxu0 %v549
      %v610 = vpop.f32.mrf.mxu0
      %v611 = vadd.f32 0.0, %v610
      %v612 = vpop.f32.mrf.mxu0
      %v613 = vpop.f32.mrf.mxu0
      %v614 = vadd.f32 0.0, %v613
      %v615 = vpop.f32.mrf.mxu0
      %616 = vmatprep.mubr.bf16.mxu0 0
      %617 = vmatmul.mubr.bf16.gmra.mxu0 %v552
      %v618 = vpop.f32.mrf.mxu0
      %v619 = vadd.f32 0.0, %v618
      %v620 = vpop.f32.mrf.mxu0
      %v621 = vpop.f32.mrf.mxu0
      %v622 = vadd.f32 0.0, %v621
      %v623 = vpop.f32.mrf.mxu0
      %624 = vmatprep.mubr.bf16.mxu0 0
      %625 = vmatmul.mubr.bf16.gmra.mxu0 %v555
      %v626 = vpop.f32.mrf.mxu0
      %v627 = vadd.f32 0.0, %v626
      %v628 = vpop.f32.mrf.mxu0
      %v629 = vpop.f32.mrf.mxu0
      %v630 = vadd.f32 0.0, %v629
      %v631 = vpop.f32.mrf.mxu0
      %632 = vdwg.mxu0
      %v633 = vadd.f32 %v486, %v595
      %v634 = vadd.f32 %v489, %v598
      %v635 = vadd.f32 %v494, %v603
      %v636 = vadd.f32 %v497, %v606
      %v637 = vadd.f32 %v502, %v611
      %v638 = vadd.f32 %v505, %v614
      %v639 = vadd.f32 %v510, %v619
      %v640 = vadd.f32 %v513, %v622
      %v641 = vadd.f32 %v518, %v627
      %v642 = vadd.f32 %v521, %v630
      %v643 = vld [vmem:[%s236 + $0x4] sm:$0xe]
      %v644 = vld [vmem:[%s236 + $0x8] sm:$0xf]
      %v645 = vld [vmem:[%s236 + $0xc] sm:$0xf]
      %v646 = vld [vmem:[%s236 + $0x10] sm:$0xf]
      %v647 = vld [vmem:[%s236 + $0x14] sm:$0xf]
      %v648 = vld [vmem:[%s236 + $0x18] sm:$0xf]
      %v649 = vld [vmem:[%s236 + $0x1c] sm:$0xf]
      %v650 = vld [vmem:[%s236 + $0x20] sm:$0xf]
      %v651 = vld [vmem:[%s236 + $0x24] sm:$0xf]
      %v652 = vld [vmem:[%s236 + $0x28] sm:$0xf]
      %v653 = vld [vmem:[%s236 + $0x2c] sm:$0x1]
      %s654 = scalar_lea.vmem %s1, 12
      %v655 = vld [vmem:[%s654] sm:$0xf]
      %v667 = vunpack.c.l.b16 %v643
      %v668 = vunpack.c.l.b16 %v644
      %v669 = vunpack.c.l.b16 %v645
      %v670 = vunpack.c.l.b16 %v646
      %v671 = vunpack.c.l.b16 %v647
      %v672 = vunpack.c.l.b16 %v648
      %v673 = vunpack.c.l.b16 %v649
      %v674 = vunpack.c.l.b16 %v650
      %v675 = vunpack.c.l.b16 %v651
      %v676 = vunpack.c.l.b16 %v652
      %v677 = vunpack.c.l.b16 %v653
      %v678 = vpack.c.b16 %v668, %v667
      %v679 = vpack.c.b16 %v670, %v669
      %v680 = vpack.c.b16 %v672, %v671
      %v681 = vpack.c.b16 %v674, %v673
      %v682 = vpack.c.b16 %v676, %v675
      %v683 = vpack.c.b16 %v677, %v677
      %v684 = vrot.slane %v678, 1
      %v685 = vrot.slane %v679, 1
      %v686 = vsel %vm530, %v684, %v685
      %v687 = vrot.slane %v680, 1
      %v688 = vsel %vm530, %v685, %v687
      %v689 = vrot.slane %v681, 1
      %v690 = vsel %vm530, %v687, %v689
      %v691 = vrot.slane %v682, 1
      %v692 = vsel %vm530, %v689, %v691
      %v693 = vrot.slane %v683, 1
      %v694 = vsel %vm530, %v691, %v693
      %v696 = vsel %vm345, %v686, 0
      %v699 = vsel %vm345, %v688, 0
      %v702 = vsel %vm345, %v690, 0
      %v705 = vsel %vm345, %v692, 0
      %v708 = vsel %vm345, %v694, 0
      %v711 = vsel %vm361, %v655, 0
      %713 = vmatprep.subr.bf16.mxu0 0
      %714 = vmatpush1.bf16.msra.mxu0 0
      %715 = vmatprep.subr.bf16.mxu0 0
      %716 = vmatpush1.bf16.msra.mxu0 0
      %717 = vmatprep.subr.bf16.mxu0 0
      %718 = vmatpush1.bf16.msra.mxu0 0
      %719 = vmatprep.subr.bf16.mxu0 0
      %720 = vmatpush1.bf16.msra.mxu0 0
      %721 = vmatprep.subr.bf16.mxu0 0
      %722 = vmatpush1.bf16.msra.mxu0 0
      %723 = vmatprep.subr.bf16.mxu0 0
      %724 = vmatpush1.bf16.msra.mxu0 0
      %725 = vmatprep.subr.bf16.mxu0 0
      %726 = vmatpush1.bf16.msra.mxu0 0
      %727 = vmatprep.subr.bf16.mxu0 0
      %728 = vmatpush1.bf16.msra.mxu0 %v711
      %729 = vmatprep.subr.bf16.mxu0 0
      %730 = vmatpush2.bf16.msra.mxu0 0
      %731 = vmatprep.subr.bf16.mxu0 0
      %732 = vmatpush2.bf16.msra.mxu0 0
      %733 = vmatprep.subr.bf16.mxu0 0
      %734 = vmatpush2.bf16.msra.mxu0 0
      %735 = vmatprep.subr.bf16.mxu0 0
      %736 = vmatpush2.bf16.msra.mxu0 0
      %737 = vmatprep.subr.bf16.mxu0 0
      %738 = vmatpush2.bf16.msra.mxu0 0
      %739 = vmatprep.subr.bf16.mxu0 0
      %740 = vmatpush2.bf16.msra.mxu0 0
      %741 = vmatprep.subr.bf16.mxu0 0
      %742 = vmatpush2.bf16.msra.mxu0 0
      %743 = vmatprep.subr.bf16.mxu0 0
      %744 = vmatpush2.bf16.msra.mxu0 0
      %745 = vmatprep.mubr.bf16.mxu0 0
      %746 = vmatmul.mubr.bf16.gmra.mxu0 %v696
      %v747 = vpop.f32.mrf.mxu0
      %v748 = vadd.f32 0.0, %v747
      %v749 = vpop.f32.mrf.mxu0
      %v750 = vpop.f32.mrf.mxu0
      %v751 = vadd.f32 0.0, %v750
      %v752 = vpop.f32.mrf.mxu0
      %753 = vmatprep.mubr.bf16.mxu0 0
      %754 = vmatmul.mubr.bf16.gmra.mxu0 %v699
      %v755 = vpop.f32.mrf.mxu0
      %v756 = vadd.f32 0.0, %v755
      %v757 = vpop.f32.mrf.mxu0
      %v758 = vpop.f32.mrf.mxu0
      %v759 = vadd.f32 0.0, %v758
      %v760 = vpop.f32.mrf.mxu0
      %761 = vmatprep.mubr.bf16.mxu0 0
      %762 = vmatmul.mubr.bf16.gmra.mxu0 %v702
      %v763 = vpop.f32.mrf.mxu0
      %v764 = vadd.f32 0.0, %v763
      %v765 = vpop.f32.mrf.mxu0
      %v766 = vpop.f32.mrf.mxu0
      %v767 = vadd.f32 0.0, %v766
      %v768 = vpop.f32.mrf.mxu0
      %769 = vmatprep.mubr.bf16.mxu0 0
      %770 = vmatmul.mubr.bf16.gmra.mxu0 %v705
      %v771 = vpop.f32.mrf.mxu0
      %v772 = vadd.f32 0.0, %v771
      %v773 = vpop.f32.mrf.mxu0
      %v774 = vpop.f32.mrf.mxu0
      %v775 = vadd.f32 0.0, %v774
      %v776 = vpop.f32.mrf.mxu0
      %777 = vmatprep.mubr.bf16.mxu0 0
      %778 = vmatmul.mubr.bf16.gmra.mxu0 %v708
      %v779 = vpop.f32.mrf.mxu0
      %v780 = vadd.f32 0.0, %v779
      %v781 = vpop.f32.mrf.mxu0
      %v782 = vpop.f32.mrf.mxu0
      %v783 = vadd.f32 0.0, %v782
      %v784 = vpop.f32.mrf.mxu0
      %785 = vdwg.mxu0
      %v786 = vadd.f32 %v633, %v748
      %v787 = vadd.f32 %v634, %v751
      %v788 = vadd.f32 %v635, %v756
      %v789 = vadd.f32 %v636, %v759
      %v790 = vadd.f32 %v637, %v764
      %v791 = vadd.f32 %v638, %v767
      %v792 = vadd.f32 %v639, %v772
      %v793 = vadd.f32 %v640, %v775
      %v794 = vadd.f32 %v641, %v780
      %v795 = vadd.f32 %v642, %v783
      %v796 = vld [vmem:[%s236 + $0x2c] sm:$0x3]
      %s797 = scalar_lea.vmem %s1, 16
      %v798 = vld [vmem:[%s797] sm:$0xf]
      %v800 = vunpack.c.l.b16 %v796
      %v801 = vpack.c.b16 %v800, %v800
      %vm802 = vsmask.f32 6400
      %v804 = vshrl.u32 %v678, 16
      %v806 = vrot.slane %v804, 1
      %v807 = vshll.u32 %v678, 16
      %v809 = vrot.slane %v807, 2
      %v810 = vor.u32 %v806, %v809
      %v812 = vshrl.u32 %v679, 16
      %v814 = vrot.slane %v812, 1
      %v815 = vshll.u32 %v679, 16
      %v817 = vrot.slane %v815, 2
      %v818 = vor.u32 %v814, %v817
      %v819 = vsel %vm802, %v810, %v818
      %v821 = vshrl.u32 %v680, 16
      %v823 = vrot.slane %v821, 1
      %v824 = vshll.u32 %v680, 16
      %v826 = vrot.slane %v824, 2
      %v827 = vor.u32 %v823, %v826
      %v828 = vsel %vm802, %v818, %v827
      %v830 = vshrl.u32 %v681, 16
      %v832 = vrot.slane %v830, 1
      %v833 = vshll.u32 %v681, 16
      %v835 = vrot.slane %v833, 2
      %v836 = vor.u32 %v832, %v835
      %v837 = vsel %vm802, %v827, %v836
      %v839 = vshrl.u32 %v682, 16
      %v841 = vrot.slane %v839, 1
      %v842 = vshll.u32 %v682, 16
      %v844 = vrot.slane %v842, 2
      %v845 = vor.u32 %v841, %v844
      %v846 = vsel %vm802, %v836, %v845
      %v848 = vshrl.u32 %v801, 16
      %v850 = vrot.slane %v848, 1
      %v851 = vshll.u32 %v801, 16
      %v853 = vrot.slane %v851, 2
      %v854 = vor.u32 %v850, %v853
      %v855 = vsel %vm802, %v845, %v854
      %v857 = vsel %vm345, %v819, 0
      %v860 = vsel %vm345, %v828, 0
      %v863 = vsel %vm345, %v837, 0
      %v866 = vsel %vm345, %v846, 0
      %v869 = vsel %vm345, %v855, 0
      %v872 = vsel %vm361, %v798, 0
      %874 = vmatprep.subr.bf16.mxu0 0
      %875 = vmatpush1.bf16.msra.mxu0 0
      %876 = vmatprep.subr.bf16.mxu0 0
      %877 = vmatpush1.bf16.msra.mxu0 0
      %878 = vmatprep.subr.bf16.mxu0 0
      %879 = vmatpush1.bf16.msra.mxu0 0
      %880 = vmatprep.subr.bf16.mxu0 0
      %881 = vmatpush1.bf16.msra.mxu0 0
      %882 = vmatprep.subr.bf16.mxu0 0
      %883 = vmatpush1.bf16.msra.mxu0 0
      %884 = vmatprep.subr.bf16.mxu0 0
      %885 = vmatpush1.bf16.msra.mxu0 0
      %886 = vmatprep.subr.bf16.mxu0 0
      %887 = vmatpush1.bf16.msra.mxu0 0
      %888 = vmatprep.subr.bf16.mxu0 0
      %889 = vmatpush1.bf16.msra.mxu0 %v872
      %890 = vmatprep.subr.bf16.mxu0 0
      %891 = vmatpush2.bf16.msra.mxu0 0
      %892 = vmatprep.subr.bf16.mxu0 0
      %893 = vmatpush2.bf16.msra.mxu0 0
      %894 = vmatprep.subr.bf16.mxu0 0
      %895 = vmatpush2.bf16.msra.mxu0 0
      %896 = vmatprep.subr.bf16.mxu0 0
      %897 = vmatpush2.bf16.msra.mxu0 0
      %898 = vmatprep.subr.bf16.mxu0 0
      %899 = vmatpush2.bf16.msra.mxu0 0
      %900 = vmatprep.subr.bf16.mxu0 0
      %901 = vmatpush2.bf16.msra.mxu0 0
      %902 = vmatprep.subr.bf16.mxu0 0
      %903 = vmatpush2.bf16.msra.mxu0 0
      %904 = vmatprep.subr.bf16.mxu0 0
      %905 = vmatpush2.bf16.msra.mxu0 0
      %906 = vmatprep.mubr.bf16.mxu0 0
      %907 = vmatmul.mubr.bf16.gmra.mxu0 %v857
      %v908 = vpop.f32.mrf.mxu0
      %v909 = vadd.f32 0.0, %v908
      %v910 = vpop.f32.mrf.mxu0
      %v911 = vpop.f32.mrf.mxu0
      %v912 = vadd.f32 0.0, %v911
      %v913 = vpop.f32.mrf.mxu0
      %914 = vmatprep.mubr.bf16.mxu0 0
      %915 = vmatmul.mubr.bf16.gmra.mxu0 %v860
      %v916 = vpop.f32.mrf.mxu0
      %v917 = vadd.f32 0.0, %v916
      %v918 = vpop.f32.mrf.mxu0
      %v919 = vpop.f32.mrf.mxu0
      %v920 = vadd.f32 0.0, %v919
      %v921 = vpop.f32.mrf.mxu0
      %922 = vmatprep.mubr.bf16.mxu0 0
      %923 = vmatmul.mubr.bf16.gmra.mxu0 %v863
      %v924 = vpop.f32.mrf.mxu0
      %v925 = vadd.f32 0.0, %v924
      %v926 = vpop.f32.mrf.mxu0
      %v927 = vpop.f32.mrf.mxu0
      %v928 = vadd.f32 0.0, %v927
      %v929 = vpop.f32.mrf.mxu0
      %930 = vmatprep.mubr.bf16.mxu0 0
      %931 = vmatmul.mubr.bf16.gmra.mxu0 %v866
      %v932 = vpop.f32.mrf.mxu0
      %v933 = vadd.f32 0.0, %v932
      %v934 = vpop.f32.mrf.mxu0
      %v935 = vpop.f32.mrf.mxu0
      %v936 = vadd.f32 0.0, %v935
      %v937 = vpop.f32.mrf.mxu0
      %938 = vmatprep.mubr.bf16.mxu0 0
      %939 = vmatmul.mubr.bf16.gmra.mxu0 %v869
      %v940 = vpop.f32.mrf.mxu0
      %v941 = vadd.f32 0.0, %v940
      %v942 = vpop.f32.mrf.mxu0
      %v943 = vpop.f32.mrf.mxu0
      %v944 = vadd.f32 0.0, %v943
      %v945 = vpop.f32.mrf.mxu0
      %946 = vdwg.mxu0
      %v947 = vadd.f32 %v786, %v909
      %v948 = vadd.f32 %v787, %v912
      %v949 = vadd.f32 %v788, %v917
      %v950 = vadd.f32 %v789, %v920
      %v951 = vadd.f32 %v790, %v925
      %v952 = vadd.f32 %v791, %v928
      %v953 = vadd.f32 %v792, %v933
      %v954 = vadd.f32 %v793, %v936
      %v955 = vadd.f32 %v794, %v941
      %v956 = vadd.f32 %v795, %v944
      %v957 = vld [vmem:[%s236 + $0x4] sm:$0xc]
      %s958 = scalar_lea.vmem %s1, 20
      %v959 = vld [vmem:[%s958] sm:$0xf]
      %v961 = vunpack.c.l.b16 %v957
      %v962 = vpack.c.b16 %v668, %v961
      %vm963 = vcmask 1045504
      %v964 = vrot.slane %v962, 2
      %v965 = vrot.slane %v679, 2
      %v966 = vsel %vm963, %v964, %v965
      %v967 = vrot.slane %v680, 2
      %v968 = vsel %vm963, %v965, %v967
      %v969 = vrot.slane %v681, 2
      %v970 = vsel %vm963, %v967, %v969
      %v971 = vrot.slane %v682, 2
      %v972 = vsel %vm963, %v969, %v971
      %v973 = vrot.slane %v801, 2
      %v974 = vsel %vm963, %v971, %v973
      %v976 = vsel %vm345, %v966, 0
      %v979 = vsel %vm345, %v968, 0
      %v982 = vsel %vm345, %v970, 0
      %v985 = vsel %vm345, %v972, 0
      %v988 = vsel %vm345, %v974, 0
      %v991 = vsel %vm361, %v959, 0
      %993 = vmatprep.subr.bf16.mxu0 0
      %994 = vmatpush1.bf16.msra.mxu0 0
      %995 = vmatprep.subr.bf16.mxu0 0
      %996 = vmatpush1.bf16.msra.mxu0 0
      %997 = vmatprep.subr.bf16.mxu0 0
      %998 = vmatpush1.bf16.msra.mxu0 0
      %999 = vmatprep.subr.bf16.mxu0 0
      %1000 = vmatpush1.bf16.msra.mxu0 0
      %1001 = vmatprep.subr.bf16.mxu0 0
      %1002 = vmatpush1.bf16.msra.mxu0 0
      %1003 = vmatprep.subr.bf16.mxu0 0
      %1004 = vmatpush1.bf16.msra.mxu0 0
      %1005 = vmatprep.subr.bf16.mxu0 0
      %1006 = vmatpush1.bf16.msra.mxu0 0
      %1007 = vmatprep.subr.bf16.mxu0 0
      %1008 = vmatpush1.bf16.msra.mxu0 %v991
      %1009 = vmatprep.subr.bf16.mxu0 0
      %1010 = vmatpush2.bf16.msra.mxu0 0
      %1011 = vmatprep.subr.bf16.mxu0 0
      %1012 = vmatpush2.bf16.msra.mxu0 0
      %1013 = vmatprep.subr.bf16.mxu0 0
      %1014 = vmatpush2.bf16.msra.mxu0 0
      %1015 = vmatprep.subr.bf16.mxu0 0
      %1016 = vmatpush2.bf16.msra.mxu0 0
      %1017 = vmatprep.subr.bf16.mxu0 0
      %1018 = vmatpush2.bf16.msra.mxu0 0
      %1019 = vmatprep.subr.bf16.mxu0 0
      %1020 = vmatpush2.bf16.msra.mxu0 0
      %1021 = vmatprep.subr.bf16.mxu0 0
      %1022 = vmatpush2.bf16.msra.mxu0 0
      %1023 = vmatprep.subr.bf16.mxu0 0
      %1024 = vmatpush2.bf16.msra.mxu0 0
      %1025 = vmatprep.mubr.bf16.mxu0 0
      %1026 = vmatmul.mubr.bf16.gmra.mxu0 %v976
      %v1027 = vpop.f32.mrf.mxu0
      %v1028 = vadd.f32 0.0, %v1027
      %v1029 = vpop.f32.mrf.mxu0
      %v1030 = vpop.f32.mrf.mxu0
      %v1031 = vadd.f32 0.0, %v1030
      %v1032 = vpop.f32.mrf.mxu0
      %1033 = vmatprep.mubr.bf16.mxu0 0
      %1034 = vmatmul.mubr.bf16.gmra.mxu0 %v979
      %v1035 = vpop.f32.mrf.mxu0
      %v1036 = vadd.f32 0.0, %v1035
      %v1037 = vpop.f32.mrf.mxu0
      %v1038 = vpop.f32.mrf.mxu0
      %v1039 = vadd.f32 0.0, %v1038
      %v1040 = vpop.f32.mrf.mxu0
      %1041 = vmatprep.mubr.bf16.mxu0 0
      %1042 = vmatmul.mubr.bf16.gmra.mxu0 %v982
      %v1043 = vpop.f32.mrf.mxu0
      %v1044 = vadd.f32 0.0, %v1043
      %v1045 = vpop.f32.mrf.mxu0
      %v1046 = vpop.f32.mrf.mxu0
      %v1047 = vadd.f32 0.0, %v1046
      %v1048 = vpop.f32.mrf.mxu0
      %1049 = vmatprep.mubr.bf16.mxu0 0
      %1050 = vmatmul.mubr.bf16.gmra.mxu0 %v985
      %v1051 = vpop.f32.mrf.mxu0
      %v1052 = vadd.f32 0.0, %v1051
      %v1053 = vpop.f32.mrf.mxu0
      %v1054 = vpop.f32.mrf.mxu0
      %v1055 = vadd.f32 0.0, %v1054
      %v1056 = vpop.f32.mrf.mxu0
      %1057 = vmatprep.mubr.bf16.mxu0 0
      %1058 = vmatmul.mubr.bf16.gmra.mxu0 %v988
      %v1059 = vpop.f32.mrf.mxu0
      %v1060 = vadd.f32 0.0, %v1059
      %v1061 = vpop.f32.mrf.mxu0
      %v1062 = vpop.f32.mrf.mxu0
      %v1063 = vadd.f32 0.0, %v1062
      %v1064 = vpop.f32.mrf.mxu0
      %1065 = vdwg.mxu0
      %v1066 = vadd.f32 %v947, %v1028
      %v1067 = vadd.f32 %v948, %v1031
      %v1068 = vadd.f32 %v949, %v1036
      %v1069 = vadd.f32 %v950, %v1039
      %v1070 = vadd.f32 %v951, %v1044
      %v1071 = vadd.f32 %v952, %v1047
      %v1072 = vadd.f32 %v953, %v1052
      %v1073 = vadd.f32 %v954, %v1055
      %v1074 = vadd.f32 %v955, %v1060
      %v1075 = vadd.f32 %v956, %v1063
      %v1076 = vld [vmem:[%s236 + $0x8] sm:$0xc]
      %v1077 = vld [vmem:[%s236 + $0xc] sm:$0xf]
      %v1078 = vld [vmem:[%s236 + $0x10] sm:$0xf]
      %v1079 = vld [vmem:[%s236 + $0x14] sm:$0xf]
      %v1080 = vld [vmem:[%s236 + $0x18] sm:$0xf]
      %v1081 = vld [vmem:[%s236 + $0x1c] sm:$0xf]
      %v1082 = vld [vmem:[%s236 + $0x20] sm:$0xf]
      %v1083 = vld [vmem:[%s236 + $0x24] sm:$0xf]
      %v1084 = vld [vmem:[%s236 + $0x28] sm:$0xf]
      %v1085 = vld [vmem:[%s236 + $0x2c] sm:$0xf]
      %v1086 = vld [vmem:[%s236 + $0x30] sm:$0x3]
      %s1087 = scalar_lea.vmem %s1, 24
      %v1088 = vld [vmem:[%s1087] sm:$0xf]
      %v1100 = vunpack.c.l.b16 %v1076
      %v1101 = vunpack.c.l.b16 %v1077
      %v1102 = vunpack.c.l.b16 %v1078
      %v1103 = vunpack.c.l.b16 %v1079
      %v1104 = vunpack.c.l.b16 %v1080
      %v1105 = vunpack.c.l.b16 %v1081
      %v1106 = vunpack.c.l.b16 %v1082
      %v1107 = vunpack.c.l.b16 %v1083
      %v1108 = vunpack.c.l.b16 %v1084
      %v1109 = vunpack.c.l.b16 %v1085
      %v1110 = vunpack.c.l.b16 %v1086
      %v1111 = vpack.c.b16 %v1101, %v1100
      %v1112 = vpack.c.b16 %v1103, %v1102
      %v1113 = vpack.c.b16 %v1105, %v1104
      %v1114 = vpack.c.b16 %v1107, %v1106
      %v1115 = vpack.c.b16 %v1109, %v1108
      %v1116 = vpack.c.b16 %v1110, %v1110
      %v1117 = vrot.slane %v1111, 2
      %v1118 = vrot.slane %v1112, 2
      %v1119 = vsel %vm963, %v1117, %v1118
      %v1120 = vrot.slane %v1113, 2
      %v1121 = vsel %vm963, %v1118, %v1120
      %v1122 = vrot.slane %v1114, 2
      %v1123 = vsel %vm963, %v1120, %v1122
      %v1124 = vrot.slane %v1115, 2
      %v1125 = vsel %vm963, %v1122, %v1124
      %v1126 = vrot.slane %v1116, 2
      %v1127 = vsel %vm963, %v1124, %v1126
      %v1129 = vsel %vm345, %v1119, 0
      %v1132 = vsel %vm345, %v1121, 0
      %v1135 = vsel %vm345, %v1123, 0
      %v1138 = vsel %vm345, %v1125, 0
      %v1141 = vsel %vm345, %v1127, 0
      %v1144 = vsel %vm361, %v1088, 0
      %1146 = vmatprep.subr.bf16.mxu0 0
      %1147 = vmatpush1.bf16.msra.mxu0 0
      %1148 = vmatprep.subr.bf16.mxu0 0
      %1149 = vmatpush1.bf16.msra.mxu0 0
      %1150 = vmatprep.subr.bf16.mxu0 0
      %1151 = vmatpush1.bf16.msra.mxu0 0
      %1152 = vmatprep.subr.bf16.mxu0 0
      %1153 = vmatpush1.bf16.msra.mxu0 0
      %1154 = vmatprep.subr.bf16.mxu0 0
      %1155 = vmatpush1.bf16.msra.mxu0 0
      %1156 = vmatprep.subr.bf16.mxu0 0
      %1157 = vmatpush1.bf16.msra.mxu0 0
      %1158 = vmatprep.subr.bf16.mxu0 0
      %1159 = vmatpush1.bf16.msra.mxu0 0
      %1160 = vmatprep.subr.bf16.mxu0 0
      %1161 = vmatpush1.bf16.msra.mxu0 %v1144
      %1162 = vmatprep.subr.bf16.mxu0 0
      %1163 = vmatpush2.bf16.msra.mxu0 0
      %1164 = vmatprep.subr.bf16.mxu0 0
      %1165 = vmatpush2.bf16.msra.mxu0 0
      %1166 = vmatprep.subr.bf16.mxu0 0
      %1167 = vmatpush2.bf16.msra.mxu0 0
      %1168 = vmatprep.subr.bf16.mxu0 0
      %1169 = vmatpush2.bf16.msra.mxu0 0
      %1170 = vmatprep.subr.bf16.mxu0 0
      %1171 = vmatpush2.bf16.msra.mxu0 0
      %1172 = vmatprep.subr.bf16.mxu0 0
      %1173 = vmatpush2.bf16.msra.mxu0 0
      %1174 = vmatprep.subr.bf16.mxu0 0
      %1175 = vmatpush2.bf16.msra.mxu0 0
      %1176 = vmatprep.subr.bf16.mxu0 0
      %1177 = vmatpush2.bf16.msra.mxu0 0
      %1178 = vmatprep.mubr.bf16.mxu0 0
      %1179 = vmatmul.mubr.bf16.gmra.mxu0 %v1129
      %v1180 = vpop.f32.mrf.mxu0
      %v1181 = vadd.f32 0.0, %v1180
      %v1182 = vpop.f32.mrf.mxu0
      %v1183 = vpop.f32.mrf.mxu0
      %v1184 = vadd.f32 0.0, %v1183
      %v1185 = vpop.f32.mrf.mxu0
      %1186 = vmatprep.mubr.bf16.mxu0 0
      %1187 = vmatmul.mubr.bf16.gmra.mxu0 %v1132
      %v1188 = vpop.f32.mrf.mxu0
      %v1189 = vadd.f32 0.0, %v1188
      %v1190 = vpop.f32.mrf.mxu0
      %v1191 = vpop.f32.mrf.mxu0
      %v1192 = vadd.f32 0.0, %v1191
      %v1193 = vpop.f32.mrf.mxu0
      %1194 = vmatprep.mubr.bf16.mxu0 0
      %1195 = vmatmul.mubr.bf16.gmra.mxu0 %v1135
      %v1196 = vpop.f32.mrf.mxu0
      %v1197 = vadd.f32 0.0, %v1196
      %v1198 = vpop.f32.mrf.mxu0
      %v1199 = vpop.f32.mrf.mxu0
      %v1200 = vadd.f32 0.0, %v1199
      %v1201 = vpop.f32.mrf.mxu0
      %1202 = vmatprep.mubr.bf16.mxu0 0
      %1203 = vmatmul.mubr.bf16.gmra.mxu0 %v1138
      %v1204 = vpop.f32.mrf.mxu0
      %v1205 = vadd.f32 0.0, %v1204
      %v1206 = vpop.f32.mrf.mxu0
      %v1207 = vpop.f32.mrf.mxu0
      %v1208 = vadd.f32 0.0, %v1207
      %v1209 = vpop.f32.mrf.mxu0
      %1210 = vmatprep.mubr.bf16.mxu0 0
      %1211 = vmatmul.mubr.bf16.gmra.mxu0 %v1141
      %v1212 = vpop.f32.mrf.mxu0
      %v1213 = vadd.f32 0.0, %v1212
      %v1214 = vpop.f32.mrf.mxu0
      %v1215 = vpop.f32.mrf.mxu0
      %v1216 = vadd.f32 0.0, %v1215
      %v1217 = vpop.f32.mrf.mxu0
      %1218 = vdwg.mxu0
      %v1219 = vadd.f32 %v1066, %v1181
      %v1220 = vadd.f32 %v1067, %v1184
      %v1221 = vadd.f32 %v1068, %v1189
      %v1222 = vadd.f32 %v1069, %v1192
      %v1223 = vadd.f32 %v1070, %v1197
      %v1224 = vadd.f32 %v1071, %v1200
      %v1225 = vadd.f32 %v1072, %v1205
      %v1226 = vadd.f32 %v1073, %v1208
      %v1227 = vadd.f32 %v1074, %v1213
      %v1228 = vadd.f32 %v1075, %v1216
      %v1229 = vld [vmem:[%s236 + $0x30] sm:$0x7]
      %s1230 = scalar_lea.vmem %s1, 28
      %v1231 = vld [vmem:[%s1230] sm:$0xf]
      %v1233 = vunpack.c.l.b16 %v1229
      %v1234 = vpack.c.b16 %v1233, %v1233
      %vm1235 = vsmask.f32 5376
      %v1237 = vshrl.u32 %v1111, 16
      %v1239 = vrot.slane %v1237, 2
      %v1240 = vshll.u32 %v1111, 16
      %v1242 = vrot.slane %v1240, 3
      %v1243 = vor.u32 %v1239, %v1242
      %v1245 = vshrl.u32 %v1112, 16
      %v1247 = vrot.slane %v1245, 2
      %v1248 = vshll.u32 %v1112, 16
      %v1250 = vrot.slane %v1248, 3
      %v1251 = vor.u32 %v1247, %v1250
      %v1252 = vsel %vm1235, %v1243, %v1251
      %v1254 = vshrl.u32 %v1113, 16
      %v1256 = vrot.slane %v1254, 2
      %v1257 = vshll.u32 %v1113, 16
      %v1259 = vrot.slane %v1257, 3
      %v1260 = vor.u32 %v1256, %v1259
      %v1261 = vsel %vm1235, %v1251, %v1260
      %v1263 = vshrl.u32 %v1114, 16
      %v1265 = vrot.slane %v1263, 2
      %v1266 = vshll.u32 %v1114, 16
      %v1268 = vrot.slane %v1266, 3
      %v1269 = vor.u32 %v1265, %v1268
      %v1270 = vsel %vm1235, %v1260, %v1269
      %v1272 = vshrl.u32 %v1115, 16
      %v1274 = vrot.slane %v1272, 2
      %v1275 = vshll.u32 %v1115, 16
      %v1277 = vrot.slane %v1275, 3
      %v1278 = vor.u32 %v1274, %v1277
      %v1279 = vsel %vm1235, %v1269, %v1278
      %v1281 = vshrl.u32 %v1234, 16
      %v1283 = vrot.slane %v1281, 2
      %v1284 = vshll.u32 %v1234, 16
      %v1286 = vrot.slane %v1284, 3
      %v1287 = vor.u32 %v1283, %v1286
      %v1288 = vsel %vm1235, %v1278, %v1287
      %v1290 = vsel %vm345, %v1252, 0
      %v1293 = vsel %vm345, %v1261, 0
      %v1296 = vsel %vm345, %v1270, 0
      %v1299 = vsel %vm345, %v1279, 0
      %v1302 = vsel %vm345, %v1288, 0
      %v1305 = vsel %vm361, %v1231, 0
      %1307 = vmatprep.subr.bf16.mxu0 0
      %1308 = vmatpush1.bf16.msra.mxu0 0
      %1309 = vmatprep.subr.bf16.mxu0 0
      %1310 = vmatpush1.bf16.msra.mxu0 0
      %1311 = vmatprep.subr.bf16.mxu0 0
      %1312 = vmatpush1.bf16.msra.mxu0 0
      %1313 = vmatprep.subr.bf16.mxu0 0
      %1314 = vmatpush1.bf16.msra.mxu0 0
      %1315 = vmatprep.subr.bf16.mxu0 0
      %1316 = vmatpush1.bf16.msra.mxu0 0
      %1317 = vmatprep.subr.bf16.mxu0 0
      %1318 = vmatpush1.bf16.msra.mxu0 0
      %1319 = vmatprep.subr.bf16.mxu0 0
      %1320 = vmatpush1.bf16.msra.mxu0 0
      %1321 = vmatprep.subr.bf16.mxu0 0
      %1322 = vmatpush1.bf16.msra.mxu0 %v1305
      %1323 = vmatprep.subr.bf16.mxu0 0
      %1324 = vmatpush2.bf16.msra.mxu0 0
      %1325 = vmatprep.subr.bf16.mxu0 0
      %1326 = vmatpush2.bf16.msra.mxu0 0
      %1327 = vmatprep.subr.bf16.mxu0 0
      %1328 = vmatpush2.bf16.msra.mxu0 0
      %1329 = vmatprep.subr.bf16.mxu0 0
      %1330 = vmatpush2.bf16.msra.mxu0 0
      %1331 = vmatprep.subr.bf16.mxu0 0
      %1332 = vmatpush2.bf16.msra.mxu0 0
      %1333 = vmatprep.subr.bf16.mxu0 0
      %1334 = vmatpush2.bf16.msra.mxu0 0
      %1335 = vmatprep.subr.bf16.mxu0 0
      %1336 = vmatpush2.bf16.msra.mxu0 0
      %1337 = vmatprep.subr.bf16.mxu0 0
      %1338 = vmatpush2.bf16.msra.mxu0 0
      %1339 = vmatprep.mubr.bf16.mxu0 0
      %1340 = vmatmul.mubr.bf16.gmra.mxu0 %v1290
      %v1341 = vpop.f32.mrf.mxu0
      %v1342 = vadd.f32 0.0, %v1341
      %v1343 = vpop.f32.mrf.mxu0
      %v1344 = vpop.f32.mrf.mxu0
      %v1345 = vadd.f32 0.0, %v1344
      %v1346 = vpop.f32.mrf.mxu0
      %1347 = vmatprep.mubr.bf16.mxu0 0
      %1348 = vmatmul.mubr.bf16.gmra.mxu0 %v1293
      %v1349 = vpop.f32.mrf.mxu0
      %v1350 = vadd.f32 0.0, %v1349
      %v1351 = vpop.f32.mrf.mxu0
      %v1352 = vpop.f32.mrf.mxu0
      %v1353 = vadd.f32 0.0, %v1352
      %v1354 = vpop.f32.mrf.mxu0
      %1355 = vmatprep.mubr.bf16.mxu0 0
      %1356 = vmatmul.mubr.bf16.gmra.mxu0 %v1296
      %v1357 = vpop.f32.mrf.mxu0
      %v1358 = vadd.f32 0.0, %v1357
      %v1359 = vpop.f32.mrf.mxu0
      %v1360 = vpop.f32.mrf.mxu0
      %v1361 = vadd.f32 0.0, %v1360
      %v1362 = vpop.f32.mrf.mxu0
      %1363 = vmatprep.mubr.bf16.mxu0 0
      %1364 = vmatmul.mubr.bf16.gmra.mxu0 %v1299
      %v1365 = vpop.f32.mrf.mxu0
      %v1366 = vadd.f32 0.0, %v1365
      %v1367 = vpop.f32.mrf.mxu0
      %v1368 = vpop.f32.mrf.mxu0
      %v1369 = vadd.f32 0.0, %v1368
      %v1370 = vpop.f32.mrf.mxu0
      %1371 = vmatprep.mubr.bf16.mxu0 0
      %1372 = vmatmul.mubr.bf16.gmra.mxu0 %v1302
      %v1373 = vpop.f32.mrf.mxu0
      %v1374 = vadd.f32 0.0, %v1373
      %v1375 = vpop.f32.mrf.mxu0
      %v1376 = vpop.f32.mrf.mxu0
      %v1377 = vadd.f32 0.0, %v1376
      %v1378 = vpop.f32.mrf.mxu0
      %1379 = vdwg.mxu0
      %v1380 = vadd.f32 %v1219, %v1342
      %v1381 = vadd.f32 %v1220, %v1345
      %v1382 = vadd.f32 %v1221, %v1350
      %v1383 = vadd.f32 %v1222, %v1353
      %v1384 = vadd.f32 %v1223, %v1358
      %v1385 = vadd.f32 %v1224, %v1361
      %v1386 = vadd.f32 %v1225, %v1366
      %v1387 = vadd.f32 %v1226, %v1369
      %v1388 = vadd.f32 %v1227, %v1374
      %v1389 = vadd.f32 %v1228, %v1377
      %v1390 = vld [vmem:[%s236 + $0x8] sm:$0x8]
      %s1391 = scalar_lea.vmem %s1, 32
      %v1392 = vld [vmem:[%s1391] sm:$0xf]
      %v1394 = vunpack.c.l.b16 %v1390
      %v1395 = vpack.c.b16 %v1101, %v1394
      %vm1396 = vcmask 1044480
      %v1397 = vrot.slane %v1395, 3
      %v1398 = vrot.slane %v1112, 3
      %v1399 = vsel %vm1396, %v1397, %v1398
      %v1400 = vrot.slane %v1113, 3
      %v1401 = vsel %vm1396, %v1398, %v1400
      %v1402 = vrot.slane %v1114, 3
      %v1403 = vsel %vm1396, %v1400, %v1402
      %v1404 = vrot.slane %v1115, 3
      %v1405 = vsel %vm1396, %v1402, %v1404
      %v1406 = vrot.slane %v1234, 3
      %v1407 = vsel %vm1396, %v1404, %v1406
      %v1409 = vsel %vm345, %v1399, 0
      %v1412 = vsel %vm345, %v1401, 0
      %v1415 = vsel %vm345, %v1403, 0
      %v1418 = vsel %vm345, %v1405, 0
      %v1421 = vsel %vm345, %v1407, 0
      %v1424 = vsel %vm361, %v1392, 0
      %1426 = vmatprep.subr.bf16.mxu0 0
      %1427 = vmatpush1.bf16.msra.mxu0 0
      %1428 = vmatprep.subr.bf16.mxu0 0
      %1429 = vmatpush1.bf16.msra.mxu0 0
      %1430 = vmatprep.subr.bf16.mxu0 0
      %1431 = vmatpush1.bf16.msra.mxu0 0
      %1432 = vmatprep.subr.bf16.mxu0 0
      %1433 = vmatpush1.bf16.msra.mxu0 0
      %1434 = vmatprep.subr.bf16.mxu0 0
      %1435 = vmatpush1.bf16.msra.mxu0 0
      %1436 = vmatprep.subr.bf16.mxu0 0
      %1437 = vmatpush1.bf16.msra.mxu0 0
      %1438 = vmatprep.subr.bf16.mxu0 0
      %1439 = vmatpush1.bf16.msra.mxu0 0
      %1440 = vmatprep.subr.bf16.mxu0 0
      %1441 = vmatpush1.bf16.msra.mxu0 %v1424
      %1442 = vmatprep.subr.bf16.mxu0 0
      %1443 = vmatpush2.bf16.msra.mxu0 0
      %1444 = vmatprep.subr.bf16.mxu0 0
      %1445 = vmatpush2.bf16.msra.mxu0 0
      %1446 = vmatprep.subr.bf16.mxu0 0
      %1447 = vmatpush2.bf16.msra.mxu0 0
      %1448 = vmatprep.subr.bf16.mxu0 0
      %1449 = vmatpush2.bf16.msra.mxu0 0
      %1450 = vmatprep.subr.bf16.mxu0 0
      %1451 = vmatpush2.bf16.msra.mxu0 0
      %1452 = vmatprep.subr.bf16.mxu0 0
      %1453 = vmatpush2.bf16.msra.mxu0 0
      %1454 = vmatprep.subr.bf16.mxu0 0
      %1455 = vmatpush2.bf16.msra.mxu0 0
      %1456 = vmatprep.subr.bf16.mxu0 0
      %1457 = vmatpush2.bf16.msra.mxu0 0
      %1458 = vmatprep.mubr.bf16.mxu0 0
      %1459 = vmatmul.mubr.bf16.gmra.mxu0 %v1409
      %v1460 = vpop.f32.mrf.mxu0
      %v1461 = vadd.f32 0.0, %v1460
      %v1462 = vpop.f32.mrf.mxu0
      %v1463 = vpop.f32.mrf.mxu0
      %v1464 = vadd.f32 0.0, %v1463
      %v1465 = vpop.f32.mrf.mxu0
      %1466 = vmatprep.mubr.bf16.mxu0 0
      %1467 = vmatmul.mubr.bf16.gmra.mxu0 %v1412
      %v1468 = vpop.f32.mrf.mxu0
      %v1469 = vadd.f32 0.0, %v1468
      %v1470 = vpop.f32.mrf.mxu0
      %v1471 = vpop.f32.mrf.mxu0
      %v1472 = vadd.f32 0.0, %v1471
      %v1473 = vpop.f32.mrf.mxu0
      %1474 = vmatprep.mubr.bf16.mxu0 0
      %1475 = vmatmul.mubr.bf16.gmra.mxu0 %v1415
      %v1476 = vpop.f32.mrf.mxu0
      %v1477 = vadd.f32 0.0, %v1476
      %v1478 = vpop.f32.mrf.mxu0
      %v1479 = vpop.f32.mrf.mxu0
      %v1480 = vadd.f32 0.0, %v1479
      %v1481 = vpop.f32.mrf.mxu0
      %1482 = vmatprep.mubr.bf16.mxu0 0
      %1483 = vmatmul.mubr.bf16.gmra.mxu0 %v1418
      %v1484 = vpop.f32.mrf.mxu0
      %v1485 = vadd.f32 0.0, %v1484
      %v1486 = vpop.f32.mrf.mxu0
      %v1487 = vpop.f32.mrf.mxu0
      %v1488 = vadd.f32 0.0, %v1487
      %v1489 = vpop.f32.mrf.mxu0
      %1490 = vmatprep.mubr.bf16.mxu0 0
      %1491 = vmatmul.mubr.bf16.gmra.mxu0 %v1421
      %v1492 = vpop.f32.mrf.mxu0
      %v1493 = vadd.f32 0.0, %v1492
      %v1494 = vpop.f32.mrf.mxu0
      %v1495 = vpop.f32.mrf.mxu0
      %v1496 = vadd.f32 0.0, %v1495
      %v1497 = vpop.f32.mrf.mxu0
      %1498 = vdwg.mxu0
      %v1499 = vadd.f32 %v1380, %v1461
      %v1500 = vadd.f32 %v1381, %v1464
      %v1501 = vadd.f32 %v1382, %v1469
      %v1502 = vadd.f32 %v1383, %v1472
      %v1503 = vadd.f32 %v1384, %v1477
      %v1504 = vadd.f32 %v1385, %v1480
      %v1505 = vadd.f32 %v1386, %v1485
      %v1506 = vadd.f32 %v1387, %v1488
      %v1507 = vadd.f32 %v1388, %v1493
      %v1508 = vadd.f32 %v1389, %v1496
      %v1509 = vld [vmem:[%s2] sm:$0x1]
      %v1511 = vlaneseq
      %v1512 = vshrl.u32 %v1511, 7
      %v1513 = vsub.s32 0, %v1512
      %v1514 = vrot.slane %v1509, %v1513
      %v1516 = vadd.f32 %v1499, %v1514
      %v1517 = vadd.f32 %v1500, %v1514
      %v1518 = vadd.f32 %v1501, %v1514
      %v1519 = vadd.f32 %v1502, %v1514
      %v1520 = vadd.f32 %v1503, %v1514
      %v1521 = vadd.f32 %v1504, %v1514
      %v1522 = vadd.f32 %v1505, %v1514
      %v1523 = vadd.f32 %v1506, %v1514
      %v1524 = vadd.f32 %v1507, %v1514
      %v1525 = vadd.f32 %v1508, %v1514
      %v1526 = vld [vmem:[%s245] sm:$0xff]
      %v1527 = vld [vmem:[%s245 + $0x8] sm:$0xff]
      %v1528 = vld [vmem:[%s245 + $0x10] sm:$0xff]
      %v1529 = vld [vmem:[%s245 + $0x18] sm:$0xff]
      %v1530 = vld [vmem:[%s245 + $0x20] sm:$0xff]
      %v1531 = vld [vmem:[%s245 + $0x28] sm:$0xff]
      %v1532 = vld [vmem:[%s245 + $0x30] sm:$0xff]
      %v1533 = vld [vmem:[%s245 + $0x38] sm:$0xff]
      %v1534 = vld [vmem:[%s245 + $0x40] sm:$0xff]
      %v1535 = vld [vmem:[%s245 + $0x48] sm:$0xff]
      %v1536 = vadd.f32 %v1516, %v1526
      %v1537 = vadd.f32 %v1517, %v1527
      %v1538 = vadd.f32 %v1518, %v1528
      %v1539 = vadd.f32 %v1519, %v1529
      %v1540 = vadd.f32 %v1520, %v1530
      %v1541 = vadd.f32 %v1521, %v1531
      %v1542 = vadd.f32 %v1522, %v1532
      %v1543 = vadd.f32 %v1523, %v1533
      %v1544 = vadd.f32 %v1524, %v1534
      %v1545 = vadd.f32 %v1525, %v1535
      %v1546 = vmax.f32 %v1536, 0.0
      %v1547 = vmax.f32 %v1537, 0.0
      %v1548 = vmax.f32 %v1538, 0.0
      %v1549 = vmax.f32 %v1539, 0.0
      %v1550 = vmax.f32 %v1540, 0.0
      %v1551 = vmax.f32 %v1541, 0.0
      %v1552 = vmax.f32 %v1542, 0.0
      %v1553 = vmax.f32 %v1543, 0.0
      %v1554 = vmax.f32 %v1544, 0.0
      %v1555 = vmax.f32 %v1545, 0.0
      %1556 = vst [vmem:[%s255] sm:$0xff] %v1546
      %1557 = vst [vmem:[%s255 + $0x8] sm:$0xff] %v1547
      %1558 = vst [vmem:[%s255 + $0x10] sm:$0xff] %v1548
      %1559 = vst [vmem:[%s255 + $0x18] sm:$0xff] %v1549
      %1560 = vst [vmem:[%s255 + $0x20] sm:$0xff] %v1550
      %1561 = vst [vmem:[%s255 + $0x28] sm:$0xff] %v1551
      %1562 = vst [vmem:[%s255 + $0x30] sm:$0xff] %v1552
      %1563 = vst [vmem:[%s255 + $0x38] sm:$0xff] %v1553
      %1564 = vst [vmem:[%s255 + $0x40] sm:$0xff] %v1554
      %1565 = vst [vmem:[%s255 + $0x48] sm:$0xff] %v1555
      %s1566 = smul.u32 10, %s20
      %p1567 = scmp.lt.s32.totalorder %s19, 1
      %s1568 = scalar_select %p1567, %s19, 1
      %p1569 = scmp.lt.s32.totalorder %s1566, 9
      %s1570 = scalar_select %p1569, %s1566, 9
      %s1571 = smul.addr %s1568, 10
      %s1572 = sadd.s32 %s1570, %s1571
      %s1573 = smul.addr %s1572, 8
      %s1574 = scalar_lea.vmem %s4, %s1573
      // Predicated region
      $region37: #{basic_block_forward.3} parent=35 // pred_check
        %p1575 = pneg %p143
      $region38: #{basic_block_forward.3} parent=35 // pred_check_branch
        %1577 = sbr.rel (%p1575) target = $region40
      $region39: #{basic_block_forward.3} parent=35 // pred_region
        %s1578 = smul.u32 10, %s20
      $region40: #{basic_block_forward.3} parent=35 // pred_fallthru
        _
    $region36: #{basic_block_forward.3} parent=5 // pred_fallthru
      _
    %p1579 = scmp.le.s32.totalorder 2, %s10
    // Predicated region
    $region41: #{basic_block_forward.3} parent=5 // pred_check
      %p1580 = pneg %p1579
    $region42: #{basic_block_forward.3} parent=5 // pred_check_branch
      %1582 = sbr.rel (%p1580) target = $region44
    $region43: #{basic_block_forward.3} parent=5 // pred_region
      %s1583 = ssub.s32 %s10, 2
      // Predicated region
      $region45: #{basic_block_forward.3} parent=43 // pred_check
        %p1584 = pneg %p149
      $region46: #{basic_block_forward.3} parent=43 // pred_check_branch
        %1586 = sbr.rel (%p1584) target = $region48
      $region47: #{basic_block_forward.3} parent=43 // pred_region
        %s1587 = smul.u32 10, %s22
        %p1588 = scmp.lt.s32.totalorder %s21, 1
        %s1589 = scalar_select %p1588, %s21, 1
        %p1590 = scmp.lt.s32.totalorder %s1587, 9
        %s1591 = scalar_select %p1590, %s1587, 9
        %s1592 = smul.addr %s1589, 10
        %s1593 = sadd.s32 %s1591, %s1592
        %s1594 = smul.addr %s1593, 8
        %s1595 = scalar_lea.vmem %s4, %s1594
      $region48: #{basic_block_forward.3} parent=43 // pred_fallthru
        _
    $region44: #{basic_block_forward.3} parent=5 // pred_fallthru
      _
  $region6: #{basic_block_forward.3} parent=0 // loop_footer
    %s14 = sadd.s32 1, %s10
  $region7: #{basic_block_forward.3} parent=0 // loop_footer_branch
    %9 = sbr.rel target = $region3
  $region8: #{basic_block_forward.3} parent=0 // loop_exit
    _

</llo_original>
